<compile_context>
chip_gen: v6e
topology: v6e:2x2x1
jax: 0.10.0
libtpu: 0.0.40
codegen_flags: <defaults>
</compile_context>

<pallas_src>
import math

import jax
import jax.numpy as jnp
import numpy as np
from jax.experimental import pallas as pl
from jax.experimental.pallas import tpu as pltpu

# ----------------------- synthetic config -----------------------
WIDTH = 64                    # stand-in for width=768
HEADS = 4                     # stand-in for heads=12
HEAD_DIM = WIDTH // HEADS
MLP_DIM = 4 * WIDTH
LAYERS = 4                    # LocalFeature(visual, layers=4, ratio)
SEQ = 132                     # 1 cls + 128 patches + 3 prompt tokens
EPS = 1e-5
SCALE = 1.0 / math.sqrt(HEAD_DIM)


# ----------------------- fused kernel -----------------------
def _layernorm(x, w, b):
    """x: (L, D) f32, w/b: (1, D) f32."""
    mu = jnp.mean(x, axis=-1, keepdims=True)
    xc = x - mu
    var = jnp.mean(xc * xc, axis=-1, keepdims=True)
    return xc * jax.lax.rsqrt(var + EPS) * w + b


def _local_feature_kernel(x_ref,
                          ln1_w, ln1_b, qkv_w, qkv_b, out_w, out_b,
                          ln2_w, ln2_b, fc_w, fc_b, proj_w, proj_b,
                          lnp_w, lnp_b,
                          o_ref, x_scr):
    """One grid step = (one batch element, one transformer layer).

    The sequence activation for the current batch element lives in VMEM
    scratch across the layer axis; HBM is touched only for the input block,
    the per-layer weights and the final output block."""
    layer = pl.program_id(1)
    n_layers = pl.num_programs(1)

    @pl.when(layer == 0)
    def _():
        x_scr[...] = x_ref[...].astype(jnp.float32)

    x = x_scr[...]                                             # (L, D) f32

    # ---------- attention branch: LN1 -> QKV -> SDPA (all heads) -> out proj
    h = _layernorm(x, ln1_w[...], ln1_b[...])
    qkv = jnp.dot(h.astype(jnp.bfloat16), qkv_w[...],
                  preferred_element_type=jnp.float32) + qkv_b[...]   # (L, 3D) f32
    qkv_bf = qkv.astype(jnp.bfloat16)                          # cast once

    head_outs = []
    for hh in range(HEADS):                                    # static unroll
        lo = hh * HEAD_DIM
        # 1/sqrt(hd) is a power of two -> folding it into q is exact in bf16
        q = qkv_bf[:, lo:lo + HEAD_DIM] * jnp.asarray(SCALE, jnp.bfloat16)
        k = qkv_bf[:, WIDTH + lo:WIDTH + lo + HEAD_DIM]
        v = qkv_bf[:, 2 * WIDTH + lo:2 * WIDTH + lo + HEAD_DIM]
        # scores: contract head_dim without materializing a transpose
        s = jax.lax.dot_general(q, k, (((1,), (1,)), ((), ())),
                                preferred_element_type=jnp.float32)  # (L, L) f32
        s = s - jnp.max(s, axis=-1, keepdims=True)
        e = jnp.exp(s)
        p = e * pl.reciprocal(jnp.sum(e, axis=-1, keepdims=True), approx=True)
        head_outs.append(jnp.dot(p.astype(jnp.bfloat16), v,
                                 preferred_element_type=jnp.float32))  # (L, hd)
    attn = jnp.concatenate(head_outs, axis=-1)                 # (L, D) lane-dense
    attn = jnp.dot(attn.astype(jnp.bfloat16), out_w[...],
                   preferred_element_type=jnp.float32) + out_b[...]
    x = x + attn

    # ---------- MLP branch: LN2 -> c_fc -> QuickGELU -> c_proj
    h2 = _layernorm(x, ln2_w[...], ln2_b[...])
    m = jnp.dot(h2.astype(jnp.bfloat16), fc_w[...],
                preferred_element_type=jnp.float32) + fc_b[...]
    m = m * jax.nn.sigmoid(1.702 * m)                          # QuickGELU, f32
    m = jnp.dot(m.astype(jnp.bfloat16), proj_w[...],
                preferred_element_type=jnp.float32) + proj_b[...]
    x = x + m

    x_scr[...] = x

    @pl.when(layer == n_layers - 1)
    def _():
        # ln_post applied once at the end, written straight to the output block
        o_ref[...] = _layernorm(x, lnp_w[...], lnp_b[...]).astype(o_ref.dtype)


# ----------------------- host wrapper (single jit, single pallas_call) ---
@jax.jit
def local_feature_forward(params, x):
    """x: (B, L, D) float32 -> (B, L, D) float32 (matches LocalFeature.forward)."""
    B, L, D = x.shape
    n_layers = params["qkv_w"].shape[0]
    M = params["fc_w"].shape[-1]

    def w_spec(shape):
        # one layer's worth of a stacked (LAYERS, *shape) parameter per step
        return pl.BlockSpec((None,) + shape,
                            lambda b, l, _s=shape: (l,) + (0,) * len(_s))

    in_specs = [
        pl.BlockSpec((None, L, D), lambda b, l: (b, 0, 0)),    # x
        w_spec((1, D)), w_spec((1, D)),                        # ln1 w, b
        w_spec((D, 3 * D)), w_spec((1, 3 * D)),                # qkv w, b
        w_spec((D, D)), w_spec((1, D)),                        # attn out-proj w, b
        w_spec((1, D)), w_spec((1, D)),                        # ln2 w, b
        w_spec((D, M)), w_spec((1, M)),                        # c_fc w, b
        w_spec((M, D)), w_spec((1, D)),                        # c_proj w, b
        pl.BlockSpec((1, D), lambda b, l: (0, 0)),             # ln_post w
        pl.BlockSpec((1, D), lambda b, l: (0, 0)),             # ln_post b
    ]

    return pl.pallas_call(
        _local_feature_kernel,
        grid=(B, n_layers),
        in_specs=in_specs,
        out_specs=pl.BlockSpec((None, L, D), lambda b, l: (b, 0, 0)),
        out_shape=jax.ShapeDtypeStruct((B, L, D), jnp.float32),
        scratch_shapes=[pltpu.VMEM((L, D), jnp.float32)],
        compiler_params=pltpu.CompilerParams(
            dimension_semantics=("parallel", "arbitrary")),
    )(x,
      params["ln1_w"], params["ln1_b"],
      params["qkv_w"], params["qkv_b"],
      params["out_w"], params["out_b"],
      params["ln2_w"], params["ln2_b"],
      params["fc_w"], params["fc_b"],
      params["proj_w"], params["proj_b"],
      params["lnp_w"], params["lnp_b"])


# ----------------------- pure-JAX reference (same numerics) -----------------
def reference_forward(params, x):
    def ln(t, w, b):
        mu = jnp.mean(t, axis=-1, keepdims=True)
        var = jnp.mean(jnp.square(t - mu), axis=-1, keepdims=True)
        return (t - mu) * jax.lax.rsqrt(var + EPS) * w + b

    B, L, D = x.shape
    x = x.astype(jnp.float32)
    for i in range(params["qkv_w"].shape[0]):
        h = ln(x, params["ln1_w"][i], params["ln1_b"][i])
        qkv = jnp.einsum("bld,de->ble", h.astype(jnp.bfloat16), params["qkv_w"][i],
                         preferred_element_type=jnp.float32) + params["qkv_b"][i]
        q, k, v = jnp.split(qkv, 3, axis=-1)
        q = q.reshape(B, L, HEADS, HEAD_DIM)
        k = k.reshape(B, L, HEADS, HEAD_DIM)
        v = v.reshape(B, L, HEADS, HEAD_DIM)
        s = jnp.einsum("bqhd,bkhd->bhqk",
                       q.astype(jnp.bfloat16), k.astype(jnp.bfloat16),
                       preferred_element_type=jnp.float32) * SCALE
        p = jax.nn.softmax(s, axis=-1)
        o = jnp.einsum("bhqk,bkhd->bqhd",
                       p.astype(jnp.bfloat16), v.astype(jnp.bfloat16),
                       preferred_element_type=jnp.float32).reshape(B, L, D)
        o = jnp.einsum("bld,de->ble", o.astype(jnp.bfloat16), params["out_w"][i],
                       preferred_element_type=jnp.float32) + params["out_b"][i]
        x = x + o
        h2 = ln(x, params["ln2_w"][i], params["ln2_b"][i])
        m = jnp.einsum("bld,dm->blm", h2.astype(jnp.bfloat16), params["fc_w"][i],
                       preferred_element_type=jnp.float32) + params["fc_b"][i]
        m = m * jax.nn.sigmoid(1.702 * m)
        m = jnp.einsum("blm,md->bld", m.astype(jnp.bfloat16), params["proj_w"][i],
                       preferred_element_type=jnp.float32) + params["proj_b"][i]
        x = x + m
    return ln(x, params["lnp_w"], params["lnp_b"])


# ----------------------- deterministic parameter init -----------------------
def init_params(key):
    D, M, NL = WIDTH, MLP_DIM, LAYERS
    k = jax.random.split(key, 4)

    def nrm(kk, shape, std=0.02):
        return std * jax.random.normal(kk, shape, jnp.float32)

    return {
        # LayerNorms: weight=1, bias=0
        "ln1_w": jnp.ones((NL, 1, D), jnp.float32),
        "ln1_b": jnp.zeros((NL, 1, D), jnp.float32),
        "ln2_w": jnp.ones((NL, 1, D), jnp.float32),
        "ln2_b": jnp.zeros((NL, 1, D), jnp.float32),
        "lnp_w": jnp.ones((1, D), jnp.float32),
        "lnp_b": jnp.zeros((1, D), jnp.float32),
        # matmul weights stored bf16 (halves weight DMA; f32 accumulation in-kernel)
        "qkv_w": nrm(k[0], (NL, D, 3 * D)).astype(jnp.bfloat16),
        "qkv_b": jnp.zeros((NL, 1, 3 * D), jnp.float32),
        "out_w": nrm(k[1], (NL, D, D)).astype(jnp.bfloat16),
        "out_b": jnp.zeros((NL, 1, D), jnp.float32),
        "fc_w": nrm(k[2], (NL, D, M)).astype(jnp.bfloat16),
        "fc_b": jnp.zeros((NL, 1, M), jnp.float32),
        "proj_w": nrm(k[3], (NL, M, D)).astype(jnp.bfloat16),
        "proj_b": jnp.zeros((NL, 1, D), jnp.float32),
    }


if __name__ == "__main__":
    key = jax.random.PRNGKey(0)
    pkey, xkey = jax.random.split(key)
    params = init_params(pkey)

    B = 2
    x = jax.random.normal(xkey, (B, SEQ, WIDTH), jnp.float32)   # (B, L, D)

    out = local_feature_forward(params, x)
    jax.block_until_ready(out)
    assert out.shape == (B, SEQ, WIDTH)
    assert bool(jnp.all(jnp.isfinite(out)))

    ref = reference_forward(params, x)
    np.testing.assert_allclose(np.asarray(out), np.asarray(ref),
                               atol=5e-2, rtol=5e-2)
    print("KERNEL_OK")
</pallas_src>

<mosaic_0001>
module attributes {stable_mosaic.version = 11 : i64} {
  func.func @_local_feature_kernel(%arg0: i32, %arg1: i32, %arg2: memref<1x132x64xf32, #tpu.memory_space<vmem>>, %arg3: memref<1x1x64xf32, #tpu.memory_space<vmem>>, %arg4: memref<1x1x64xf32, #tpu.memory_space<vmem>>, %arg5: memref<1x64x192xbf16, #tpu.memory_space<vmem>>, %arg6: memref<1x1x192xf32, #tpu.memory_space<vmem>>, %arg7: memref<1x64x64xbf16, #tpu.memory_space<vmem>>, %arg8: memref<1x1x64xf32, #tpu.memory_space<vmem>>, %arg9: memref<1x1x64xf32, #tpu.memory_space<vmem>>, %arg10: memref<1x1x64xf32, #tpu.memory_space<vmem>>, %arg11: memref<1x64x256xbf16, #tpu.memory_space<vmem>>, %arg12: memref<1x1x256xf32, #tpu.memory_space<vmem>>, %arg13: memref<1x256x64xbf16, #tpu.memory_space<vmem>>, %arg14: memref<1x1x64xf32, #tpu.memory_space<vmem>>, %arg15: memref<1x64xf32, #tpu.memory_space<vmem>>, %arg16: memref<1x64xf32, #tpu.memory_space<vmem>>, %arg17: memref<1x132x64xf32, #tpu.memory_space<vmem>>, %arg18: memref<132x64xf32, #tpu.memory_space<vmem>>) attributes {dimension_semantics = [#tpu.dimension_semantics<parallel>, #tpu.dimension_semantics<arbitrary>], iteration_bounds = array<i64: 2, 4>, scalar_prefetch = 0 : i64, scratch_operands = 1 : i64, tpu.core_type = #tpu.core_type<tc>, window_params = [{transform_indices = @transform_0, window_bounds = array<i64: 1, 132, 64>}, {transform_indices = @transform_1, window_bounds = array<i64: 1, 1, 64>}, {transform_indices = @transform_2, window_bounds = array<i64: 1, 1, 64>}, {transform_indices = @transform_3, window_bounds = array<i64: 1, 64, 192>}, {transform_indices = @transform_4, window_bounds = array<i64: 1, 1, 192>}, {transform_indices = @transform_5, window_bounds = array<i64: 1, 64, 64>}, {transform_indices = @transform_6, window_bounds = array<i64: 1, 1, 64>}, {transform_indices = @transform_7, window_bounds = array<i64: 1, 1, 64>}, {transform_indices = @transform_8, window_bounds = array<i64: 1, 1, 64>}, {transform_indices = @transform_9, window_bounds = array<i64: 1, 64, 256>}, {transform_indices = @transform_10, window_bounds = array<i64: 1, 1, 256>}, {transform_indices = @transform_11, window_bounds = array<i64: 1, 256, 64>}, {transform_indices = @transform_12, window_bounds = array<i64: 1, 1, 64>}, {pipeline_mode = #tpu.pipeline_mode<synchronous>, transform_indices = @transform_13, window_bounds = array<i64: 1, 64>}, {pipeline_mode = #tpu.pipeline_mode<synchronous>, transform_indices = @transform_14, window_bounds = array<i64: 1, 64>}, {transform_indices = @transform_15, window_bounds = array<i64: 1, 132, 64>}]} {
    %c0_i32 = arith.constant 0 : i32
    %0 = arith.cmpi eq, %arg1, %c0_i32 : i32
    %1 = arith.extui %0 : i1 to i32
    %c0_i32_0 = arith.constant 0 : i32
    %2 = arith.cmpi ne, %1, %c0_i32_0 : i32
    scf.if %2 {
      %c0_76 = arith.constant 0 : index
      %c0_77 = arith.constant 0 : index
      %c0_78 = arith.constant 0 : index
      %172 = vector.load %arg2[%c0_76, %c0_77, %c0_78] : memref<1x132x64xf32, #tpu.memory_space<vmem>>, vector<1x132x64xf32>
      %173 = vector.shape_cast %172 : vector<1x132x64xf32> to vector<132x64xf32>
      %c0_79 = arith.constant 0 : index
      %c0_80 = arith.constant 0 : index
      %174 = vector.load %arg18[%c0_79, %c0_80] : memref<132x64xf32, #tpu.memory_space<vmem>>, vector<132x64xf32>
      tpu.vector_store %arg18[%c0_79, %c0_80], %173 {strides = array<i32>} : memref<132x64xf32, #tpu.memory_space<vmem>>, vector<132x64xf32>,
    } else {
    }
    %c0 = arith.constant 0 : index
    %c0_1 = arith.constant 0 : index
    %3 = vector.load %arg18[%c0, %c0_1] : memref<132x64xf32, #tpu.memory_space<vmem>>, vector<132x64xf32>
    %c0_2 = arith.constant 0 : index
    %c0_3 = arith.constant 0 : index
    %c0_4 = arith.constant 0 : index
    %4 = vector.load %arg3[%c0_2, %c0_3, %c0_4] : memref<1x1x64xf32, #tpu.memory_space<vmem>>, vector<1x1x64xf32>
    %5 = vector.shape_cast %4 : vector<1x1x64xf32> to vector<1x64xf32>
    %c0_5 = arith.constant 0 : index
    %c0_6 = arith.constant 0 : index
    %c0_7 = arith.constant 0 : index
    %6 = vector.load %arg4[%c0_5, %c0_6, %c0_7] : memref<1x1x64xf32, #tpu.memory_space<vmem>>, vector<1x1x64xf32>
    %7 = vector.shape_cast %6 : vector<1x1x64xf32> to vector<1x64xf32>
    %cst = arith.constant dense<0.000000e+00> : vector<132xf32>
    %8 = vector.multi_reduction <add>, %3, %cst [1] : vector<132x64xf32> to vector<132xf32>
    %9 = vector.shape_cast %8 : vector<132xf32> to vector<132x1xf32>
    %cst_8 = arith.constant 6.400000e+01 : f32
    %10 = vector.broadcast %cst_8 : f32 to vector<132x1xf32>
    %11 = arith.divf %9, %10 : vector<132x1xf32>
    %12 = vector.broadcast %11 : vector<132x1xf32> to vector<132x64xf32>
    %13 = arith.subf %3, %12 : vector<132x64xf32>
    %14 = arith.mulf %13, %13 : vector<132x64xf32>
    %cst_9 = arith.constant dense<0.000000e+00> : vector<132xf32>
    %15 = vector.multi_reduction <add>, %14, %cst_9 [1] : vector<132x64xf32> to vector<132xf32>
    %16 = vector.shape_cast %15 : vector<132xf32> to vector<132x1xf32>
    %cst_10 = arith.constant 6.400000e+01 : f32
    %17 = vector.broadcast %cst_10 : f32 to vector<132x1xf32>
    %18 = arith.divf %16, %17 : vector<132x1xf32>
    %cst_11 = arith.constant 9.99999974E-6 : f32
    %19 = vector.broadcast %cst_11 : f32 to vector<132x1xf32>
    %20 = arith.addf %18, %19 : vector<132x1xf32>
    %21 = math.rsqrt %20 : vector<132x1xf32>
    %22 = vector.broadcast %21 : vector<132x1xf32> to vector<132x64xf32>
    %23 = arith.mulf %13, %22 : vector<132x64xf32>
    %24 = vector.broadcast %5 : vector<1x64xf32> to vector<132x64xf32>
    %25 = arith.mulf %23, %24 : vector<132x64xf32>
    %26 = vector.broadcast %7 : vector<1x64xf32> to vector<132x64xf32>
    %27 = arith.addf %25, %26 : vector<132x64xf32>
    %28 = arith.truncf %27 : vector<132x64xf32> to vector<132x64xbf16>
    %c0_12 = arith.constant 0 : index
    %c0_13 = arith.constant 0 : index
    %c0_14 = arith.constant 0 : index
    %29 = vector.load %arg5[%c0_12, %c0_13, %c0_14] : memref<1x64x192xbf16, #tpu.memory_space<vmem>>, vector<1x64x192xbf16>
    %30 = vector.shape_cast %29 : vector<1x64x192xbf16> to vector<64x192xbf16>
    %cst_15 = arith.constant dense<0.000000e+00> : vector<132x192xf32>
    %31 = tpu.matmul %28, %30, %cst_15 {dimension_numbers = #tpu.dot_dimension_numbers<[1], [0], [0], [1], [0, 0, 1, 1], [], []>} : vector<132x64xbf16>, vector<64x192xbf16>, vector<132x192xf32> -> vector<132x192xf32>
    %c0_16 = arith.constant 0 : index
    %c0_17 = arith.constant 0 : index
    %c0_18 = arith.constant 0 : index
    %32 = vector.load %arg6[%c0_16, %c0_17, %c0_18] : memref<1x1x192xf32, #tpu.memory_space<vmem>>, vector<1x1x192xf32>
    %33 = vector.shape_cast %32 : vector<1x1x192xf32> to vector<1x192xf32>
    %34 = vector.broadcast %33 : vector<1x192xf32> to vector<132x192xf32>
    %35 = arith.addf %31, %34 : vector<132x192xf32>
    %36 = arith.truncf %35 : vector<132x192xf32> to vector<132x192xbf16>
    %37 = vector.extract_strided_slice %36 {offsets = [0, 0], sizes = [132, 16], strides = [1, 1]} : vector<132x192xbf16> to vector<132x16xbf16>
    %cst_19 = arith.constant 2.500000e-01 : bf16
    %38 = vector.broadcast %cst_19 : bf16 to vector<132x16xbf16>
    %39 = arith.mulf %37, %38 : vector<132x16xbf16>
    %40 = vector.extract_strided_slice %36 {offsets = [0, 64], sizes = [132, 16], strides = [1, 1]} : vector<132x192xbf16> to vector<132x16xbf16>
    %41 = vector.extract_strided_slice %36 {offsets = [0, 128], sizes = [132, 16], strides = [1, 1]} : vector<132x192xbf16> to vector<132x16xbf16>
    %cst_20 = arith.constant dense<0.000000e+00> : vector<132x132xf32>
    %42 = tpu.matmul %39, %40, %cst_20 {dimension_numbers = #tpu.dot_dimension_numbers<[1], [1], [0], [0], [0, 0, 1, 0], [], []>} : vector<132x16xbf16>, vector<132x16xbf16>, vector<132x132xf32> -> vector<132x132xf32>
    %cst_21 = arith.constant dense<0xFF800000> : vector<132xf32>
    %43 = vector.multi_reduction <maximumf>, %42, %cst_21 [1] : vector<132x132xf32> to vector<132xf32>
    %44 = vector.shape_cast %43 : vector<132xf32> to vector<132x1xf32>
    %45 = vector.broadcast %44 : vector<132x1xf32> to vector<132x132xf32>
    %46 = arith.subf %42, %45 : vector<132x132xf32>
    %47 = math.exp %46 : vector<132x132xf32>
    %cst_22 = arith.constant dense<0.000000e+00> : vector<132xf32>
    %48 = vector.multi_reduction <add>, %47, %cst_22 [1] : vector<132x132xf32> to vector<132xf32>
    %49 = vector.shape_cast %48 : vector<132xf32> to vector<132x1xf32>
    %50 = tpu.reciprocal %49 {approx = true} : vector<132x1xf32> -> vector<132x1xf32>
    %51 = vector.broadcast %50 : vector<132x1xf32> to vector<132x132xf32>
    %52 = arith.mulf %47, %51 : vector<132x132xf32>
    %53 = arith.truncf %52 : vector<132x132xf32> to vector<132x132xbf16>
    %cst_23 = arith.constant dense<0.000000e+00> : vector<132x16xf32>
    %54 = tpu.matmul %53, %41, %cst_23 {dimension_numbers = #tpu.dot_dimension_numbers<[1], [0], [0], [1], [0, 0, 1, 1], [], []>} : vector<132x132xbf16>, vector<132x16xbf16>, vector<132x16xf32> -> vector<132x16xf32>
    %55 = vector.extract_strided_slice %36 {offsets = [0, 16], sizes = [132, 16], strides = [1, 1]} : vector<132x192xbf16> to vector<132x16xbf16>
    %cst_24 = arith.constant 2.500000e-01 : bf16
    %56 = vector.broadcast %cst_24 : bf16 to vector<132x16xbf16>
    %57 = arith.mulf %55, %56 : vector<132x16xbf16>
    %58 = vector.extract_strided_slice %36 {offsets = [0, 80], sizes = [132, 16], strides = [1, 1]} : vector<132x192xbf16> to vector<132x16xbf16>
    %59 = vector.extract_strided_slice %36 {offsets = [0, 144], sizes = [132, 16], strides = [1, 1]} : vector<132x192xbf16> to vector<132x16xbf16>
    %cst_25 = arith.constant dense<0.000000e+00> : vector<132x132xf32>
    %60 = tpu.matmul %57, %58, %cst_25 {dimension_numbers = #tpu.dot_dimension_numbers<[1], [1], [0], [0], [0, 0, 1, 0], [], []>} : vector<132x16xbf16>, vector<132x16xbf16>, vector<132x132xf32> -> vector<132x132xf32>
    %cst_26 = arith.constant dense<0xFF800000> : vector<132xf32>
    %61 = vector.multi_reduction <maximumf>, %60, %cst_26 [1] : vector<132x132xf32> to vector<132xf32>
    %62 = vector.shape_cast %61 : vector<132xf32> to vector<132x1xf32>
    %63 = vector.broadcast %62 : vector<132x1xf32> to vector<132x132xf32>
    %64 = arith.subf %60, %63 : vector<132x132xf32>
    %65 = math.exp %64 : vector<132x132xf32>
    %cst_27 = arith.constant dense<0.000000e+00> : vector<132xf32>
    %66 = vector.multi_reduction <add>, %65, %cst_27 [1] : vector<132x132xf32> to vector<132xf32>
    %67 = vector.shape_cast %66 : vector<132xf32> to vector<132x1xf32>
    %68 = tpu.reciprocal %67 {approx = true} : vector<132x1xf32> -> vector<132x1xf32>
    %69 = vector.broadcast %68 : vector<132x1xf32> to vector<132x132xf32>
    %70 = arith.mulf %65, %69 : vector<132x132xf32>
    %71 = arith.truncf %70 : vector<132x132xf32> to vector<132x132xbf16>
    %cst_28 = arith.constant dense<0.000000e+00> : vector<132x16xf32>
    %72 = tpu.matmul %71, %59, %cst_28 {dimension_numbers = #tpu.dot_dimension_numbers<[1], [0], [0], [1], [0, 0, 1, 1], [], []>} : vector<132x132xbf16>, vector<132x16xbf16>, vector<132x16xf32> -> vector<132x16xf32>
    %73 = vector.extract_strided_slice %36 {offsets = [0, 32], sizes = [132, 16], strides = [1, 1]} : vector<132x192xbf16> to vector<132x16xbf16>
    %cst_29 = arith.constant 2.500000e-01 : bf16
    %74 = vector.broadcast %cst_29 : bf16 to vector<132x16xbf16>
    %75 = arith.mulf %73, %74 : vector<132x16xbf16>
    %76 = vector.extract_strided_slice %36 {offsets = [0, 96], sizes = [132, 16], strides = [1, 1]} : vector<132x192xbf16> to vector<132x16xbf16>
    %77 = vector.extract_strided_slice %36 {offsets = [0, 160], sizes = [132, 16], strides = [1, 1]} : vector<132x192xbf16> to vector<132x16xbf16>
    %cst_30 = arith.constant dense<0.000000e+00> : vector<132x132xf32>
    %78 = tpu.matmul %75, %76, %cst_30 {dimension_numbers = #tpu.dot_dimension_numbers<[1], [1], [0], [0], [0, 0, 1, 0], [], []>} : vector<132x16xbf16>, vector<132x16xbf16>, vector<132x132xf32> -> vector<132x132xf32>
    %cst_31 = arith.constant dense<0xFF800000> : vector<132xf32>
    %79 = vector.multi_reduction <maximumf>, %78, %cst_31 [1] : vector<132x132xf32> to vector<132xf32>
    %80 = vector.shape_cast %79 : vector<132xf32> to vector<132x1xf32>
    %81 = vector.broadcast %80 : vector<132x1xf32> to vector<132x132xf32>
    %82 = arith.subf %78, %81 : vector<132x132xf32>
    %83 = math.exp %82 : vector<132x132xf32>
    %cst_32 = arith.constant dense<0.000000e+00> : vector<132xf32>
    %84 = vector.multi_reduction <add>, %83, %cst_32 [1] : vector<132x132xf32> to vector<132xf32>
    %85 = vector.shape_cast %84 : vector<132xf32> to vector<132x1xf32>
    %86 = tpu.reciprocal %85 {approx = true} : vector<132x1xf32> -> vector<132x1xf32>
    %87 = vector.broadcast %86 : vector<132x1xf32> to vector<132x132xf32>
    %88 = arith.mulf %83, %87 : vector<132x132xf32>
    %89 = arith.truncf %88 : vector<132x132xf32> to vector<132x132xbf16>
    %cst_33 = arith.constant dense<0.000000e+00> : vector<132x16xf32>
    %90 = tpu.matmul %89, %77, %cst_33 {dimension_numbers = #tpu.dot_dimension_numbers<[1], [0], [0], [1], [0, 0, 1, 1], [], []>} : vector<132x132xbf16>, vector<132x16xbf16>, vector<132x16xf32> -> vector<132x16xf32>
    %91 = vector.extract_strided_slice %36 {offsets = [0, 48], sizes = [132, 16], strides = [1, 1]} : vector<132x192xbf16> to vector<132x16xbf16>
    %cst_34 = arith.constant 2.500000e-01 : bf16
    %92 = vector.broadcast %cst_34 : bf16 to vector<132x16xbf16>
    %93 = arith.mulf %91, %92 : vector<132x16xbf16>
    %94 = vector.extract_strided_slice %36 {offsets = [0, 112], sizes = [132, 16], strides = [1, 1]} : vector<132x192xbf16> to vector<132x16xbf16>
    %95 = vector.extract_strided_slice %36 {offsets = [0, 176], sizes = [132, 16], strides = [1, 1]} : vector<132x192xbf16> to vector<132x16xbf16>
    %cst_35 = arith.constant dense<0.000000e+00> : vector<132x132xf32>
    %96 = tpu.matmul %93, %94, %cst_35 {dimension_numbers = #tpu.dot_dimension_numbers<[1], [1], [0], [0], [0, 0, 1, 0], [], []>} : vector<132x16xbf16>, vector<132x16xbf16>, vector<132x132xf32> -> vector<132x132xf32>
    %cst_36 = arith.constant dense<0xFF800000> : vector<132xf32>
    %97 = vector.multi_reduction <maximumf>, %96, %cst_36 [1] : vector<132x132xf32> to vector<132xf32>
    %98 = vector.shape_cast %97 : vector<132xf32> to vector<132x1xf32>
    %99 = vector.broadcast %98 : vector<132x1xf32> to vector<132x132xf32>
    %100 = arith.subf %96, %99 : vector<132x132xf32>
    %101 = math.exp %100 : vector<132x132xf32>
    %cst_37 = arith.constant dense<0.000000e+00> : vector<132xf32>
    %102 = vector.multi_reduction <add>, %101, %cst_37 [1] : vector<132x132xf32> to vector<132xf32>
    %103 = vector.shape_cast %102 : vector<132xf32> to vector<132x1xf32>
    %104 = tpu.reciprocal %103 {approx = true} : vector<132x1xf32> -> vector<132x1xf32>
    %105 = vector.broadcast %104 : vector<132x1xf32> to vector<132x132xf32>
    %106 = arith.mulf %101, %105 : vector<132x132xf32>
    %107 = arith.truncf %106 : vector<132x132xf32> to vector<132x132xbf16>
    %cst_38 = arith.constant dense<0.000000e+00> : vector<132x16xf32>
    %108 = tpu.matmul %107, %95, %cst_38 {dimension_numbers = #tpu.dot_dimension_numbers<[1], [0], [0], [1], [0, 0, 1, 1], [], []>} : vector<132x132xbf16>, vector<132x16xbf16>, vector<132x16xf32> -> vector<132x16xf32>
    %109 = tpu.concatenate %54, %72, %90, %108 in 1 : vector<132x16xf32>, vector<132x16xf32>, vector<132x16xf32>, vector<132x16xf32> -> vector<132x64xf32>
    %110 = arith.truncf %109 : vector<132x64xf32> to vector<132x64xbf16>
    %c0_39 = arith.constant 0 : index
    %c0_40 = arith.constant 0 : index
    %c0_41 = arith.constant 0 : index
    %111 = vector.load %arg7[%c0_39, %c0_40, %c0_41] : memref<1x64x64xbf16, #tpu.memory_space<vmem>>, vector<1x64x64xbf16>
    %112 = vector.shape_cast %111 : vector<1x64x64xbf16> to vector<64x64xbf16>
    %cst_42 = arith.constant dense<0.000000e+00> : vector<132x64xf32>
    %113 = tpu.matmul %110, %112, %cst_42 {dimension_numbers = #tpu.dot_dimension_numbers<[1], [0], [0], [1], [0, 0, 1, 1], [], []>} : vector<132x64xbf16>, vector<64x64xbf16>, vector<132x64xf32> -> vector<132x64xf32>
    %c0_43 = arith.constant 0 : index
    %c0_44 = arith.constant 0 : index
    %c0_45 = arith.constant 0 : index
    %114 = vector.load %arg8[%c0_43, %c0_44, %c0_45] : memref<1x1x64xf32, #tpu.memory_space<vmem>>, vector<1x1x64xf32>
    %115 = vector.shape_cast %114 : vector<1x1x64xf32> to vector<1x64xf32>
    %116 = vector.broadcast %115 : vector<1x64xf32> to vector<132x64xf32>
    %117 = arith.addf %113, %116 : vector<132x64xf32>
    %118 = arith.addf %3, %117 : vector<132x64xf32>
    %c0_46 = arith.constant 0 : index
    %c0_47 = arith.constant 0 : index
    %c0_48 = arith.constant 0 : index
    %119 = vector.load %arg9[%c0_46, %c0_47, %c0_48] : memref<1x1x64xf32, #tpu.memory_space<vmem>>, vector<1x1x64xf32>
    %120 = vector.shape_cast %119 : vector<1x1x64xf32> to vector<1x64xf32>
    %c0_49 = arith.constant 0 : index
    %c0_50 = arith.constant 0 : index
    %c0_51 = arith.constant 0 : index
    %121 = vector.load %arg10[%c0_49, %c0_50, %c0_51] : memref<1x1x64xf32, #tpu.memory_space<vmem>>, vector<1x1x64xf32>
    %122 = vector.shape_cast %121 : vector<1x1x64xf32> to vector<1x64xf32>
    %cst_52 = arith.constant dense<0.000000e+00> : vector<132xf32>
    %123 = vector.multi_reduction <add>, %118, %cst_52 [1] : vector<132x64xf32> to vector<132xf32>
    %124 = vector.shape_cast %123 : vector<132xf32> to vector<132x1xf32>
    %cst_53 = arith.constant 6.400000e+01 : f32
    %125 = vector.broadcast %cst_53 : f32 to vector<132x1xf32>
    %126 = arith.divf %124, %125 : vector<132x1xf32>
    %127 = vector.broadcast %126 : vector<132x1xf32> to vector<132x64xf32>
    %128 = arith.subf %118, %127 : vector<132x64xf32>
    %129 = arith.mulf %128, %128 : vector<132x64xf32>
    %cst_54 = arith.constant dense<0.000000e+00> : vector<132xf32>
    %130 = vector.multi_reduction <add>, %129, %cst_54 [1] : vector<132x64xf32> to vector<132xf32>
    %131 = vector.shape_cast %130 : vector<132xf32> to vector<132x1xf32>
    %cst_55 = arith.constant 6.400000e+01 : f32
    %132 = vector.broadcast %cst_55 : f32 to vector<132x1xf32>
    %133 = arith.divf %131, %132 : vector<132x1xf32>
    %cst_56 = arith.constant 9.99999974E-6 : f32
    %134 = vector.broadcast %cst_56 : f32 to vector<132x1xf32>
    %135 = arith.addf %133, %134 : vector<132x1xf32>
    %136 = math.rsqrt %135 : vector<132x1xf32>
    %137 = vector.broadcast %136 : vector<132x1xf32> to vector<132x64xf32>
    %138 = arith.mulf %128, %137 : vector<132x64xf32>
    %139 = vector.broadcast %120 : vector<1x64xf32> to vector<132x64xf32>
    %140 = arith.mulf %138, %139 : vector<132x64xf32>
    %141 = vector.broadcast %122 : vector<1x64xf32> to vector<132x64xf32>
    %142 = arith.addf %140, %141 : vector<132x64xf32>
    %143 = arith.truncf %142 : vector<132x64xf32> to vector<132x64xbf16>
    %c0_57 = arith.constant 0 : index
    %c0_58 = arith.constant 0 : index
    %c0_59 = arith.constant 0 : index
    %144 = vector.load %arg11[%c0_57, %c0_58, %c0_59] : memref<1x64x256xbf16, #tpu.memory_space<vmem>>, vector<1x64x256xbf16>
    %145 = vector.shape_cast %144 : vector<1x64x256xbf16> to vector<64x256xbf16>
    %cst_60 = arith.constant dense<0.000000e+00> : vector<132x256xf32>
    %146 = tpu.matmul %143, %145, %cst_60 {dimension_numbers = #tpu.dot_dimension_numbers<[1], [0], [0], [1], [0, 0, 1, 1], [], []>} : vector<132x64xbf16>, vector<64x256xbf16>, vector<132x256xf32> -> vector<132x256xf32>
    %c0_61 = arith.constant 0 : index
    %c0_62 = arith.constant 0 : index
    %c0_63 = arith.constant 0 : index
    %147 = vector.load %arg12[%c0_61, %c0_62, %c0_63] : memref<1x1x256xf32, #tpu.memory_space<vmem>>, vector<1x1x256xf32>
    %148 = vector.shape_cast %147 : vector<1x1x256xf32> to vector<1x256xf32>
    %149 = vector.broadcast %148 : vector<1x256xf32> to vector<132x256xf32>
    %150 = arith.addf %146, %149 : vector<132x256xf32>
    %cst_64 = arith.constant 1.702000e+00 : f32
    %151 = vector.broadcast %cst_64 : f32 to vector<132x256xf32>
    %152 = arith.mulf %151, %150 : vector<132x256xf32>
    %153 = arith.negf %152 : vector<132x256xf32>
    %154 = math.exp %153 : vector<132x256xf32>
    %cst_65 = arith.constant 1.000000e+00 : f32
    %155 = vector.broadcast %cst_65 : f32 to vector<132x256xf32>
    %156 = arith.addf %155, %154 : vector<132x256xf32>
    %157 = arith.divf %155, %156 : vector<132x256xf32>
    %158 = arith.mulf %150, %157 : vector<132x256xf32>
    %159 = arith.truncf %158 : vector<132x256xf32> to vector<132x256xbf16>
    %c0_66 = arith.constant 0 : index
    %c0_67 = arith.constant 0 : index
    %c0_68 = arith.constant 0 : index
    %160 = vector.load %arg13[%c0_66, %c0_67, %c0_68] : memref<1x256x64xbf16, #tpu.memory_space<vmem>>, vector<1x256x64xbf16>
    %161 = vector.shape_cast %160 : vector<1x256x64xbf16> to vector<256x64xbf16>
    %cst_69 = arith.constant dense<0.000000e+00> : vector<132x64xf32>
    %162 = tpu.matmul %159, %161, %cst_69 {dimension_numbers = #tpu.dot_dimension_numbers<[1], [0], [0], [1], [0, 0, 1, 1], [], []>} : vector<132x256xbf16>, vector<256x64xbf16>, vector<132x64xf32> -> vector<132x64xf32>
    %c0_70 = arith.constant 0 : index
    %c0_71 = arith.constant 0 : index
    %c0_72 = arith.constant 0 : index
    %163 = vector.load %arg14[%c0_70, %c0_71, %c0_72] : memref<1x1x64xf32, #tpu.memory_space<vmem>>, vector<1x1x64xf32>
    %164 = vector.shape_cast %163 : vector<1x1x64xf32> to vector<1x64xf32>
    %165 = vector.broadcast %164 : vector<1x64xf32> to vector<132x64xf32>
    %166 = arith.addf %162, %165 : vector<132x64xf32>
    %167 = arith.addf %118, %166 : vector<132x64xf32>
    %c0_73 = arith.constant 0 : index
    %c0_74 = arith.constant 0 : index
    %168 = vector.load %arg18[%c0_73, %c0_74] : memref<132x64xf32, #tpu.memory_space<vmem>>, vector<132x64xf32>
    tpu.vector_store %arg18[%c0_73, %c0_74], %167 {strides = array<i32>} : memref<132x64xf32, #tpu.memory_space<vmem>>, vector<132x64xf32>,
    %c3_i32 = arith.constant 3 : i32
    %169 = arith.cmpi eq, %arg1, %c3_i32 : i32
    %170 = arith.extui %169 : i1 to i32
    %c0_i32_75 = arith.constant 0 : i32
    %171 = arith.cmpi ne, %170, %c0_i32_75 : i32
    scf.if %171 {
      %c0_76 = arith.constant 0 : index
      %c0_77 = arith.constant 0 : index
      %172 = vector.load %arg15[%c0_76, %c0_77] : memref<1x64xf32, #tpu.memory_space<vmem>>, vector<1x64xf32>
      %c0_78 = arith.constant 0 : index
      %c0_79 = arith.constant 0 : index
      %173 = vector.load %arg16[%c0_78, %c0_79] : memref<1x64xf32, #tpu.memory_space<vmem>>, vector<1x64xf32>
      %cst_80 = arith.constant dense<0.000000e+00> : vector<132xf32>
      %174 = vector.multi_reduction <add>, %167, %cst_80 [1] : vector<132x64xf32> to vector<132xf32>
      %175 = vector.shape_cast %174 : vector<132xf32> to vector<132x1xf32>
      %cst_81 = arith.constant 6.400000e+01 : f32
      %176 = vector.broadcast %cst_81 : f32 to vector<132x1xf32>
      %177 = arith.divf %175, %176 : vector<132x1xf32>
      %178 = vector.broadcast %177 : vector<132x1xf32> to vector<132x64xf32>
      %179 = arith.subf %167, %178 : vector<132x64xf32>
      %180 = arith.mulf %179, %179 : vector<132x64xf32>
      %cst_82 = arith.constant dense<0.000000e+00> : vector<132xf32>
      %181 = vector.multi_reduction <add>, %180, %cst_82 [1] : vector<132x64xf32> to vector<132xf32>
      %182 = vector.shape_cast %181 : vector<132xf32> to vector<132x1xf32>
      %cst_83 = arith.constant 6.400000e+01 : f32
      %183 = vector.broadcast %cst_83 : f32 to vector<132x1xf32>
      %184 = arith.divf %182, %183 : vector<132x1xf32>
      %cst_84 = arith.constant 9.99999974E-6 : f32
      %185 = vector.broadcast %cst_84 : f32 to vector<132x1xf32>
      %186 = arith.addf %184, %185 : vector<132x1xf32>
      %187 = math.rsqrt %186 : vector<132x1xf32>
      %188 = vector.broadcast %187 : vector<132x1xf32> to vector<132x64xf32>
      %189 = arith.mulf %179, %188 : vector<132x64xf32>
      %190 = vector.broadcast %172 : vector<1x64xf32> to vector<132x64xf32>
      %191 = arith.mulf %189, %190 : vector<132x64xf32>
      %192 = vector.broadcast %173 : vector<1x64xf32> to vector<132x64xf32>
      %193 = arith.addf %191, %192 : vector<132x64xf32>
      %c0_85 = arith.constant 0 : index
      %c0_86 = arith.constant 0 : index
      %c0_87 = arith.constant 0 : index
      %194 = vector.load %arg17[%c0_85, %c0_86, %c0_87] : memref<1x132x64xf32, #tpu.memory_space<vmem>>, vector<1x132x64xf32>
      %195 = vector.shape_cast %194 : vector<1x132x64xf32> to vector<132x64xf32>
      %196 = vector.shape_cast %193 : vector<132x64xf32> to vector<1x132x64xf32>
      tpu.vector_store %arg17[%c0_85, %c0_86, %c0_87], %196 {strides = array<i32>} : memref<1x132x64xf32, #tpu.memory_space<vmem>>, vector<1x132x64xf32>,
    } else {
    }
    return
  }
  func.func @transform_0(%arg0: i32, %arg1: i32) -> (i32, i32, i32) {
    %c0_i32 = arith.constant 0 : i32
    %c0_i32_0 = arith.constant 0 : i32
    %c0_i32_1 = arith.constant 0 : i32
    return %arg0, %c0_i32, %c0_i32_0 : i32, i32, i32
  }
  func.func @transform_1(%arg0: i32, %arg1: i32) -> (i32, i32, i32) {
    %c0_i32 = arith.constant 0 : i32
    %c0_i32_0 = arith.constant 0 : i32
    %c0_i32_1 = arith.constant 0 : i32
    return %arg1, %c0_i32, %c0_i32_0 : i32, i32, i32
  }
  func.func @transform_2(%arg0: i32, %arg1: i32) -> (i32, i32, i32) {
    %c0_i32 = arith.constant 0 : i32
    %c0_i32_0 = arith.constant 0 : i32
    %c0_i32_1 = arith.constant 0 : i32
    return %arg1, %c0_i32, %c0_i32_0 : i32, i32, i32
  }
  func.func @transform_3(%arg0: i32, %arg1: i32) -> (i32, i32, i32) {
    %c0_i32 = arith.constant 0 : i32
    %c0_i32_0 = arith.constant 0 : i32
    %c0_i32_1 = arith.constant 0 : i32
    return %arg1, %c0_i32, %c0_i32_0 : i32, i32, i32
  }
  func.func @transform_4(%arg0: i32, %arg1: i32) -> (i32, i32, i32) {
    %c0_i32 = arith.constant 0 : i32
    %c0_i32_0 = arith.constant 0 : i32
    %c0_i32_1 = arith.constant 0 : i32
    return %arg1, %c0_i32, %c0_i32_0 : i32, i32, i32
  }
  func.func @transform_5(%arg0: i32, %arg1: i32) -> (i32, i32, i32) {
    %c0_i32 = arith.constant 0 : i32
    %c0_i32_0 = arith.constant 0 : i32
    %c0_i32_1 = arith.constant 0 : i32
    return %arg1, %c0_i32, %c0_i32_0 : i32, i32, i32
  }
  func.func @transform_6(%arg0: i32, %arg1: i32) -> (i32, i32, i32) {
    %c0_i32 = arith.constant 0 : i32
    %c0_i32_0 = arith.constant 0 : i32
    %c0_i32_1 = arith.constant 0 : i32
    return %arg1, %c0_i32, %c0_i32_0 : i32, i32, i32
  }
  func.func @transform_7(%arg0: i32, %arg1: i32) -> (i32, i32, i32) {
    %c0_i32 = arith.constant 0 : i32
    %c0_i32_0 = arith.constant 0 : i32
    %c0_i32_1 = arith.constant 0 : i32
    return %arg1, %c0_i32, %c0_i32_0 : i32, i32, i32
  }
  func.func @transform_8(%arg0: i32, %arg1: i32) -> (i32, i32, i32) {
    %c0_i32 = arith.constant 0 : i32
    %c0_i32_0 = arith.constant 0 : i32
    %c0_i32_1 = arith.constant 0 : i32
    return %arg1, %c0_i32, %c0_i32_0 : i32, i32, i32
  }
  func.func @transform_9(%arg0: i32, %arg1: i32) -> (i32, i32, i32) {
    %c0_i32 = arith.constant 0 : i32
    %c0_i32_0 = arith.constant 0 : i32
    %c0_i32_1 = arith.constant 0 : i32
    return %arg1, %c0_i32, %c0_i32_0 : i32, i32, i32
  }
  func.func @transform_10(%arg0: i32, %arg1: i32) -> (i32, i32, i32) {
    %c0_i32 = arith.constant 0 : i32
    %c0_i32_0 = arith.constant 0 : i32
    %c0_i32_1 = arith.constant 0 : i32
    return %arg1, %c0_i32, %c0_i32_0 : i32, i32, i32
  }
  func.func @transform_11(%arg0: i32, %arg1: i32) -> (i32, i32, i32) {
    %c0_i32 = arith.constant 0 : i32
    %c0_i32_0 = arith.constant 0 : i32
    %c0_i32_1 = arith.constant 0 : i32
    return %arg1, %c0_i32, %c0_i32_0 : i32, i32, i32
  }
  func.func @transform_12(%arg0: i32, %arg1: i32) -> (i32, i32, i32) {
    %c0_i32 = arith.constant 0 : i32
    %c0_i32_0 = arith.constant 0 : i32
    %c0_i32_1 = arith.constant 0 : i32
    return %arg1, %c0_i32, %c0_i32_0 : i32, i32, i32
  }
  func.func @transform_13(%arg0: i32, %arg1: i32) -> (i32, i32) {
    %c0_i32 = arith.constant 0 : i32
    %c0_i32_0 = arith.constant 0 : i32
    %c0_i32_1 = arith.constant 0 : i32
    return %c0_i32, %c0_i32_0 : i32, i32
  }
  func.func @transform_14(%arg0: i32, %arg1: i32) -> (i32, i32) {
    %c0_i32 = arith.constant 0 : i32
    %c0_i32_0 = arith.constant 0 : i32
    %c0_i32_1 = arith.constant 0 : i32
    return %c0_i32, %c0_i32_0 : i32, i32
  }
  func.func @transform_15(%arg0: i32, %arg1: i32) -> (i32, i32, i32) {
    %c0_i32 = arith.constant 0 : i32
    %c0_i32_0 = arith.constant 0 : i32
    %c0_i32_1 = arith.constant 0 : i32
    return %arg0, %c0_i32, %c0_i32_0 : i32, i32, i32
  }
}

</mosaic_0001>

<llo_original>
// kernel: local_feature_forward.1
$region0: #{local_feature_forward.1}
  #allocation0 [shape = 'u32[]', space=smem, size = 0x4, offset = 0x4, fixed_abs, tag = 'smem constant byte address 0x4 - core index']
  #allocation1 [shape = 'u32[144,128]{1,0:T(1,128)}', space=vmem, size = 0x12000, scoped, tag = 'internal scratch']
  #allocation2 [shape = 'f32[132,64]{1,0:T(8,128)}', space=vmem, size = 0x11000, scoped, tag = 'scratch operand']
  %s0 = inlined_call_operand.vmem [shape: f32[2,132,64], index: 0, kind: input, shape index: {}]
  %s1 = inlined_call_operand.vmem [shape: f32[4,1,64], index: 1, kind: input, shape index: {}]
  %s2 = inlined_call_operand.vmem [shape: f32[4,1,64], index: 2, kind: input, shape index: {}]
  %s3 = inlined_call_operand.vmem [shape: bf16[4,64,192], index: 3, kind: input, shape index: {}]
  %s4 = inlined_call_operand.vmem [shape: f32[4,1,192], index: 4, kind: input, shape index: {}]
  %s5 = inlined_call_operand.vmem [shape: bf16[4,64,64], index: 5, kind: input, shape index: {}]
  %s6 = inlined_call_operand.vmem [shape: f32[4,1,64], index: 6, kind: input, shape index: {}]
  %s7 = inlined_call_operand.vmem [shape: f32[4,1,64], index: 7, kind: input, shape index: {}]
  %s8 = inlined_call_operand.vmem [shape: f32[4,1,64], index: 8, kind: input, shape index: {}]
  %s9 = inlined_call_operand.vmem [shape: bf16[4,64,256], index: 9, kind: input, shape index: {}]
  %s10 = inlined_call_operand.vmem [shape: f32[4,1,256], index: 10, kind: input, shape index: {}]
  %s11 = inlined_call_operand.vmem [shape: bf16[4,256,64], index: 11, kind: input, shape index: {}]
  %s12 = inlined_call_operand.vmem [shape: f32[4,1,64], index: 12, kind: input, shape index: {}]
  %s13 = inlined_call_operand.vmem [shape: f32[1,64], index: 13, kind: input, shape index: {}]
  %s14 = inlined_call_operand.vmem [shape: f32[1,64], index: 14, kind: input, shape index: {}]
  %s15 = inlined_call_operand.vmem [shape: f32[2,132,64], index: 15, kind: output, shape index: {}]
  %s16 = sld [smem:[#allocation0]]
  $region101: #{local_feature_forward.1} parent=0
    _
  %s18 = ssub.s32 1, %s16
  %s19 = scalar_select 0, %s18, %s16
  loop: start=0, step=1, limit=10
  $region2: #{local_feature_forward.1} parent=0 // loop_pre_header
    _
  $region3: #{local_feature_forward.1} parent=0 // loop_header
    %s21 = sphi 0, %s25
    %p22 = scmp.ge.s32.totalorder %s21, 10
    %s28 = sphi 0, %s40
    %s29 = sphi 0, %s36
    %s30 = sphi 0, %s28
    %s31 = sphi 0, %s29
    %s32 = sphi 0, %s30
    %s33 = sphi 0, %s31
    %s43 = sphi 0, %s45
    %s46 = sphi 0, %s43
    %s47 = sphi 0, %s46
    %s63 = sphi 0, %s47
    %s69 = sphi 0, %s71
    %s72 = sphi 0, %s69
    %s73 = sphi 0, %s72
    %s89 = sphi 0, %s73
    %s95 = sphi 0, %s97
    %s98 = sphi 0, %s95
    %s99 = sphi 0, %s98
    %s115 = sphi 0, %s99
    %s121 = sphi 0, %s123
    %s124 = sphi 0, %s121
    %s125 = sphi 0, %s124
    %s141 = sphi 0, %s125
    %s147 = sphi 0, %s149
    %s150 = sphi 0, %s147
    %s151 = sphi 0, %s150
    %s167 = sphi 0, %s151
    %s173 = sphi 0, %s175
    %s176 = sphi 0, %s173
    %s177 = sphi 0, %s176
    %s193 = sphi 0, %s177
    %s199 = sphi 0, %s201
    %s202 = sphi 0, %s199
    %s203 = sphi 0, %s202
    %s219 = sphi 0, %s203
    %s225 = sphi 0, %s227
    %s228 = sphi 0, %s225
    %s229 = sphi 0, %s228
    %s245 = sphi 0, %s229
    %s251 = sphi 0, %s253
    %s254 = sphi 0, %s251
    %s255 = sphi 0, %s254
    %s271 = sphi 0, %s255
    %s277 = sphi 0, %s279
    %s280 = sphi 0, %s277
    %s281 = sphi 0, %s280
    %s297 = sphi 0, %s281
    %s303 = sphi 0, %s305
    %s306 = sphi 0, %s303
    %s307 = sphi 0, %s306
    %s323 = sphi 0, %s307
    %s329 = sphi 0, %s331
    %s332 = sphi 0, %s329
    %s333 = sphi 0, %s332
    %s349 = sphi 0, %s333
    %s355 = sphi 0, %s357
    %s358 = sphi 0, %s355
    %s359 = sphi 0, %s358
    %s375 = sphi 0, %s359
    %s379 = sphi 0, %s379
    %s381 = sphi 0, %s379
    %s382 = sphi 0, %s381
    %s396 = sphi 0, %s382
    %s400 = sphi 0, %s400
    %s402 = sphi 0, %s400
    %s403 = sphi 0, %s402
    %s417 = sphi 0, %s403
    %s423 = sphi 0, %s425
    %s426 = sphi 0, %s423
    %s427 = sphi 0, %s426
    %s443 = sphi 0, %s427
  $region4: #{local_feature_forward.1} parent=0 // loop_header_branch
    %24 = sbr.rel (%p22) target = $region8
  $region5: #{local_feature_forward.1} parent=0 // loop_body
    %s26 = ssub.s32 %s21, 1
    %s27 = ssub.s32 %s21, 2
    %s34 = sadd.s32 1, %s29
    %p35 = scmp.ge.s32.totalorder %s34, 4
    %s36 = scalar_select %p35, 0, %s34
    %s37 = sadd.s32 1, %s28
    %s38 = scalar_select %p35, %s37, %s28
    %p39 = scmp.ge.s32.totalorder %s38, 2
    %s40 = scalar_select %p39, 0, %s38
    %s41 = ssub.s32 %s28, %s40
    %p42 = scmp.eq.s32.totalorder %s41, 0
    %s44 = sadd.s32 %s43, 1
    %s45 = scalar_select %p42, %s43, %s44
    %p48 = pneg %p42
    %p49 = scmp.eq.s32.totalorder %s21, 7
    %p50 = por %p48, %p49
    %p51 = scmp.ne.s32.totalorder %s43, %s46
    %p52 = scmp.eq.s32.totalorder %s21, 0
    %p53 = por %p51, %p52
    %p54 = scmp.ne.s32.totalorder %s43, %s46
    %p55 = scmp.eq.s32.totalorder %s26, 7
    %p56 = por %p54, %p55
    %p57 = scmp.ne.s32.totalorder %s46, %s47
    %p58 = scmp.eq.s32.totalorder %s26, 0
    %p59 = por %p57, %p58
    %p60 = scmp.ne.s32.totalorder %s46, %s47
    %p61 = scmp.eq.s32.totalorder %s27, 7
    %p62 = por %p60, %p61
    %p64 = scmp.ne.s32.totalorder %s47, %s63
    %p65 = scmp.eq.s32.totalorder %s27, 0
    %p66 = por %p64, %p65
    %s67 = ssub.s32 %s29, %s36
    %p68 = scmp.eq.s32.totalorder %s67, 0
    %s70 = sadd.s32 %s69, 1
    %s71 = scalar_select %p68, %s69, %s70
    %p74 = pneg %p68
    %p75 = scmp.eq.s32.totalorder %s21, 7
    %p76 = por %p74, %p75
    %p77 = scmp.ne.s32.totalorder %s69, %s72
    %p78 = scmp.eq.s32.totalorder %s21, 0
    %p79 = por %p77, %p78
    %p80 = scmp.ne.s32.totalorder %s69, %s72
    %p81 = scmp.eq.s32.totalorder %s26, 7
    %p82 = por %p80, %p81
    %p83 = scmp.ne.s32.totalorder %s72, %s73
    %p84 = scmp.eq.s32.totalorder %s26, 0
    %p85 = por %p83, %p84
    %p86 = scmp.ne.s32.totalorder %s72, %s73
    %p87 = scmp.eq.s32.totalorder %s27, 7
    %p88 = por %p86, %p87
    %p90 = scmp.ne.s32.totalorder %s73, %s89
    %p91 = scmp.eq.s32.totalorder %s27, 0
    %p92 = por %p90, %p91
    %s93 = ssub.s32 %s29, %s36
    %p94 = scmp.eq.s32.totalorder %s93, 0
    %s96 = sadd.s32 %s95, 1
    %s97 = scalar_select %p94, %s95, %s96
    %p100 = pneg %p94
    %p101 = scmp.eq.s32.totalorder %s21, 7
    %p102 = por %p100, %p101
    %p103 = scmp.ne.s32.totalorder %s95, %s98
    %p104 = scmp.eq.s32.totalorder %s21, 0
    %p105 = por %p103, %p104
    %p106 = scmp.ne.s32.totalorder %s95, %s98
    %p107 = scmp.eq.s32.totalorder %s26, 7
    %p108 = por %p106, %p107
    %p109 = scmp.ne.s32.totalorder %s98, %s99
    %p110 = scmp.eq.s32.totalorder %s26, 0
    %p111 = por %p109, %p110
    %p112 = scmp.ne.s32.totalorder %s98, %s99
    %p113 = scmp.eq.s32.totalorder %s27, 7
    %p114 = por %p112, %p113
    %p116 = scmp.ne.s32.totalorder %s99, %s115
    %p117 = scmp.eq.s32.totalorder %s27, 0
    %p118 = por %p116, %p117
    %s119 = ssub.s32 %s29, %s36
    %p120 = scmp.eq.s32.totalorder %s119, 0
    %s122 = sadd.s32 %s121, 1
    %s123 = scalar_select %p120, %s121, %s122
    %p126 = pneg %p120
    %p127 = scmp.eq.s32.totalorder %s21, 7
    %p128 = por %p126, %p127
    %p129 = scmp.ne.s32.totalorder %s121, %s124
    %p130 = scmp.eq.s32.totalorder %s21, 0
    %p131 = por %p129, %p130
    %p132 = scmp.ne.s32.totalorder %s121, %s124
    %p133 = scmp.eq.s32.totalorder %s26, 7
    %p134 = por %p132, %p133
    %p135 = scmp.ne.s32.totalorder %s124, %s125
    %p136 = scmp.eq.s32.totalorder %s26, 0
    %p137 = por %p135, %p136
    %p138 = scmp.ne.s32.totalorder %s124, %s125
    %p139 = scmp.eq.s32.totalorder %s27, 7
    %p140 = por %p138, %p139
    %p142 = scmp.ne.s32.totalorder %s125, %s141
    %p143 = scmp.eq.s32.totalorder %s27, 0
    %p144 = por %p142, %p143
    %s145 = ssub.s32 %s29, %s36
    %p146 = scmp.eq.s32.totalorder %s145, 0
    %s148 = sadd.s32 %s147, 1
    %s149 = scalar_select %p146, %s147, %s148
    %p152 = pneg %p146
    %p153 = scmp.eq.s32.totalorder %s21, 7
    %p154 = por %p152, %p153
    %p155 = scmp.ne.s32.totalorder %s147, %s150
    %p156 = scmp.eq.s32.totalorder %s21, 0
    %p157 = por %p155, %p156
    %p158 = scmp.ne.s32.totalorder %s147, %s150
    %p159 = scmp.eq.s32.totalorder %s26, 7
    %p160 = por %p158, %p159
    %p161 = scmp.ne.s32.totalorder %s150, %s151
    %p162 = scmp.eq.s32.totalorder %s26, 0
    %p163 = por %p161, %p162
    %p164 = scmp.ne.s32.totalorder %s150, %s151
    %p165 = scmp.eq.s32.totalorder %s27, 7
    %p166 = por %p164, %p165
    %p168 = scmp.ne.s32.totalorder %s151, %s167
    %p169 = scmp.eq.s32.totalorder %s27, 0
    %p170 = por %p168, %p169
    %s171 = ssub.s32 %s29, %s36
    %p172 = scmp.eq.s32.totalorder %s171, 0
    %s174 = sadd.s32 %s173, 1
    %s175 = scalar_select %p172, %s173, %s174
    %p178 = pneg %p172
    %p179 = scmp.eq.s32.totalorder %s21, 7
    %p180 = por %p178, %p179
    %p181 = scmp.ne.s32.totalorder %s173, %s176
    %p182 = scmp.eq.s32.totalorder %s21, 0
    %p183 = por %p181, %p182
    %p184 = scmp.ne.s32.totalorder %s173, %s176
    %p185 = scmp.eq.s32.totalorder %s26, 7
    %p186 = por %p184, %p185
    %p187 = scmp.ne.s32.totalorder %s176, %s177
    %p188 = scmp.eq.s32.totalorder %s26, 0
    %p189 = por %p187, %p188
    %p190 = scmp.ne.s32.totalorder %s176, %s177
    %p191 = scmp.eq.s32.totalorder %s27, 7
    %p192 = por %p190, %p191
    %p194 = scmp.ne.s32.totalorder %s177, %s193
    %p195 = scmp.eq.s32.totalorder %s27, 0
    %p196 = por %p194, %p195
    %s197 = ssub.s32 %s29, %s36
    %p198 = scmp.eq.s32.totalorder %s197, 0
    %s200 = sadd.s32 %s199, 1
    %s201 = scalar_select %p198, %s199, %s200
    %p204 = pneg %p198
    %p205 = scmp.eq.s32.totalorder %s21, 7
    %p206 = por %p204, %p205
    %p207 = scmp.ne.s32.totalorder %s199, %s202
    %p208 = scmp.eq.s32.totalorder %s21, 0
    %p209 = por %p207, %p208
    %p210 = scmp.ne.s32.totalorder %s199, %s202
    %p211 = scmp.eq.s32.totalorder %s26, 7
    %p212 = por %p210, %p211
    %p213 = scmp.ne.s32.totalorder %s202, %s203
    %p214 = scmp.eq.s32.totalorder %s26, 0
    %p215 = por %p213, %p214
    %p216 = scmp.ne.s32.totalorder %s202, %s203
    %p217 = scmp.eq.s32.totalorder %s27, 7
    %p218 = por %p216, %p217
    %p220 = scmp.ne.s32.totalorder %s203, %s219
    %p221 = scmp.eq.s32.totalorder %s27, 0
    %p222 = por %p220, %p221
    %s223 = ssub.s32 %s29, %s36
    %p224 = scmp.eq.s32.totalorder %s223, 0
    %s226 = sadd.s32 %s225, 1
    %s227 = scalar_select %p224, %s225, %s226
    %p230 = pneg %p224
    %p231 = scmp.eq.s32.totalorder %s21, 7
    %p232 = por %p230, %p231
    %p233 = scmp.ne.s32.totalorder %s225, %s228
    %p234 = scmp.eq.s32.totalorder %s21, 0
    %p235 = por %p233, %p234
    %p236 = scmp.ne.s32.totalorder %s225, %s228
    %p237 = scmp.eq.s32.totalorder %s26, 7
    %p238 = por %p236, %p237
    %p239 = scmp.ne.s32.totalorder %s228, %s229
    %p240 = scmp.eq.s32.totalorder %s26, 0
    %p241 = por %p239, %p240
    %p242 = scmp.ne.s32.totalorder %s228, %s229
    %p243 = scmp.eq.s32.totalorder %s27, 7
    %p244 = por %p242, %p243
    %p246 = scmp.ne.s32.totalorder %s229, %s245
    %p247 = scmp.eq.s32.totalorder %s27, 0
    %p248 = por %p246, %p247
    %s249 = ssub.s32 %s29, %s36
    %p250 = scmp.eq.s32.totalorder %s249, 0
    %s252 = sadd.s32 %s251, 1
    %s253 = scalar_select %p250, %s251, %s252
    %p256 = pneg %p250
    %p257 = scmp.eq.s32.totalorder %s21, 7
    %p258 = por %p256, %p257
    %p259 = scmp.ne.s32.totalorder %s251, %s254
    %p260 = scmp.eq.s32.totalorder %s21, 0
    %p261 = por %p259, %p260
    %p262 = scmp.ne.s32.totalorder %s251, %s254
    %p263 = scmp.eq.s32.totalorder %s26, 7
    %p264 = por %p262, %p263
    %p265 = scmp.ne.s32.totalorder %s254, %s255
    %p266 = scmp.eq.s32.totalorder %s26, 0
    %p267 = por %p265, %p266
    %p268 = scmp.ne.s32.totalorder %s254, %s255
    %p269 = scmp.eq.s32.totalorder %s27, 7
    %p270 = por %p268, %p269
    %p272 = scmp.ne.s32.totalorder %s255, %s271
    %p273 = scmp.eq.s32.totalorder %s27, 0
    %p274 = por %p272, %p273
    %s275 = ssub.s32 %s29, %s36
    %p276 = scmp.eq.s32.totalorder %s275, 0
    %s278 = sadd.s32 %s277, 1
    %s279 = scalar_select %p276, %s277, %s278
    %p282 = pneg %p276
    %p283 = scmp.eq.s32.totalorder %s21, 7
    %p284 = por %p282, %p283
    %p285 = scmp.ne.s32.totalorder %s277, %s280
    %p286 = scmp.eq.s32.totalorder %s21, 0
    %p287 = por %p285, %p286
    %p288 = scmp.ne.s32.totalorder %s277, %s280
    %p289 = scmp.eq.s32.totalorder %s26, 7
    %p290 = por %p288, %p289
    %p291 = scmp.ne.s32.totalorder %s280, %s281
    %p292 = scmp.eq.s32.totalorder %s26, 0
    %p293 = por %p291, %p292
    %p294 = scmp.ne.s32.totalorder %s280, %s281
    %p295 = scmp.eq.s32.totalorder %s27, 7
    %p296 = por %p294, %p295
    %p298 = scmp.ne.s32.totalorder %s281, %s297
    %p299 = scmp.eq.s32.totalorder %s27, 0
    %p300 = por %p298, %p299
    %s301 = ssub.s32 %s29, %s36
    %p302 = scmp.eq.s32.totalorder %s301, 0
    %s304 = sadd.s32 %s303, 1
    %s305 = scalar_select %p302, %s303, %s304
    %p308 = pneg %p302
    %p309 = scmp.eq.s32.totalorder %s21, 7
    %p310 = por %p308, %p309
    %p311 = scmp.ne.s32.totalorder %s303, %s306
    %p312 = scmp.eq.s32.totalorder %s21, 0
    %p313 = por %p311, %p312
    %p314 = scmp.ne.s32.totalorder %s303, %s306
    %p315 = scmp.eq.s32.totalorder %s26, 7
    %p316 = por %p314, %p315
    %p317 = scmp.ne.s32.totalorder %s306, %s307
    %p318 = scmp.eq.s32.totalorder %s26, 0
    %p319 = por %p317, %p318
    %p320 = scmp.ne.s32.totalorder %s306, %s307
    %p321 = scmp.eq.s32.totalorder %s27, 7
    %p322 = por %p320, %p321
    %p324 = scmp.ne.s32.totalorder %s307, %s323
    %p325 = scmp.eq.s32.totalorder %s27, 0
    %p326 = por %p324, %p325
    %s327 = ssub.s32 %s29, %s36
    %p328 = scmp.eq.s32.totalorder %s327, 0
    %s330 = sadd.s32 %s329, 1
    %s331 = scalar_select %p328, %s329, %s330
    %p334 = pneg %p328
    %p335 = scmp.eq.s32.totalorder %s21, 7
    %p336 = por %p334, %p335
    %p337 = scmp.ne.s32.totalorder %s329, %s332
    %p338 = scmp.eq.s32.totalorder %s21, 0
    %p339 = por %p337, %p338
    %p340 = scmp.ne.s32.totalorder %s329, %s332
    %p341 = scmp.eq.s32.totalorder %s26, 7
    %p342 = por %p340, %p341
    %p343 = scmp.ne.s32.totalorder %s332, %s333
    %p344 = scmp.eq.s32.totalorder %s26, 0
    %p345 = por %p343, %p344
    %p346 = scmp.ne.s32.totalorder %s332, %s333
    %p347 = scmp.eq.s32.totalorder %s27, 7
    %p348 = por %p346, %p347
    %p350 = scmp.ne.s32.totalorder %s333, %s349
    %p351 = scmp.eq.s32.totalorder %s27, 0
    %p352 = por %p350, %p351
    %s353 = ssub.s32 %s29, %s36
    %p354 = scmp.eq.s32.totalorder %s353, 0
    %s356 = sadd.s32 %s355, 1
    %s357 = scalar_select %p354, %s355, %s356
    %p360 = pneg %p354
    %p361 = scmp.eq.s32.totalorder %s21, 7
    %p362 = por %p360, %p361
    %p363 = scmp.ne.s32.totalorder %s355, %s358
    %p364 = scmp.eq.s32.totalorder %s21, 0
    %p365 = por %p363, %p364
    %p366 = scmp.ne.s32.totalorder %s355, %s358
    %p367 = scmp.eq.s32.totalorder %s26, 7
    %p368 = por %p366, %p367
    %p369 = scmp.ne.s32.totalorder %s358, %s359
    %p370 = scmp.eq.s32.totalorder %s26, 0
    %p371 = por %p369, %p370
    %p372 = scmp.ne.s32.totalorder %s358, %s359
    %p373 = scmp.eq.s32.totalorder %s27, 7
    %p374 = por %p372, %p373
    %p376 = scmp.ne.s32.totalorder %s359, %s375
    %p377 = scmp.eq.s32.totalorder %s27, 0
    %p378 = por %p376, %p377
    %s380 = sadd.s32 %s379, 1
    %p383 = scmp.eq.s32.totalorder %s21, 7
    %p384 = scmp.ne.s32.totalorder %s379, %s381
    %p385 = scmp.eq.s32.totalorder %s21, 0
    %p386 = por %p384, %p385
    %p387 = scmp.ne.s32.totalorder %s379, %s381
    %p388 = scmp.eq.s32.totalorder %s26, 7
    %p389 = por %p387, %p388
    %p390 = scmp.ne.s32.totalorder %s381, %s382
    %p391 = scmp.eq.s32.totalorder %s26, 0
    %p392 = por %p390, %p391
    %p393 = scmp.ne.s32.totalorder %s381, %s382
    %p394 = scmp.eq.s32.totalorder %s27, 7
    %p395 = por %p393, %p394
    %p397 = scmp.ne.s32.totalorder %s382, %s396
    %p398 = scmp.eq.s32.totalorder %s27, 0
    %p399 = por %p397, %p398
    %s401 = sadd.s32 %s400, 1
    %p404 = scmp.eq.s32.totalorder %s21, 7
    %p405 = scmp.ne.s32.totalorder %s400, %s402
    %p406 = scmp.eq.s32.totalorder %s21, 0
    %p407 = por %p405, %p406
    %p408 = scmp.ne.s32.totalorder %s400, %s402
    %p409 = scmp.eq.s32.totalorder %s26, 7
    %p410 = por %p408, %p409
    %p411 = scmp.ne.s32.totalorder %s402, %s403
    %p412 = scmp.eq.s32.totalorder %s26, 0
    %p413 = por %p411, %p412
    %p414 = scmp.ne.s32.totalorder %s402, %s403
    %p415 = scmp.eq.s32.totalorder %s27, 7
    %p416 = por %p414, %p415
    %p418 = scmp.ne.s32.totalorder %s403, %s417
    %p419 = scmp.eq.s32.totalorder %s27, 0
    %p420 = por %p418, %p419
    %s421 = ssub.s32 %s28, %s40
    %p422 = scmp.eq.s32.totalorder %s421, 0
    %s424 = sadd.s32 %s423, 1
    %s425 = scalar_select %p422, %s423, %s424
    %p428 = pneg %p422
    %p429 = scmp.eq.s32.totalorder %s21, 7
    %p430 = por %p428, %p429
    %p431 = scmp.ne.s32.totalorder %s423, %s426
    %p432 = scmp.eq.s32.totalorder %s21, 0
    %p433 = por %p431, %p432
    %p434 = scmp.ne.s32.totalorder %s423, %s426
    %p435 = scmp.eq.s32.totalorder %s26, 7
    %p436 = por %p434, %p435
    %p437 = scmp.ne.s32.totalorder %s426, %s427
    %p438 = scmp.eq.s32.totalorder %s26, 0
    %p439 = por %p437, %p438
    %p440 = scmp.ne.s32.totalorder %s426, %s427
    %p441 = scmp.eq.s32.totalorder %s27, 7
    %p442 = por %p440, %p441
    %p444 = scmp.ne.s32.totalorder %s427, %s443
    %p445 = scmp.eq.s32.totalorder %s27, 0
    %p446 = por %p444, %p445
    %p447 = scmp.le.s32.totalorder 1, %s21
    %p448 = scmp.lt.s32.totalorder %s21, 9
    %p449 = pnand %p447, %p448
    %p450 = pneg %p449
    // Predicated region
    $region9: #{local_feature_forward.1} parent=5 // pred_check
      _
    $region10: #{local_feature_forward.1} parent=5 // pred_check_branch
      %452 = sbr.rel (%p449) target = $region12
    $region11: #{local_feature_forward.1} parent=5 // pred_region
      %s453 = ssub.s32 %s21, 1
      // Predicated region
      $region13: #{local_feature_forward.1} parent=11 // pred_check
        %p454 = pneg %p392
      $region14: #{local_feature_forward.1} parent=11 // pred_check_branch
        %456 = sbr.rel (%p454) target = $region16
      $region15: #{local_feature_forward.1} parent=11 // pred_region
        _
      $region16: #{local_feature_forward.1} parent=11 // pred_fallthru
        _
      // Predicated region
      $region17: #{local_feature_forward.1} parent=11 // pred_check
        %p457 = pneg %p413
      $region18: #{local_feature_forward.1} parent=11 // pred_check_branch
        %459 = sbr.rel (%p457) target = $region20
      $region19: #{local_feature_forward.1} parent=11 // pred_region
        _
      $region20: #{local_feature_forward.1} parent=11 // pred_fallthru
        _
    $region12: #{local_feature_forward.1} parent=5 // pred_fallthru
      _
    %p460 = scmp.lt.s32.totalorder %s21, 8
    // Predicated region
    $region21: #{local_feature_forward.1} parent=5 // pred_check
      %p461 = pneg %p460
    $region22: #{local_feature_forward.1} parent=5 // pred_check_branch
      %463 = sbr.rel (%p461) target = $region24
    $region23: #{local_feature_forward.1} parent=5 // pred_region
      // Predicated region
      $region25: #{local_feature_forward.1} parent=23 // pred_check
        %p464 = pneg %p53
      $region26: #{local_feature_forward.1} parent=23 // pred_check_branch
        %466 = sbr.rel (%p464) target = $region28
      $region27: #{local_feature_forward.1} parent=23 // pred_region
        %p467 = scmp.lt.s32.totalorder %s28, 1
        %s468 = scalar_select %p467, %s28, 1
        %s469 = smul.addr %s468, 17
        %s470 = smul.addr %s469, 8
        %s471 = scalar_lea.vmem %s0, %s470
      $region28: #{local_feature_forward.1} parent=23 // pred_fallthru
        _
      // Predicated region
      $region29: #{local_feature_forward.1} parent=23 // pred_check
        %p472 = pneg %p79
      $region30: #{local_feature_forward.1} parent=23 // pred_check_branch
        %474 = sbr.rel (%p472) target = $region32
      $region31: #{local_feature_forward.1} parent=23 // pred_region
        %p475 = scmp.lt.s32.totalorder %s29, 3
        %s476 = scalar_select %p475, %s29, 3
        %s477 = scalar_lea.vmem %s1, %s476
      $region32: #{local_feature_forward.1} parent=23 // pred_fallthru
        _
      // Predicated region
      $region33: #{local_feature_forward.1} parent=23 // pred_check
        %p478 = pneg %p105
      $region34: #{local_feature_forward.1} parent=23 // pred_check_branch
        %480 = sbr.rel (%p478) target = $region36
      $region35: #{local_feature_forward.1} parent=23 // pred_region
        %p481 = scmp.lt.s32.totalorder %s29, 3
        %s482 = scalar_select %p481, %s29, 3
        %s483 = scalar_lea.vmem %s2, %s482
      $region36: #{local_feature_forward.1} parent=23 // pred_fallthru
        _
      // Predicated region
      $region37: #{local_feature_forward.1} parent=23 // pred_check
        %p484 = pneg %p131
      $region38: #{local_feature_forward.1} parent=23 // pred_check_branch
        %486 = sbr.rel (%p484) target = $region40
      $region39: #{local_feature_forward.1} parent=23 // pred_region
        %p487 = scmp.lt.s32.totalorder %s29, 3
        %s488 = scalar_select %p487, %s29, 3
        %s489 = smul.addr %s488, 16
        %s490 = smul.addr %s489, 4
        %s491 = scalar_lea.vmem %s3, %s490
      $region40: #{local_feature_forward.1} parent=23 // pred_fallthru
        _
      // Predicated region
      $region41: #{local_feature_forward.1} parent=23 // pred_check
        %p492 = pneg %p157
      $region42: #{local_feature_forward.1} parent=23 // pred_check_branch
        %494 = sbr.rel (%p492) target = $region44
      $region43: #{local_feature_forward.1} parent=23 // pred_region
        %p495 = scmp.lt.s32.totalorder %s29, 3
        %s496 = scalar_select %p495, %s29, 3
        %s497 = smul.addr %s496, 2
        %s498 = scalar_lea.vmem %s4, %s497
      $region44: #{local_feature_forward.1} parent=23 // pred_fallthru
        _
      // Predicated region
      $region45: #{local_feature_forward.1} parent=23 // pred_check
        %p499 = pneg %p183
      $region46: #{local_feature_forward.1} parent=23 // pred_check_branch
        %501 = sbr.rel (%p499) target = $region48
      $region47: #{local_feature_forward.1} parent=23 // pred_region
        %p502 = scmp.lt.s32.totalorder %s29, 3
        %s503 = scalar_select %p502, %s29, 3
        %s504 = smul.addr %s503, 8
        %s505 = smul.addr %s504, 4
        %s506 = scalar_lea.vmem %s5, %s505
      $region48: #{local_feature_forward.1} parent=23 // pred_fallthru
        _
      // Predicated region
      $region49: #{local_feature_forward.1} parent=23 // pred_check
        %p507 = pneg %p209
      $region50: #{local_feature_forward.1} parent=23 // pred_check_branch
        %509 = sbr.rel (%p507) target = $region52
      $region51: #{local_feature_forward.1} parent=23 // pred_region
        %p510 = scmp.lt.s32.totalorder %s29, 3
        %s511 = scalar_select %p510, %s29, 3
        %s512 = scalar_lea.vmem %s6, %s511
      $region52: #{local_feature_forward.1} parent=23 // pred_fallthru
        _
      // Predicated region
      $region53: #{local_feature_forward.1} parent=23 // pred_check
        %p513 = pneg %p235
      $region54: #{local_feature_forward.1} parent=23 // pred_check_branch
        %515 = sbr.rel (%p513) target = $region56
      $region55: #{local_feature_forward.1} parent=23 // pred_region
        %p516 = scmp.lt.s32.totalorder %s29, 3
        %s517 = scalar_select %p516, %s29, 3
        %s518 = scalar_lea.vmem %s7, %s517
      $region56: #{local_feature_forward.1} parent=23 // pred_fallthru
        _
      // Predicated region
      $region57: #{local_feature_forward.1} parent=23 // pred_check
        %p519 = pneg %p261
      $region58: #{local_feature_forward.1} parent=23 // pred_check_branch
        %521 = sbr.rel (%p519) target = $region60
      $region59: #{local_feature_forward.1} parent=23 // pred_region
        %p522 = scmp.lt.s32.totalorder %s29, 3
        %s523 = scalar_select %p522, %s29, 3
        %s524 = scalar_lea.vmem %s8, %s523
      $region60: #{local_feature_forward.1} parent=23 // pred_fallthru
        _
      // Predicated region
      $region61: #{local_feature_forward.1} parent=23 // pred_check
        %p525 = pneg %p287
      $region62: #{local_feature_forward.1} parent=23 // pred_check_branch
        %527 = sbr.rel (%p525) target = $region64
      $region63: #{local_feature_forward.1} parent=23 // pred_region
        %p528 = scmp.lt.s32.totalorder %s29, 3
        %s529 = scalar_select %p528, %s29, 3
        %s530 = smul.addr %s529, 16
        %s531 = smul.addr %s530, 4
        %s532 = scalar_lea.vmem %s9, %s531
      $region64: #{local_feature_forward.1} parent=23 // pred_fallthru
        _
      // Predicated region
      $region65: #{local_feature_forward.1} parent=23 // pred_check
        %p533 = pneg %p313
      $region66: #{local_feature_forward.1} parent=23 // pred_check_branch
        %535 = sbr.rel (%p533) target = $region68
      $region67: #{local_feature_forward.1} parent=23 // pred_region
        %p536 = scmp.lt.s32.totalorder %s29, 3
        %s537 = scalar_select %p536, %s29, 3
        %s538 = smul.addr %s537, 2
        %s539 = scalar_lea.vmem %s10, %s538
      $region68: #{local_feature_forward.1} parent=23 // pred_fallthru
        _
      // Predicated region
      $region69: #{local_feature_forward.1} parent=23 // pred_check
        %p540 = pneg %p339
      $region70: #{local_feature_forward.1} parent=23 // pred_check_branch
        %542 = sbr.rel (%p540) target = $region72
      $region71: #{local_feature_forward.1} parent=23 // pred_region
        %p543 = scmp.lt.s32.totalorder %s29, 3
        %s544 = scalar_select %p543, %s29, 3
        %s545 = smul.addr %s544, 32
        %s546 = smul.addr %s545, 4
        %s547 = scalar_lea.vmem %s11, %s546
      $region72: #{local_feature_forward.1} parent=23 // pred_fallthru
        _
      // Predicated region
      $region73: #{local_feature_forward.1} parent=23 // pred_check
        %p548 = pneg %p365
      $region74: #{local_feature_forward.1} parent=23 // pred_check_branch
        %550 = sbr.rel (%p548) target = $region76
      $region75: #{local_feature_forward.1} parent=23 // pred_region
        %p551 = scmp.lt.s32.totalorder %s29, 3
        %s552 = scalar_select %p551, %s29, 3
        %s553 = scalar_lea.vmem %s12, %s552
      $region76: #{local_feature_forward.1} parent=23 // pred_fallthru
        _
    $region24: #{local_feature_forward.1} parent=5 // pred_fallthru
      _
    %p554 = scmp.le.s32.totalorder 1, %s21
    %p555 = scmp.lt.s32.totalorder %s21, 9
    %p556 = pnand %p554, %p555
    %p557 = pneg %p556
    // Predicated region
    $region77: #{local_feature_forward.1} parent=5 // pred_check
      _
    $region78: #{local_feature_forward.1} parent=5 // pred_check_branch
      %559 = sbr.rel (%p556) target = $region80
    $region79: #{local_feature_forward.1} parent=5 // pred_region
      %s560 = ssub.s32 %s21, 1
      %p561 = scmp.lt.s32.totalorder %s30, 1
      %s562 = scalar_select %p561, %s30, 1
      %s563 = smul.addr %s562, 17
      %s564 = smul.addr %s563, 8
      %s565 = scalar_lea.vmem %s0, %s564
      %p566 = pneg %p59
      %p567 = pneg %p56
      %p568 = scmp.lt.s32.totalorder %s31, 3
      %s569 = scalar_select %p568, %s31, 3
      %s570 = scalar_lea.vmem %s1, %s569
      %p571 = pneg %p85
      %p572 = pneg %p82
      %p573 = scmp.lt.s32.totalorder %s31, 3
      %s574 = scalar_select %p573, %s31, 3
      %s575 = scalar_lea.vmem %s2, %s574
      %p576 = pneg %p111
      %p577 = pneg %p108
      %p578 = scmp.lt.s32.totalorder %s31, 3
      %s579 = scalar_select %p578, %s31, 3
      %s580 = smul.addr %s579, 16
      %s581 = smul.addr %s580, 4
      %s582 = scalar_lea.vmem %s3, %s581
      %p583 = pneg %p137
      %p584 = pneg %p134
      %p585 = scmp.lt.s32.totalorder %s31, 3
      %s586 = scalar_select %p585, %s31, 3
      %s587 = smul.addr %s586, 2
      %s588 = scalar_lea.vmem %s4, %s587
      %p589 = pneg %p163
      %p590 = pneg %p160
      %p591 = scmp.lt.s32.totalorder %s31, 3
      %s592 = scalar_select %p591, %s31, 3
      %s593 = smul.addr %s592, 8
      %s594 = smul.addr %s593, 4
      %s595 = scalar_lea.vmem %s5, %s594
      %p596 = pneg %p189
      %p597 = pneg %p186
      %p598 = scmp.lt.s32.totalorder %s31, 3
      %s599 = scalar_select %p598, %s31, 3
      %s600 = scalar_lea.vmem %s6, %s599
      %p601 = pneg %p215
      %p602 = pneg %p212
      %p603 = scmp.lt.s32.totalorder %s31, 3
      %s604 = scalar_select %p603, %s31, 3
      %s605 = scalar_lea.vmem %s7, %s604
      %p606 = pneg %p241
      %p607 = pneg %p238
      %p608 = scmp.lt.s32.totalorder %s31, 3
      %s609 = scalar_select %p608, %s31, 3
      %s610 = scalar_lea.vmem %s8, %s609
      %p611 = pneg %p267
      %p612 = pneg %p264
      %p613 = scmp.lt.s32.totalorder %s31, 3
      %s614 = scalar_select %p613, %s31, 3
      %s615 = smul.addr %s614, 16
      %s616 = smul.addr %s615, 4
      %s617 = scalar_lea.vmem %s9, %s616
      %p618 = pneg %p293
      %p619 = pneg %p290
      %p620 = scmp.lt.s32.totalorder %s31, 3
      %s621 = scalar_select %p620, %s31, 3
      %s622 = smul.addr %s621, 2
      %s623 = scalar_lea.vmem %s10, %s622
      %p624 = pneg %p319
      %p625 = pneg %p316
      %p626 = scmp.lt.s32.totalorder %s31, 3
      %s627 = scalar_select %p626, %s31, 3
      %s628 = smul.addr %s627, 32
      %s629 = smul.addr %s628, 4
      %s630 = scalar_lea.vmem %s11, %s629
      %p631 = pneg %p345
      %p632 = pneg %p342
      %p633 = scmp.lt.s32.totalorder %s31, 3
      %s634 = scalar_select %p633, %s31, 3
      %s635 = scalar_lea.vmem %s12, %s634
      %p636 = pneg %p371
      %p637 = pneg %p368
      %p638 = pneg %p392
      %p639 = pneg %p389
      %p640 = pneg %p413
      %p641 = pneg %p410
      %p642 = pneg %p439
      %p643 = pneg %p436
      %p644 = scmp.lt.s32.totalorder %s30, 1
      %s645 = scalar_select %p644, %s30, 1
      %s646 = smul.addr %s645, 17
      %s647 = smul.addr %s646, 8
      %s648 = scalar_lea.vmem %s15, %s647
      %p649 = scmp.lt.s32.totalorder %s30, 1
      %s650 = scalar_select %p649, %s30, 1
      %s651 = smul.addr %s650, 17
      %s652 = smul.addr %s651, 8
      %s653 = scalar_lea.vmem %s0, %s652
      %p654 = scmp.lt.s32.totalorder %s31, 3
      %s655 = scalar_select %p654, %s31, 3
      %s656 = scalar_lea.vmem %s1, %s655
      %p657 = scmp.lt.s32.totalorder %s31, 3
      %s658 = scalar_select %p657, %s31, 3
      %s659 = scalar_lea.vmem %s2, %s658
      %p660 = scmp.lt.s32.totalorder %s31, 3
      %s661 = scalar_select %p660, %s31, 3
      %s662 = smul.addr %s661, 16
      %s663 = smul.addr %s662, 4
      %s664 = scalar_lea.vmem %s3, %s663
      %p665 = scmp.lt.s32.totalorder %s31, 3
      %s666 = scalar_select %p665, %s31, 3
      %s667 = smul.addr %s666, 2
      %s668 = scalar_lea.vmem %s4, %s667
      %p669 = scmp.lt.s32.totalorder %s31, 3
      %s670 = scalar_select %p669, %s31, 3
      %s671 = smul.addr %s670, 8
      %s672 = smul.addr %s671, 4
      %s673 = scalar_lea.vmem %s5, %s672
      %p674 = scmp.lt.s32.totalorder %s31, 3
      %s675 = scalar_select %p674, %s31, 3
      %s676 = scalar_lea.vmem %s6, %s675
      %p677 = scmp.lt.s32.totalorder %s31, 3
      %s678 = scalar_select %p677, %s31, 3
      %s679 = scalar_lea.vmem %s7, %s678
      %p680 = scmp.lt.s32.totalorder %s31, 3
      %s681 = scalar_select %p680, %s31, 3
      %s682 = scalar_lea.vmem %s8, %s681
      %p683 = scmp.lt.s32.totalorder %s31, 3
      %s684 = scalar_select %p683, %s31, 3
      %s685 = smul.addr %s684, 16
      %s686 = smul.addr %s685, 4
      %s687 = scalar_lea.vmem %s9, %s686
      %p688 = scmp.lt.s32.totalorder %s31, 3
      %s689 = scalar_select %p688, %s31, 3
      %s690 = smul.addr %s689, 2
      %s691 = scalar_lea.vmem %s10, %s690
      %p692 = scmp.lt.s32.totalorder %s31, 3
      %s693 = scalar_select %p692, %s31, 3
      %s694 = smul.addr %s693, 32
      %s695 = smul.addr %s694, 4
      %s696 = scalar_lea.vmem %s11, %s695
      %p697 = scmp.lt.s32.totalorder %s31, 3
      %s698 = scalar_select %p697, %s31, 3
      %s699 = scalar_lea.vmem %s12, %s698
      %p700 = scmp.lt.s32.totalorder %s30, 1
      %s701 = scalar_select %p700, %s30, 1
      %s702 = smul.addr %s701, 17
      %s703 = smul.addr %s702, 8
      %s704 = scalar_lea.vmem %s15, %s703
      %p707 = scmp.eq.s32.totalorder %s31, 0
      // Predicated region
      $region81: #{local_feature_forward.1} parent=79 // pred_check
        %p708 = pneg %p707
      $region82: #{local_feature_forward.1} parent=79 // pred_check_branch
        %710 = sbr.rel (%p708) target = $region84
      $region83: #{local_feature_forward.1} parent=79 // pred_region
        %v711 = vld [vmem:[%s653] sm:$0xff]
        %v712 = vld [vmem:[%s653 + $0x8] sm:$0xff]
        %v713 = vld [vmem:[%s653 + $0x10] sm:$0xff]
        %v714 = vld [vmem:[%s653 + $0x18] sm:$0xff]
        %v715 = vld [vmem:[%s653 + $0x20] sm:$0xff]
        %v716 = vld [vmem:[%s653 + $0x28] sm:$0xff]
        %v717 = vld [vmem:[%s653 + $0x30] sm:$0xff]
        %v718 = vld [vmem:[%s653 + $0x38] sm:$0xff]
        %v719 = vld [vmem:[%s653 + $0x40] sm:$0xff]
        %v720 = vld [vmem:[%s653 + $0x48] sm:$0xff]
        %v721 = vld [vmem:[%s653 + $0x50] sm:$0xff]
        %v722 = vld [vmem:[%s653 + $0x58] sm:$0xff]
        %v723 = vld [vmem:[%s653 + $0x60] sm:$0xff]
        %v724 = vld [vmem:[%s653 + $0x68] sm:$0xff]
        %v725 = vld [vmem:[%s653 + $0x70] sm:$0xff]
        %v726 = vld [vmem:[%s653 + $0x78] sm:$0xff]
        %v727 = vld [vmem:[%s653 + $0x80] sm:$0xf]
        %vm728 = vcmask 523264
        %729 = vst.msk [vmem:[#allocation2] sm:$0xff] %vm728, %v711
        %730 = vst.msk [vmem:[#allocation2 + $0x8] sm:$0xff] %vm728, %v712
        %731 = vst.msk [vmem:[#allocation2 + $0x10] sm:$0xff] %vm728, %v713
        %732 = vst.msk [vmem:[#allocation2 + $0x18] sm:$0xff] %vm728, %v714
        %733 = vst.msk [vmem:[#allocation2 + $0x20] sm:$0xff] %vm728, %v715
        %734 = vst.msk [vmem:[#allocation2 + $0x28] sm:$0xff] %vm728, %v716
        %735 = vst.msk [vmem:[#allocation2 + $0x30] sm:$0xff] %vm728, %v717
        %736 = vst.msk [vmem:[#allocation2 + $0x38] sm:$0xff] %vm728, %v718
        %737 = vst.msk [vmem:[#allocation2 + $0x40] sm:$0xff] %vm728, %v719
        %738 = vst.msk [vmem:[#allocation2 + $0x48] sm:$0xff] %vm728, %v720
        %739 = vst.msk [vmem:[#allocation2 + $0x50] sm:$0xff] %vm728, %v721
        %740 = vst.msk [vmem:[#allocation2 + $0x58] sm:$0xff] %vm728, %v722
        %741 = vst.msk [vmem:[#allocation2 + $0x60] sm:$0xff] %vm728, %v723
        %742 = vst.msk [vmem:[#allocation2 + $0x68] sm:$0xff] %vm728, %v724
        %743 = vst.msk [vmem:[#allocation2 + $0x70] sm:$0xff] %vm728, %v725
        %744 = vst.msk [vmem:[#allocation2 + $0x78] sm:$0xff] %vm728, %v726
        %vm745 = vcmask 519168
        %746 = vst.msk [vmem:[#allocation2 + $0x80] sm:$0xf] %vm745, %v727
      $region84: #{local_feature_forward.1} parent=79 // pred_fallthru
        _
      %v747 = vld [vmem:[#allocation2] sm:$0xff]
      %v748 = vld [vmem:[#allocation2 + $0x8] sm:$0xff]
      %v749 = vld [vmem:[#allocation2 + $0x10] sm:$0xff]
      %v750 = vld [vmem:[#allocation2 + $0x18] sm:$0xff]
      %v751 = vld [vmem:[#allocation2 + $0x20] sm:$0xff]
      %v752 = vld [vmem:[#allocation2 + $0x28] sm:$0xff]
      %v753 = vld [vmem:[#allocation2 + $0x30] sm:$0xff]
      %v754 = vld [vmem:[#allocation2 + $0x38] sm:$0xff]
      %v755 = vld [vmem:[#allocation2 + $0x40] sm:$0xff]
      %v756 = vld [vmem:[#allocation2 + $0x48] sm:$0xff]
      %v757 = vld [vmem:[#allocation2 + $0x50] sm:$0xff]
      %v758 = vld [vmem:[#allocation2 + $0x58] sm:$0xff]
      %v759 = vld [vmem:[#allocation2 + $0x60] sm:$0xff]
      %v760 = vld [vmem:[#allocation2 + $0x68] sm:$0xff]
      %v761 = vld [vmem:[#allocation2 + $0x70] sm:$0xff]
      %v762 = vld [vmem:[#allocation2 + $0x78] sm:$0xff]
      %v763 = vld [vmem:[#allocation2 + $0x80] sm:$0xf]
      %v764 = vld [vmem:[%s656] sm:$0x1]
      %v765 = vld [vmem:[%s659] sm:$0x1]
      %vm766 = vcmask 523264
      %v767 = vsel %vm766, %v747, 0.0
      %768 = vadd.xlane.f32.xlu0 %v767
      %v769 = vpop.xlane.xlu0 %768
      %v770 = vsel %vm766, %v748, 0.0
      %771 = vadd.xlane.f32.xlu0 %v770
      %v772 = vpop.xlane.xlu0 %771
      %v773 = vsel %vm766, %v749, 0.0
      %774 = vadd.xlane.f32.xlu0 %v773
      %v775 = vpop.xlane.xlu0 %774
      %v776 = vsel %vm766, %v750, 0.0
      %777 = vadd.xlane.f32.xlu0 %v776
      %v778 = vpop.xlane.xlu0 %777
      %v779 = vsel %vm766, %v751, 0.0
      %780 = vadd.xlane.f32.xlu0 %v779
      %v781 = vpop.xlane.xlu0 %780
      %v782 = vsel %vm766, %v752, 0.0
      %783 = vadd.xlane.f32.xlu0 %v782
      %v784 = vpop.xlane.xlu0 %783
      %v785 = vsel %vm766, %v753, 0.0
      %786 = vadd.xlane.f32.xlu0 %v785
      %v787 = vpop.xlane.xlu0 %786
      %v788 = vsel %vm766, %v754, 0.0
      %789 = vadd.xlane.f32.xlu0 %v788
      %v790 = vpop.xlane.xlu0 %789
      %v791 = vsel %vm766, %v755, 0.0
      %792 = vadd.xlane.f32.xlu0 %v791
      %v793 = vpop.xlane.xlu0 %792
      %v794 = vsel %vm766, %v756, 0.0
      %795 = vadd.xlane.f32.xlu0 %v794
      %v796 = vpop.xlane.xlu0 %795
      %v797 = vsel %vm766, %v757, 0.0
      %798 = vadd.xlane.f32.xlu0 %v797
      %v799 = vpop.xlane.xlu0 %798
      %v800 = vsel %vm766, %v758, 0.0
      %801 = vadd.xlane.f32.xlu0 %v800
      %v802 = vpop.xlane.xlu0 %801
      %v803 = vsel %vm766, %v759, 0.0
      %804 = vadd.xlane.f32.xlu0 %v803
      %v805 = vpop.xlane.xlu0 %804
      %v806 = vsel %vm766, %v760, 0.0
      %807 = vadd.xlane.f32.xlu0 %v806
      %v808 = vpop.xlane.xlu0 %807
      %v809 = vsel %vm766, %v761, 0.0
      %810 = vadd.xlane.f32.xlu0 %v809
      %v811 = vpop.xlane.xlu0 %810
      %v812 = vsel %vm766, %v762, 0.0
      %813 = vadd.xlane.f32.xlu0 %v812
      %v814 = vpop.xlane.xlu0 %813
      %vm815 = vcmask 519168
      %v816 = vsel %vm815, %v763, 0.0
      %817 = vadd.xlane.f32.xlu0 %v816
      %v818 = vpop.xlane.xlu0 %817
      %v819 = vrcp.pop 64.0
      %v820 = vmul.f32 %v769, %v819
      %v821 = vmul.f32 %v772, %v819
      %v822 = vmul.f32 %v775, %v819
      %v823 = vmul.f32 %v778, %v819
      %v824 = vmul.f32 %v781, %v819
      %v825 = vmul.f32 %v784, %v819
      %v826 = vmul.f32 %v787, %v819
      %v827 = vmul.f32 %v790, %v819
      %v828 = vmul.f32 %v793, %v819
      %v829 = vmul.f32 %v796, %v819
      %v830 = vmul.f32 %v799, %v819
      %v831 = vmul.f32 %v802, %v819
      %v832 = vmul.f32 %v805, %v819
      %v833 = vmul.f32 %v808, %v819
      %v834 = vmul.f32 %v811, %v819
      %v835 = vmul.f32 %v814, %v819
      %v836 = vmul.f32 %v818, %v819
      %v837 = vsub.f32 %v747, %v820
      %v838 = vsub.f32 %v748, %v821
      %v839 = vsub.f32 %v749, %v822
      %v840 = vsub.f32 %v750, %v823
      %v841 = vsub.f32 %v751, %v824
      %v842 = vsub.f32 %v752, %v825
      %v843 = vsub.f32 %v753, %v826
      %v844 = vsub.f32 %v754, %v827
      %v845 = vsub.f32 %v755, %v828
      %v846 = vsub.f32 %v756, %v829
      %v847 = vsub.f32 %v757, %v830
      %v848 = vsub.f32 %v758, %v831
      %v849 = vsub.f32 %v759, %v832
      %v850 = vsub.f32 %v760, %v833
      %v851 = vsub.f32 %v761, %v834
      %v852 = vsub.f32 %v762, %v835
      %v853 = vsub.f32 %v763, %v836
      %v854 = vmul.f32 %v837, %v837
      %v855 = vmul.f32 %v838, %v838
      %v856 = vmul.f32 %v839, %v839
      %v857 = vmul.f32 %v840, %v840
      %v858 = vmul.f32 %v841, %v841
      %v859 = vmul.f32 %v842, %v842
      %v860 = vmul.f32 %v843, %v843
      %v861 = vmul.f32 %v844, %v844
      %v862 = vmul.f32 %v845, %v845
      %v863 = vmul.f32 %v846, %v846
      %v864 = vmul.f32 %v847, %v847
      %v865 = vmul.f32 %v848, %v848
      %v866 = vmul.f32 %v849, %v849
      %v867 = vmul.f32 %v850, %v850
      %v868 = vmul.f32 %v851, %v851
      %v869 = vmul.f32 %v852, %v852
      %v870 = vmul.f32 %v853, %v853
      %v871 = vsel %vm766, %v854, 0.0
      %872 = vadd.xlane.f32.xlu0 %v871
      %v873 = vpop.xlane.xlu0 %872
      %v874 = vsel %vm766, %v855, 0.0
      %875 = vadd.xlane.f32.xlu0 %v874
      %v876 = vpop.xlane.xlu0 %875
      %v877 = vsel %vm766, %v856, 0.0
      %878 = vadd.xlane.f32.xlu0 %v877
      %v879 = vpop.xlane.xlu0 %878
      %v880 = vsel %vm766, %v857, 0.0
      %881 = vadd.xlane.f32.xlu0 %v880
      %v882 = vpop.xlane.xlu0 %881
      %v883 = vsel %vm766, %v858, 0.0
      %884 = vadd.xlane.f32.xlu0 %v883
      %v885 = vpop.xlane.xlu0 %884
      %v886 = vsel %vm766, %v859, 0.0
      %887 = vadd.xlane.f32.xlu0 %v886
      %v888 = vpop.xlane.xlu0 %887
      %v889 = vsel %vm766, %v860, 0.0
      %890 = vadd.xlane.f32.xlu0 %v889
      %v891 = vpop.xlane.xlu0 %890
      %v892 = vsel %vm766, %v861, 0.0
      %893 = vadd.xlane.f32.xlu0 %v892
      %v894 = vpop.xlane.xlu0 %893
      %v895 = vsel %vm766, %v862, 0.0
      %896 = vadd.xlane.f32.xlu0 %v895
      %v897 = vpop.xlane.xlu0 %896
      %v898 = vsel %vm766, %v863, 0.0
      %899 = vadd.xlane.f32.xlu0 %v898
      %v900 = vpop.xlane.xlu0 %899
      %v901 = vsel %vm766, %v864, 0.0
      %902 = vadd.xlane.f32.xlu0 %v901
      %v903 = vpop.xlane.xlu0 %902
      %v904 = vsel %vm766, %v865, 0.0
      %905 = vadd.xlane.f32.xlu0 %v904
      %v906 = vpop.xlane.xlu0 %905
      %v907 = vsel %vm766, %v866, 0.0
      %908 = vadd.xlane.f32.xlu0 %v907
      %v909 = vpop.xlane.xlu0 %908
      %v910 = vsel %vm766, %v867, 0.0
      %911 = vadd.xlane.f32.xlu0 %v910
      %v912 = vpop.xlane.xlu0 %911
      %v913 = vsel %vm766, %v868, 0.0
      %914 = vadd.xlane.f32.xlu0 %v913
      %v915 = vpop.xlane.xlu0 %914
      %v916 = vsel %vm766, %v869, 0.0
      %917 = vadd.xlane.f32.xlu0 %v916
      %v918 = vpop.xlane.xlu0 %917
      %v919 = vsel %vm815, %v870, 0.0
      %920 = vadd.xlane.f32.xlu0 %v919
      %v921 = vpop.xlane.xlu0 %920
      %v922 = vmul.f32 %v873, %v819
      %v923 = vmul.f32 %v876, %v819
      %v924 = vmul.f32 %v879, %v819
      %v925 = vmul.f32 %v882, %v819
      %v926 = vmul.f32 %v885, %v819
      %v927 = vmul.f32 %v888, %v819
      %v928 = vmul.f32 %v891, %v819
      %v929 = vmul.f32 %v894, %v819
      %v930 = vmul.f32 %v897, %v819
      %v931 = vmul.f32 %v900, %v819
      %v932 = vmul.f32 %v903, %v819
      %v933 = vmul.f32 %v906, %v819
      %v934 = vmul.f32 %v909, %v819
      %v935 = vmul.f32 %v912, %v819
      %v936 = vmul.f32 %v915, %v819
      %v937 = vmul.f32 %v918, %v819
      %v938 = vmul.f32 %v921, %v819
      %v939 = vadd.f32 %v922, 1e-05
      %v940 = vadd.f32 %v923, 1e-05
      %v941 = vadd.f32 %v924, 1e-05
      %v942 = vadd.f32 %v925, 1e-05
      %v943 = vadd.f32 %v926, 1e-05
      %v944 = vadd.f32 %v927, 1e-05
      %v945 = vadd.f32 %v928, 1e-05
      %v946 = vadd.f32 %v929, 1e-05
      %v947 = vadd.f32 %v930, 1e-05
      %v948 = vadd.f32 %v931, 1e-05
      %v949 = vadd.f32 %v932, 1e-05
      %v950 = vadd.f32 %v933, 1e-05
      %v951 = vadd.f32 %v934, 1e-05
      %v952 = vadd.f32 %v935, 1e-05
      %v953 = vadd.f32 %v936, 1e-05
      %v954 = vadd.f32 %v937, 1e-05
      %v955 = vadd.f32 %v938, 1e-05
      %v956 = vrsqrt.pop %v939
      %v957 = vrsqrt.pop %v940
      %v958 = vrsqrt.pop %v941
      %v959 = vrsqrt.pop %v942
      %v960 = vrsqrt.pop %v943
      %v961 = vrsqrt.pop %v944
      %v962 = vrsqrt.pop %v945
      %v963 = vrsqrt.pop %v946
      %v964 = vrsqrt.pop %v947
      %v965 = vrsqrt.pop %v948
      %v966 = vrsqrt.pop %v949
      %v967 = vrsqrt.pop %v950
      %v968 = vrsqrt.pop %v951
      %v969 = vrsqrt.pop %v952
      %v970 = vrsqrt.pop %v953
      %v971 = vrsqrt.pop %v954
      %v972 = vrsqrt.pop %v955
      %v973 = vmul.f32 %v837, %v956
      %v974 = vmul.f32 %v838, %v957
      %v975 = vmul.f32 %v839, %v958
      %v976 = vmul.f32 %v840, %v959
      %v977 = vmul.f32 %v841, %v960
      %v978 = vmul.f32 %v842, %v961
      %v979 = vmul.f32 %v843, %v962
      %v980 = vmul.f32 %v844, %v963
      %v981 = vmul.f32 %v845, %v964
      %v982 = vmul.f32 %v846, %v965
      %v983 = vmul.f32 %v847, %v966
      %v984 = vmul.f32 %v848, %v967
      %v985 = vmul.f32 %v849, %v968
      %v986 = vmul.f32 %v850, %v969
      %v987 = vmul.f32 %v851, %v970
      %v988 = vmul.f32 %v852, %v971
      %v989 = vmul.f32 %v853, %v972
      %v991 = vlaneseq
      %v992 = vshrl.u32 %v991, 7
      %v993 = vsub.s32 0, %v992
      %v994 = vrot.slane %v764, %v993
      %v996 = vmul.f32 %v973, %v994
      %v997 = vmul.f32 %v974, %v994
      %v998 = vmul.f32 %v975, %v994
      %v999 = vmul.f32 %v976, %v994
      %v1000 = vmul.f32 %v977, %v994
      %v1001 = vmul.f32 %v978, %v994
      %v1002 = vmul.f32 %v979, %v994
      %v1003 = vmul.f32 %v980, %v994
      %v1004 = vmul.f32 %v981, %v994
      %v1005 = vmul.f32 %v982, %v994
      %v1006 = vmul.f32 %v983, %v994
      %v1007 = vmul.f32 %v984, %v994
      %v1008 = vmul.f32 %v985, %v994
      %v1009 = vmul.f32 %v986, %v994
      %v1010 = vmul.f32 %v987, %v994
      %v1011 = vmul.f32 %v988, %v994
      %v1012 = vmul.f32 %v989, %v994
      %v1014 = vlaneseq
      %v1015 = vshrl.u32 %v1014, 7
      %v1016 = vsub.s32 0, %v1015
      %v1017 = vrot.slane %v765, %v1016
      %v1019 = vadd.f32 %v996, %v1017
      %v1020 = vadd.f32 %v997, %v1017
      %v1021 = vadd.f32 %v998, %v1017
      %v1022 = vadd.f32 %v999, %v1017
      %v1023 = vadd.f32 %v1000, %v1017
      %v1024 = vadd.f32 %v1001, %v1017
      %v1025 = vadd.f32 %v1002, %v1017
      %v1026 = vadd.f32 %v1003, %v1017
      %v1027 = vadd.f32 %v1004, %v1017
      %v1028 = vadd.f32 %v1005, %v1017
      %v1029 = vadd.f32 %v1006, %v1017
      %v1030 = vadd.f32 %v1007, %v1017
      %v1031 = vadd.f32 %v1008, %v1017
      %v1032 = vadd.f32 %v1009, %v1017
      %v1033 = vadd.f32 %v1010, %v1017
      %v1034 = vadd.f32 %v1011, %v1017
      %v1035 = vadd.f32 %v1012, %v1017
      %v1036 = vpack.c.bf16 %v1020, %v1019
      %v1037 = vpack.c.bf16 %v1022, %v1021
      %v1038 = vpack.c.bf16 %v1024, %v1023
      %v1039 = vpack.c.bf16 %v1026, %v1025
      %v1040 = vpack.c.bf16 %v1028, %v1027
      %v1041 = vpack.c.bf16 %v1030, %v1029
      %v1042 = vpack.c.bf16 %v1032, %v1031
      %v1043 = vpack.c.bf16 %v1034, %v1033
      %v1044 = vpack.c.bf16 %v1035, %v1035
      %v1045 = vld [vmem:[%s664] sm:$0xff]
      %v1046 = vld [vmem:[%s664 + $0x8] sm:$0xff]
      %v1047 = vld [vmem:[%s664 + $0x10] sm:$0xff]
      %v1048 = vld [vmem:[%s664 + $0x18] sm:$0xff]
      %v1049 = vld [vmem:[%s664 + $0x20] sm:$0xff]
      %v1050 = vld [vmem:[%s664 + $0x28] sm:$0xff]
      %v1051 = vld [vmem:[%s664 + $0x30] sm:$0xff]
      %v1052 = vld [vmem:[%s664 + $0x38] sm:$0xff]
      %v1053 = vld [vmem:[%s668] sm:$0x3]
      %v1055 = vlaneseq
      %v1056 = vshrl.u32 %v1055, 7
      %v1057 = vsub.s32 0, %v1056
      %v1058 = vrot.slane %v1053, %v1057
      %v1059 = vlaneseq
      %v1060 = vshrl.u32 %v1059, 7
      %v1061 = vsub.s32 1, %v1060
      %v1062 = vrot.slane %v1053, %v1061
      %v1073 = vunpack.c.l.b16 %v1045
      %v1074 = vunpack.c.h.b16 %v1045
      %v1075 = vunpack.c.l.b16 %v1046
      %v1076 = vunpack.c.h.b16 %v1046
      %v1077 = vunpack.c.l.b16 %v1047
      %v1078 = vunpack.c.h.b16 %v1047
      %v1079 = vunpack.c.l.b16 %v1048
      %v1080 = vunpack.c.h.b16 %v1048
      %v1081 = vunpack.c.l.b16 %v1049
      %v1082 = vunpack.c.h.b16 %v1049
      %v1083 = vunpack.c.l.b16 %v1050
      %v1084 = vunpack.c.h.b16 %v1050
      %v1085 = vunpack.c.l.b16 %v1051
      %v1086 = vunpack.c.h.b16 %v1051
      %v1087 = vunpack.c.l.b16 %v1052
      %v1088 = vunpack.c.h.b16 %v1052
      %v1089 = vpack.c.b16 %v1075, %v1073
      %v1090 = vpack.c.b16 %v1076, %v1074
      %v1091 = vpack.c.b16 %v1079, %v1077
      %v1092 = vpack.c.b16 %v1080, %v1078
      %v1093 = vpack.c.b16 %v1083, %v1081
      %v1094 = vpack.c.b16 %v1084, %v1082
      %v1095 = vpack.c.b16 %v1087, %v1085
      %v1096 = vpack.c.b16 %v1088, %v1086
      %v1106 = vsel %vm766, %v1036, 0
      %v1109 = vsel %vm766, %v1037, 0
      %v1112 = vsel %vm766, %v1038, 0
      %v1115 = vsel %vm766, %v1039, 0
      %v1118 = vsel %vm766, %v1040, 0
      %v1121 = vsel %vm766, %v1041, 0
      %v1124 = vsel %vm766, %v1042, 0
      %v1127 = vsel %vm766, %v1043, 0
      %v1130 = vsel %vm766, %v1044, 0
      %1132 = vmatprep.subr.bf16.mxu0 0
      %1133 = vmatpush1.bf16.msra.mxu0 0
      %1134 = vmatprep.subr.bf16.mxu0 0
      %1135 = vmatpush1.bf16.msra.mxu0 0
      %1136 = vmatprep.subr.bf16.mxu0 0
      %1137 = vmatpush1.bf16.msra.mxu0 0
      %1138 = vmatprep.subr.bf16.mxu0 0
      %1139 = vmatpush1.bf16.msra.mxu0 0
      %1140 = vmatprep.subr.bf16.mxu0 %v1096
      %1141 = vmatpush1.bf16.msra.mxu0 %v1095
      %1142 = vmatprep.subr.bf16.mxu0 %v1094
      %1143 = vmatpush1.bf16.msra.mxu0 %v1093
      %1144 = vmatprep.subr.bf16.mxu0 %v1092
      %1145 = vmatpush1.bf16.msra.mxu0 %v1091
      %1146 = vmatprep.subr.bf16.mxu0 %v1090
      %1147 = vmatpush1.bf16.msra.mxu0 %v1089
      %1148 = vmatprep.subr.bf16.mxu0 0
      %1149 = vmatpush2.bf16.msra.mxu0 0
      %1150 = vmatprep.subr.bf16.mxu0 0
      %1151 = vmatpush2.bf16.msra.mxu0 0
      %1152 = vmatprep.subr.bf16.mxu0 0
      %1153 = vmatpush2.bf16.msra.mxu0 0
      %1154 = vmatprep.subr.bf16.mxu0 0
      %1155 = vmatpush2.bf16.msra.mxu0 0
      %1156 = vmatprep.subr.bf16.mxu0 0
      %1157 = vmatpush2.bf16.msra.mxu0 0
      %1158 = vmatprep.subr.bf16.mxu0 0
      %1159 = vmatpush2.bf16.msra.mxu0 0
      %1160 = vmatprep.subr.bf16.mxu0 0
      %1161 = vmatpush2.bf16.msra.mxu0 0
      %1162 = vmatprep.subr.bf16.mxu0 0
      %1163 = vmatpush2.bf16.msra.mxu0 0
      %1164 = vmatprep.mubr.bf16.mxu0 0
      %1165 = vmatmul.mubr.bf16.gmra.mxu0 %v1106
      %v1166 = vpop.f32.mrf.mxu0
      %v1167 = vadd.f32 %v1058, %v1166
      %v1168 = vpop.f32.mrf.mxu0
      %v1169 = vadd.f32 %v1062, %v1168
      %v1170 = vpop.f32.mrf.mxu0
      %v1171 = vadd.f32 %v1058, %v1170
      %v1172 = vpop.f32.mrf.mxu0
      %v1173 = vadd.f32 %v1062, %v1172
      %1174 = vmatprep.mubr.bf16.mxu0 0
      %1175 = vmatmul.mubr.bf16.gmra.mxu0 %v1109
      %v1176 = vpop.f32.mrf.mxu0
      %v1177 = vadd.f32 %v1058, %v1176
      %v1178 = vpop.f32.mrf.mxu0
      %v1179 = vadd.f32 %v1062, %v1178
      %v1180 = vpop.f32.mrf.mxu0
      %v1181 = vadd.f32 %v1058, %v1180
      %v1182 = vpop.f32.mrf.mxu0
      %v1183 = vadd.f32 %v1062, %v1182
      %1184 = vmatprep.mubr.bf16.mxu0 0
      %1185 = vmatmul.mubr.bf16.gmra.mxu0 %v1112
      %v1186 = vpop.f32.mrf.mxu0
      %v1187 = vadd.f32 %v1058, %v1186
      %v1188 = vpop.f32.mrf.mxu0
      %v1189 = vadd.f32 %v1062, %v1188
      %v1190 = vpop.f32.mrf.mxu0
      %v1191 = vadd.f32 %v1058, %v1190
      %v1192 = vpop.f32.mrf.mxu0
      %v1193 = vadd.f32 %v1062, %v1192
      %1194 = vmatprep.mubr.bf16.mxu0 0
      %1195 = vmatmul.mubr.bf16.gmra.mxu0 %v1115
      %v1196 = vpop.f32.mrf.mxu0
      %v1197 = vadd.f32 %v1058, %v1196
      %v1198 = vpop.f32.mrf.mxu0
      %v1199 = vadd.f32 %v1062, %v1198
      %v1200 = vpop.f32.mrf.mxu0
      %v1201 = vadd.f32 %v1058, %v1200
      %v1202 = vpop.f32.mrf.mxu0
      %v1203 = vadd.f32 %v1062, %v1202
      %1204 = vmatprep.mubr.bf16.mxu0 0
      %1205 = vmatmul.mubr.bf16.gmra.mxu0 %v1118
      %v1206 = vpop.f32.mrf.mxu0
      %v1207 = vadd.f32 %v1058, %v1206
      %v1208 = vpop.f32.mrf.mxu0
      %v1209 = vadd.f32 %v1062, %v1208
      %v1210 = vpop.f32.mrf.mxu0
      %v1211 = vadd.f32 %v1058, %v1210
      %v1212 = vpop.f32.mrf.mxu0
      %v1213 = vadd.f32 %v1062, %v1212
      %1214 = vmatprep.mubr.bf16.mxu0 0
      %1215 = vmatmul.mubr.bf16.gmra.mxu0 %v1121
      %v1216 = vpop.f32.mrf.mxu0
      %v1217 = vadd.f32 %v1058, %v1216
      %v1218 = vpop.f32.mrf.mxu0
      %v1219 = vadd.f32 %v1062, %v1218
      %v1220 = vpop.f32.mrf.mxu0
      %v1221 = vadd.f32 %v1058, %v1220
      %v1222 = vpop.f32.mrf.mxu0
      %v1223 = vadd.f32 %v1062, %v1222
      %1224 = vmatprep.mubr.bf16.mxu0 0
      %1225 = vmatmul.mubr.bf16.gmra.mxu0 %v1124
      %v1226 = vpop.f32.mrf.mxu0
      %v1227 = vadd.f32 %v1058, %v1226
      %v1228 = vpop.f32.mrf.mxu0
      %v1229 = vadd.f32 %v1062, %v1228
      %v1230 = vpop.f32.mrf.mxu0
      %v1231 = vadd.f32 %v1058, %v1230
      %v1232 = vpop.f32.mrf.mxu0
      %v1233 = vadd.f32 %v1062, %v1232
      %1234 = vmatprep.mubr.bf16.mxu0 0
      %1235 = vmatmul.mubr.bf16.gmra.mxu0 %v1127
      %v1236 = vpop.f32.mrf.mxu0
      %v1237 = vadd.f32 %v1058, %v1236
      %v1238 = vpop.f32.mrf.mxu0
      %v1239 = vadd.f32 %v1062, %v1238
      %v1240 = vpop.f32.mrf.mxu0
      %v1241 = vadd.f32 %v1058, %v1240
      %v1242 = vpop.f32.mrf.mxu0
      %v1243 = vadd.f32 %v1062, %v1242
      %1244 = vmatprep.mubr.bf16.mxu0 0
      %1245 = vmatmul.mubr.bf16.gmra.mxu0 %v1130
      %v1246 = vpop.f32.mrf.mxu0
      %v1247 = vadd.f32 %v1058, %v1246
      %v1248 = vpop.f32.mrf.mxu0
      %v1249 = vadd.f32 %v1062, %v1248
      %v1250 = vpop.f32.mrf.mxu0
      %v1251 = vpop.f32.mrf.mxu0
      %1252 = vdwg.mxu0
      %v1253 = vpack.c.bf16 %v1171, %v1167
      %v1254 = vpack.c.bf16 %v1173, %v1169
      %v1255 = vpack.c.bf16 %v1181, %v1177
      %v1256 = vpack.c.bf16 %v1183, %v1179
      %v1257 = vpack.c.bf16 %v1191, %v1187
      %v1258 = vpack.c.bf16 %v1193, %v1189
      %v1259 = vpack.c.bf16 %v1201, %v1197
      %v1260 = vpack.c.bf16 %v1203, %v1199
      %v1261 = vpack.c.bf16 %v1211, %v1207
      %v1262 = vpack.c.bf16 %v1213, %v1209
      %v1263 = vpack.c.bf16 %v1221, %v1217
      %v1264 = vpack.c.bf16 %v1223, %v1219
      %v1265 = vpack.c.bf16 %v1231, %v1227
      %v1266 = vpack.c.bf16 %v1233, %v1229
      %v1267 = vpack.c.bf16 %v1241, %v1237
      %v1268 = vpack.c.bf16 %v1243, %v1239
      %v1269 = vpack.c.bf16 %v1247, %v1247
      %v1270 = vpack.c.bf16 %v1249, %v1249
      %v1271 = vmul.bf16 %v1253, 1048592000
      %v1272 = vmul.bf16 %v1255, 1048592000
      %v1273 = vmul.bf16 %v1257, 1048592000
      %v1274 = vmul.bf16 %v1259, 1048592000
      %v1275 = vmul.bf16 %v1261, 1048592000
      %v1276 = vmul.bf16 %v1263, 1048592000
      %v1277 = vmul.bf16 %v1265, 1048592000
      %v1278 = vmul.bf16 %v1267, 1048592000
      %v1279 = vmul.bf16 %v1269, 1048592000
      %1289 = vrot.lane.b32.xlu0 %v1253, 64
      %v1290 = vpop.permute.xlu0 %1289
      %1291 = vrot.lane.b32.xlu0 %v1255, 64
      %v1292 = vpop.permute.xlu0 %1291
      %1293 = vrot.lane.b32.xlu0 %v1257, 64
      %v1294 = vpop.permute.xlu0 %1293
      %1295 = vrot.lane.b32.xlu0 %v1259, 64
      %v1296 = vpop.permute.xlu0 %1295
      %1297 = vrot.lane.b32.xlu0 %v1261, 64
      %v1298 = vpop.permute.xlu0 %1297
      %1299 = vrot.lane.b32.xlu0 %v1263, 64
      %v1300 = vpop.permute.xlu0 %1299
      %1301 = vrot.lane.b32.xlu0 %v1265, 64
      %v1302 = vpop.permute.xlu0 %1301
      %1303 = vrot.lane.b32.xlu0 %v1267, 64
      %v1304 = vpop.permute.xlu0 %1303
      %1305 = vrot.lane.b32.xlu0 %v1269, 64
      %v1306 = vpop.permute.xlu0 %1305
      %vm1307 = vcmask 130048
      %v1309 = vsel %vm1307, %v1271, 0
      %v1312 = vsel %vm1307, %v1272, 0
      %v1315 = vsel %vm1307, %v1273, 0
      %v1318 = vsel %vm1307, %v1274, 0
      %v1321 = vsel %vm1307, %v1275, 0
      %v1324 = vsel %vm1307, %v1276, 0
      %v1327 = vsel %vm1307, %v1277, 0
      %v1330 = vsel %vm1307, %v1278, 0
      %v1333 = vsel %vm1307, %v1279, 0
      %v1336 = vsel %vm1307, %v1290, 0
      %v1339 = vsel %vm1307, %v1292, 0
      %v1342 = vsel %vm1307, %v1294, 0
      %v1345 = vsel %vm1307, %v1296, 0
      %v1348 = vsel %vm1307, %v1298, 0
      %v1351 = vsel %vm1307, %v1300, 0
      %v1354 = vsel %vm1307, %v1302, 0
      %v1357 = vsel %vm1307, %v1304, 0
      %v1360 = vsel %vm1307, %v1306, 0
      %1362 = vmatprep.subr.bf16.mxu0 0
      %1363 = vmatpush1.bf16.xpose.msra.mxu0 %v1357
      %1364 = vmatprep.subr.bf16.mxu0 0
      %1365 = vmatpush1.bf16.xpose.msra.mxu0 %v1354
      %1366 = vmatprep.subr.bf16.mxu0 0
      %1367 = vmatpush1.bf16.xpose.msra.mxu0 %v1351
      %1368 = vmatprep.subr.bf16.mxu0 0
      %1369 = vmatpush1.bf16.xpose.msra.mxu0 %v1348
      %1370 = vmatprep.subr.bf16.mxu0 0
      %1371 = vmatpush1.bf16.xpose.msra.mxu0 %v1345
      %1372 = vmatprep.subr.bf16.mxu0 0
      %1373 = vmatpush1.bf16.xpose.msra.mxu0 %v1342
      %1374 = vmatprep.subr.bf16.mxu0 0
      %1375 = vmatpush1.bf16.xpose.msra.mxu0 %v1339
      %1376 = vmatprep.subr.bf16.mxu0 0
      %1377 = vmatpush1.bf16.xpose.msra.mxu0 %v1336
      %1378 = vmatprep.subr.bf16.mxu0 0
      %1379 = vmatpush2.bf16.xpose.msra.mxu0 0
      %1380 = vmatprep.subr.bf16.mxu0 0
      %1381 = vmatpush2.bf16.xpose.msra.mxu0 0
      %1382 = vmatprep.subr.bf16.mxu0 0
      %1383 = vmatpush2.bf16.xpose.msra.mxu0 0
      %1384 = vmatprep.subr.bf16.mxu0 0
      %1385 = vmatpush2.bf16.xpose.msra.mxu0 0
      %1386 = vmatprep.subr.bf16.mxu0 0
      %1387 = vmatpush2.bf16.xpose.msra.mxu0 0
      %1388 = vmatprep.subr.bf16.mxu0 0
      %1389 = vmatpush2.bf16.xpose.msra.mxu0 0
      %1390 = vmatprep.subr.bf16.mxu0 0
      %1391 = vmatpush2.bf16.xpose.msra.mxu0 0
      %1392 = vmatprep.subr.bf16.mxu0 0
      %1393 = vmatpush2.bf16.xpose.msra.mxu0 %v1360
      %1394 = vmatprep.mubr.bf16.mxu0 0
      %1395 = vmatmul.mubr.bf16.gmra.mxu0 %v1309
      %v1396 = vpop.f32.mrf.mxu0
      %v1397 = vadd.f32 0.0, %v1396
      %v1398 = vpop.f32.mrf.mxu0
      %v1399 = vadd.f32 0.0, %v1398
      %v1400 = vpop.f32.mrf.mxu0
      %v1401 = vadd.f32 0.0, %v1400
      %v1402 = vpop.f32.mrf.mxu0
      %v1403 = vadd.f32 0.0, %v1402
      %1404 = vmatprep.mubr.bf16.mxu0 0
      %1405 = vmatmul.mubr.bf16.gmra.mxu0 %v1312
      %v1406 = vpop.f32.mrf.mxu0
      %v1407 = vadd.f32 0.0, %v1406
      %v1408 = vpop.f32.mrf.mxu0
      %v1409 = vadd.f32 0.0, %v1408
      %v1410 = vpop.f32.mrf.mxu0
      %v1411 = vadd.f32 0.0, %v1410
      %v1412 = vpop.f32.mrf.mxu0
      %v1413 = vadd.f32 0.0, %v1412
      %1414 = vmatprep.mubr.bf16.mxu0 0
      %1415 = vmatmul.mubr.bf16.gmra.mxu0 %v1315
      %v1416 = vpop.f32.mrf.mxu0
      %v1417 = vadd.f32 0.0, %v1416
      %v1418 = vpop.f32.mrf.mxu0
      %v1419 = vadd.f32 0.0, %v1418
      %v1420 = vpop.f32.mrf.mxu0
      %v1421 = vadd.f32 0.0, %v1420
      %v1422 = vpop.f32.mrf.mxu0
      %v1423 = vadd.f32 0.0, %v1422
      %1424 = vmatprep.mubr.bf16.mxu0 0
      %1425 = vmatmul.mubr.bf16.gmra.mxu0 %v1318
      %v1426 = vpop.f32.mrf.mxu0
      %v1427 = vadd.f32 0.0, %v1426
      %v1428 = vpop.f32.mrf.mxu0
      %v1429 = vadd.f32 0.0, %v1428
      %v1430 = vpop.f32.mrf.mxu0
      %v1431 = vadd.f32 0.0, %v1430
      %v1432 = vpop.f32.mrf.mxu0
      %v1433 = vadd.f32 0.0, %v1432
      %1434 = vmatprep.mubr.bf16.mxu0 0
      %1435 = vmatmul.mubr.bf16.gmra.mxu0 %v1321
      %v1436 = vpop.f32.mrf.mxu0
      %v1437 = vadd.f32 0.0, %v1436
      %v1438 = vpop.f32.mrf.mxu0
      %v1439 = vadd.f32 0.0, %v1438
      %v1440 = vpop.f32.mrf.mxu0
      %v1441 = vadd.f32 0.0, %v1440
      %v1442 = vpop.f32.mrf.mxu0
      %v1443 = vadd.f32 0.0, %v1442
      %1444 = vmatprep.mubr.bf16.mxu0 0
      %1445 = vmatmul.mubr.bf16.gmra.mxu0 %v1324
      %v1446 = vpop.f32.mrf.mxu0
      %v1447 = vadd.f32 0.0, %v1446
      %v1448 = vpop.f32.mrf.mxu0
      %v1449 = vadd.f32 0.0, %v1448
      %v1450 = vpop.f32.mrf.mxu0
      %v1451 = vadd.f32 0.0, %v1450
      %v1452 = vpop.f32.mrf.mxu0
      %v1453 = vadd.f32 0.0, %v1452
      %1454 = vmatprep.mubr.bf16.mxu0 0
      %1455 = vmatmul.mubr.bf16.gmra.mxu0 %v1327
      %v1456 = vpop.f32.mrf.mxu0
      %v1457 = vadd.f32 0.0, %v1456
      %v1458 = vpop.f32.mrf.mxu0
      %v1459 = vadd.f32 0.0, %v1458
      %v1460 = vpop.f32.mrf.mxu0
      %v1461 = vadd.f32 0.0, %v1460
      %v1462 = vpop.f32.mrf.mxu0
      %v1463 = vadd.f32 0.0, %v1462
      %1464 = vmatprep.mubr.bf16.mxu0 0
      %1465 = vmatmul.mubr.bf16.gmra.mxu0 %v1330
      %v1466 = vpop.f32.mrf.mxu0
      %v1467 = vadd.f32 0.0, %v1466
      %v1468 = vpop.f32.mrf.mxu0
      %v1469 = vadd.f32 0.0, %v1468
      %v1470 = vpop.f32.mrf.mxu0
      %v1471 = vadd.f32 0.0, %v1470
      %v1472 = vpop.f32.mrf.mxu0
      %v1473 = vadd.f32 0.0, %v1472
      %1474 = vmatprep.mubr.bf16.mxu0 0
      %1475 = vmatmul.mubr.bf16.gmra.mxu0 %v1333
      %v1476 = vpop.f32.mrf.mxu0
      %v1477 = vadd.f32 0.0, %v1476
      %v1478 = vpop.f32.mrf.mxu0
      %v1479 = vadd.f32 0.0, %v1478
      %v1480 = vpop.f32.mrf.mxu0
      %v1481 = vpop.f32.mrf.mxu0
      %1482 = vdwg.mxu0
      %vm1483 = vcmask 31744
      %v1484 = vsel %vm1483, %v1399, -inf
      %v1485 = vmax.f32 %v1397, %v1484
      %1486 = vmax.xlane.f32.xlu0 %v1485
      %v1487 = vpop.xlane.xlu0 %1486
      %v1488 = vsel %vm1483, %v1403, -inf
      %v1489 = vmax.f32 %v1401, %v1488
      %1490 = vmax.xlane.f32.xlu0 %v1489
      %v1491 = vpop.xlane.xlu0 %1490
      %v1492 = vsel %vm1483, %v1409, -inf
      %v1493 = vmax.f32 %v1407, %v1492
      %1494 = vmax.xlane.f32.xlu0 %v1493
      %v1495 = vpop.xlane.xlu0 %1494
      %v1496 = vsel %vm1483, %v1413, -inf
      %v1497 = vmax.f32 %v1411, %v1496
      %1498 = vmax.xlane.f32.xlu0 %v1497
      %v1499 = vpop.xlane.xlu0 %1498
      %v1500 = vsel %vm1483, %v1419, -inf
      %v1501 = vmax.f32 %v1417, %v1500
      %1502 = vmax.xlane.f32.xlu0 %v1501
      %v1503 = vpop.xlane.xlu0 %1502
      %v1504 = vsel %vm1483, %v1423, -inf
      %v1505 = vmax.f32 %v1421, %v1504
      %1506 = vmax.xlane.f32.xlu0 %v1505
      %v1507 = vpop.xlane.xlu0 %1506
      %v1508 = vsel %vm1483, %v1429, -inf
      %v1509 = vmax.f32 %v1427, %v1508
      %1510 = vmax.xlane.f32.xlu0 %v1509
      %v1511 = vpop.xlane.xlu0 %1510
      %v1512 = vsel %vm1483, %v1433, -inf
      %v1513 = vmax.f32 %v1431, %v1512
      %1514 = vmax.xlane.f32.xlu0 %v1513
      %v1515 = vpop.xlane.xlu0 %1514
      %v1516 = vsel %vm1483, %v1439, -inf
      %v1517 = vmax.f32 %v1437, %v1516
      %1518 = vmax.xlane.f32.xlu0 %v1517
      %v1519 = vpop.xlane.xlu0 %1518
      %v1520 = vsel %vm1483, %v1443, -inf
      %v1521 = vmax.f32 %v1441, %v1520
      %1522 = vmax.xlane.f32.xlu0 %v1521
      %v1523 = vpop.xlane.xlu0 %1522
      %v1524 = vsel %vm1483, %v1449, -inf
      %v1525 = vmax.f32 %v1447, %v1524
      %1526 = vmax.xlane.f32.xlu0 %v1525
      %v1527 = vpop.xlane.xlu0 %1526
      %v1528 = vsel %vm1483, %v1453, -inf
      %v1529 = vmax.f32 %v1451, %v1528
      %1530 = vmax.xlane.f32.xlu0 %v1529
      %v1531 = vpop.xlane.xlu0 %1530
      %v1532 = vsel %vm1483, %v1459, -inf
      %v1533 = vmax.f32 %v1457, %v1532
      %1534 = vmax.xlane.f32.xlu0 %v1533
      %v1535 = vpop.xlane.xlu0 %1534
      %v1536 = vsel %vm1483, %v1463, -inf
      %v1537 = vmax.f32 %v1461, %v1536
      %1538 = vmax.xlane.f32.xlu0 %v1537
      %v1539 = vpop.xlane.xlu0 %1538
      %v1540 = vsel %vm1483, %v1469, -inf
      %v1541 = vmax.f32 %v1467, %v1540
      %1542 = vmax.xlane.f32.xlu0 %v1541
      %v1543 = vpop.xlane.xlu0 %1542
      %v1544 = vsel %vm1483, %v1473, -inf
      %v1545 = vmax.f32 %v1471, %v1544
      %1546 = vmax.xlane.f32.xlu0 %v1545
      %v1547 = vpop.xlane.xlu0 %1546
      %vm1548 = vcmask 1043456
      %v1549 = vsel %vm1548, %v1477, -inf
      %vm1550 = vcmask 27648
      %v1551 = vsel %vm1550, %v1479, -inf
      %v1552 = vmax.f32 %v1549, %v1551
      %1553 = vmax.xlane.f32.xlu0 %v1552
      %v1554 = vpop.xlane.xlu0 %1553
      %v1555 = vsub.f32 %v1397, %v1487
      %v1556 = vsub.f32 %v1399, %v1487
      %v1557 = vsub.f32 %v1401, %v1491
      %v1558 = vsub.f32 %v1403, %v1491
      %v1559 = vsub.f32 %v1407, %v1495
      %v1560 = vsub.f32 %v1409, %v1495
      %v1561 = vsub.f32 %v1411, %v1499
      %v1562 = vsub.f32 %v1413, %v1499
      %v1563 = vsub.f32 %v1417, %v1503
      %v1564 = vsub.f32 %v1419, %v1503
      %v1565 = vsub.f32 %v1421, %v1507
      %v1566 = vsub.f32 %v1423, %v1507
      %v1567 = vsub.f32 %v1427, %v1511
      %v1568 = vsub.f32 %v1429, %v1511
      %v1569 = vsub.f32 %v1431, %v1515
      %v1570 = vsub.f32 %v1433, %v1515
      %v1571 = vsub.f32 %v1437, %v1519
      %v1572 = vsub.f32 %v1439, %v1519
      %v1573 = vsub.f32 %v1441, %v1523
      %v1574 = vsub.f32 %v1443, %v1523
      %v1575 = vsub.f32 %v1447, %v1527
      %v1576 = vsub.f32 %v1449, %v1527
      %v1577 = vsub.f32 %v1451, %v1531
      %v1578 = vsub.f32 %v1453, %v1531
      %v1579 = vsub.f32 %v1457, %v1535
      %v1580 = vsub.f32 %v1459, %v1535
      %v1581 = vsub.f32 %v1461, %v1539
      %v1582 = vsub.f32 %v1463, %v1539
      %v1583 = vsub.f32 %v1467, %v1543
      %v1584 = vsub.f32 %v1469, %v1543
      %v1585 = vsub.f32 %v1471, %v1547
      %v1586 = vsub.f32 %v1473, %v1547
      %v1587 = vsub.f32 %v1477, %v1554
      %v1588 = vsub.f32 %v1479, %v1554
      %v1589 = vmul.f32 %v1555, 1.442695
      %v1590 = vpow.pop %v1589
      %v1591 = vmul.f32 %v1556, 1.442695
      %v1592 = vpow.pop %v1591
      %v1593 = vmul.f32 %v1557, 1.442695
      %v1594 = vpow.pop %v1593
      %v1595 = vmul.f32 %v1558, 1.442695
      %v1596 = vpow.pop %v1595
      %v1597 = vmul.f32 %v1559, 1.442695
      %v1598 = vpow.pop %v1597
      %v1599 = vmul.f32 %v1560, 1.442695
      %v1600 = vpow.pop %v1599
      %v1601 = vmul.f32 %v1561, 1.442695
      %v1602 = vpow.pop %v1601
      %v1603 = vmul.f32 %v1562, 1.442695
      %v1604 = vpow.pop %v1603
      %v1605 = vmul.f32 %v1563, 1.442695
      %v1606 = vpow.pop %v1605
      %v1607 = vmul.f32 %v1564, 1.442695
      %v1608 = vpow.pop %v1607
      %v1609 = vmul.f32 %v1565, 1.442695
      %v1610 = vpow.pop %v1609
      %v1611 = vmul.f32 %v1566, 1.442695
      %v1612 = vpow.pop %v1611
      %v1613 = vmul.f32 %v1567, 1.442695
      %v1614 = vpow.pop %v1613
      %v1615 = vmul.f32 %v1568, 1.442695
      %v1616 = vpow.pop %v1615
      %v1617 = vmul.f32 %v1569, 1.442695
      %v1618 = vpow.pop %v1617
      %v1619 = vmul.f32 %v1570, 1.442695
      %v1620 = vpow.pop %v1619
      %v1621 = vmul.f32 %v1571, 1.442695
      %v1622 = vpow.pop %v1621
      %v1623 = vmul.f32 %v1572, 1.442695
      %v1624 = vpow.pop %v1623
      %v1625 = vmul.f32 %v1573, 1.442695
      %v1626 = vpow.pop %v1625
      %v1627 = vmul.f32 %v1574, 1.442695
      %v1628 = vpow.pop %v1627
      %v1629 = vmul.f32 %v1575, 1.442695
      %v1630 = vpow.pop %v1629
      %v1631 = vmul.f32 %v1576, 1.442695
      %v1632 = vpow.pop %v1631
      %v1633 = vmul.f32 %v1577, 1.442695
      %v1634 = vpow.pop %v1633
      %v1635 = vmul.f32 %v1578, 1.442695
      %v1636 = vpow.pop %v1635
      %v1637 = vmul.f32 %v1579, 1.442695
      %v1638 = vpow.pop %v1637
      %v1639 = vmul.f32 %v1580, 1.442695
      %v1640 = vpow.pop %v1639
      %v1641 = vmul.f32 %v1581, 1.442695
      %v1642 = vpow.pop %v1641
      %v1643 = vmul.f32 %v1582, 1.442695
      %v1644 = vpow.pop %v1643
      %v1645 = vmul.f32 %v1583, 1.442695
      %v1646 = vpow.pop %v1645
      %v1647 = vmul.f32 %v1584, 1.442695
      %v1648 = vpow.pop %v1647
      %v1649 = vmul.f32 %v1585, 1.442695
      %v1650 = vpow.pop %v1649
      %v1651 = vmul.f32 %v1586, 1.442695
      %v1652 = vpow.pop %v1651
      %v1653 = vmul.f32 %v1587, 1.442695
      %v1654 = vpow.pop %v1653
      %v1655 = vmul.f32 %v1588, 1.442695
      %v1656 = vpow.pop %v1655
      %v1657 = vsel %vm1483, %v1592, 0.0
      %v1658 = vadd.f32 %v1590, %v1657
      %1659 = vadd.xlane.f32.xlu0 %v1658
      %v1660 = vpop.xlane.xlu0 %1659
      %v1661 = vsel %vm1483, %v1596, 0.0
      %v1662 = vadd.f32 %v1594, %v1661
      %1663 = vadd.xlane.f32.xlu0 %v1662
      %v1664 = vpop.xlane.xlu0 %1663
      %v1665 = vsel %vm1483, %v1600, 0.0
      %v1666 = vadd.f32 %v1598, %v1665
      %1667 = vadd.xlane.f32.xlu0 %v1666
      %v1668 = vpop.xlane.xlu0 %1667
      %v1669 = vsel %vm1483, %v1604, 0.0
      %v1670 = vadd.f32 %v1602, %v1669
      %1671 = vadd.xlane.f32.xlu0 %v1670
      %v1672 = vpop.xlane.xlu0 %1671
      %v1673 = vsel %vm1483, %v1608, 0.0
      %v1674 = vadd.f32 %v1606, %v1673
      %1675 = vadd.xlane.f32.xlu0 %v1674
      %v1676 = vpop.xlane.xlu0 %1675
      %v1677 = vsel %vm1483, %v1612, 0.0
      %v1678 = vadd.f32 %v1610, %v1677
      %1679 = vadd.xlane.f32.xlu0 %v1678
      %v1680 = vpop.xlane.xlu0 %1679
      %v1681 = vsel %vm1483, %v1616, 0.0
      %v1682 = vadd.f32 %v1614, %v1681
      %1683 = vadd.xlane.f32.xlu0 %v1682
      %v1684 = vpop.xlane.xlu0 %1683
      %v1685 = vsel %vm1483, %v1620, 0.0
      %v1686 = vadd.f32 %v1618, %v1685
      %1687 = vadd.xlane.f32.xlu0 %v1686
      %v1688 = vpop.xlane.xlu0 %1687
      %v1689 = vsel %vm1483, %v1624, 0.0
      %v1690 = vadd.f32 %v1622, %v1689
      %1691 = vadd.xlane.f32.xlu0 %v1690
      %v1692 = vpop.xlane.xlu0 %1691
      %v1693 = vsel %vm1483, %v1628, 0.0
      %v1694 = vadd.f32 %v1626, %v1693
      %1695 = vadd.xlane.f32.xlu0 %v1694
      %v1696 = vpop.xlane.xlu0 %1695
      %v1697 = vsel %vm1483, %v1632, 0.0
      %v1698 = vadd.f32 %v1630, %v1697
      %1699 = vadd.xlane.f32.xlu0 %v1698
      %v1700 = vpop.xlane.xlu0 %1699
      %v1701 = vsel %vm1483, %v1636, 0.0
      %v1702 = vadd.f32 %v1634, %v1701
      %1703 = vadd.xlane.f32.xlu0 %v1702
      %v1704 = vpop.xlane.xlu0 %1703
      %v1705 = vsel %vm1483, %v1640, 0.0
      %v1706 = vadd.f32 %v1638, %v1705
      %1707 = vadd.xlane.f32.xlu0 %v1706
      %v1708 = vpop.xlane.xlu0 %1707
      %v1709 = vsel %vm1483, %v1644, 0.0
      %v1710 = vadd.f32 %v1642, %v1709
      %1711 = vadd.xlane.f32.xlu0 %v1710
      %v1712 = vpop.xlane.xlu0 %1711
      %v1713 = vsel %vm1483, %v1648, 0.0
      %v1714 = vadd.f32 %v1646, %v1713
      %1715 = vadd.xlane.f32.xlu0 %v1714
      %v1716 = vpop.xlane.xlu0 %1715
      %v1717 = vsel %vm1483, %v1652, 0.0
      %v1718 = vadd.f32 %v1650, %v1717
      %1719 = vadd.xlane.f32.xlu0 %v1718
      %v1720 = vpop.xlane.xlu0 %1719
      %v1721 = vsel %vm1548, %v1654, 0.0
      %v1722 = vsel %vm1550, %v1656, 0.0
      %v1723 = vadd.f32 %v1721, %v1722
      %1724 = vadd.xlane.f32.xlu0 %v1723
      %v1725 = vpop.xlane.xlu0 %1724
      %v1726 = vrcp.pop %v1660
      %v1727 = vrcp.pop %v1664
      %v1728 = vrcp.pop %v1668
      %v1729 = vrcp.pop %v1672
      %v1730 = vrcp.pop %v1676
      %v1731 = vrcp.pop %v1680
      %v1732 = vrcp.pop %v1684
      %v1733 = vrcp.pop %v1688
      %v1734 = vrcp.pop %v1692
      %v1735 = vrcp.pop %v1696
      %v1736 = vrcp.pop %v1700
      %v1737 = vrcp.pop %v1704
      %v1738 = vrcp.pop %v1708
      %v1739 = vrcp.pop %v1712
      %v1740 = vrcp.pop %v1716
      %v1741 = vrcp.pop %v1720
      %v1742 = vrcp.pop %v1725
      %v1743 = vmul.f32 %v1590, %v1726
      %v1744 = vmul.f32 %v1592, %v1726
      %v1745 = vmul.f32 %v1594, %v1727
      %v1746 = vmul.f32 %v1596, %v1727
      %v1747 = vmul.f32 %v1598, %v1728
      %v1748 = vmul.f32 %v1600, %v1728
      %v1749 = vmul.f32 %v1602, %v1729
      %v1750 = vmul.f32 %v1604, %v1729
      %v1751 = vmul.f32 %v1606, %v1730
      %v1752 = vmul.f32 %v1608, %v1730
      %v1753 = vmul.f32 %v1610, %v1731
      %v1754 = vmul.f32 %v1612, %v1731
      %v1755 = vmul.f32 %v1614, %v1732
      %v1756 = vmul.f32 %v1616, %v1732
      %v1757 = vmul.f32 %v1618, %v1733
      %v1758 = vmul.f32 %v1620, %v1733
      %v1759 = vmul.f32 %v1622, %v1734
      %v1760 = vmul.f32 %v1624, %v1734
      %v1761 = vmul.f32 %v1626, %v1735
      %v1762 = vmul.f32 %v1628, %v1735
      %v1763 = vmul.f32 %v1630, %v1736
      %v1764 = vmul.f32 %v1632, %v1736
      %v1765 = vmul.f32 %v1634, %v1737
      %v1766 = vmul.f32 %v1636, %v1737
      %v1767 = vmul.f32 %v1638, %v1738
      %v1768 = vmul.f32 %v1640, %v1738
      %v1769 = vmul.f32 %v1642, %v1739
      %v1770 = vmul.f32 %v1644, %v1739
      %v1771 = vmul.f32 %v1646, %v1740
      %v1772 = vmul.f32 %v1648, %v1740
      %v1773 = vmul.f32 %v1650, %v1741
      %v1774 = vmul.f32 %v1652, %v1741
      %v1775 = vmul.f32 %v1654, %v1742
      %v1776 = vmul.f32 %v1656, %v1742
      %v1777 = vpack.c.bf16 %v1745, %v1743
      %v1778 = vpack.c.bf16 %v1746, %v1744
      %v1779 = vpack.c.bf16 %v1749, %v1747
      %v1780 = vpack.c.bf16 %v1750, %v1748
      %v1781 = vpack.c.bf16 %v1753, %v1751
      %v1782 = vpack.c.bf16 %v1754, %v1752
      %v1783 = vpack.c.bf16 %v1757, %v1755
      %v1784 = vpack.c.bf16 %v1758, %v1756
      %v1785 = vpack.c.bf16 %v1761, %v1759
      %v1786 = vpack.c.bf16 %v1762, %v1760
      %v1787 = vpack.c.bf16 %v1765, %v1763
      %v1788 = vpack.c.bf16 %v1766, %v1764
      %v1789 = vpack.c.bf16 %v1769, %v1767
      %v1790 = vpack.c.bf16 %v1770, %v1768
      %v1791 = vpack.c.bf16 %v1773, %v1771
      %v1792 = vpack.c.bf16 %v1774, %v1772
      %v1793 = vpack.c.bf16 %v1775, %v1775
      %v1794 = vpack.c.bf16 %v1776, %v1776
      %v1796 = vsel %vm1483, %v1778, 0
      %v1799 = vsel %vm1483, %v1780, 0
      %v1802 = vsel %vm1483, %v1782, 0
      %v1805 = vsel %vm1483, %v1784, 0
      %v1808 = vsel %vm1483, %v1786, 0
      %v1811 = vsel %vm1483, %v1788, 0
      %v1814 = vsel %vm1483, %v1790, 0
      %v1817 = vsel %vm1483, %v1792, 0
      %v1820 = vsel %vm1483, %v1794, 0
      %vm1822 = vcmask 1041408
      %v1824 = vsel %vm1822, %v1270, 0
      %1826 = vmatprep.subr.bf16.mxu0 0
      %1827 = vmatpush1.bf16.msra.mxu0 %v1268
      %1828 = vmatprep.subr.bf16.mxu0 0
      %1829 = vmatpush1.bf16.msra.mxu0 %v1266
      %1830 = vmatprep.subr.bf16.mxu0 0
      %1831 = vmatpush1.bf16.msra.mxu0 %v1264
      %1832 = vmatprep.subr.bf16.mxu0 0
      %1833 = vmatpush1.bf16.msra.mxu0 %v1262
      %1834 = vmatprep.subr.bf16.mxu0 0
      %1835 = vmatpush1.bf16.msra.mxu0 %v1260
      %1836 = vmatprep.subr.bf16.mxu0 0
      %1837 = vmatpush1.bf16.msra.mxu0 %v1258
      %1838 = vmatprep.subr.bf16.mxu0 0
      %1839 = vmatpush1.bf16.msra.mxu0 %v1256
      %1840 = vmatprep.subr.bf16.mxu0 0
      %1841 = vmatpush1.bf16.msra.mxu0 %v1254
      %1842 = vmatprep.subr.bf16.mxu0 0
      %1843 = vmatpush2.bf16.msra.mxu0 0
      %1844 = vmatprep.subr.bf16.mxu0 0
      %1845 = vmatpush2.bf16.msra.mxu0 0
      %1846 = vmatprep.subr.bf16.mxu0 0
      %1847 = vmatpush2.bf16.msra.mxu0 0
      %1848 = vmatprep.subr.bf16.mxu0 0
      %1849 = vmatpush2.bf16.msra.mxu0 0
      %1850 = vmatprep.subr.bf16.mxu0 0
      %1851 = vmatpush2.bf16.msra.mxu0 0
      %1852 = vmatprep.subr.bf16.mxu0 0
      %1853 = vmatpush2.bf16.msra.mxu0 0
      %1854 = vmatprep.subr.bf16.mxu0 0
      %1855 = vmatpush2.bf16.msra.mxu0 0
      %1856 = vmatprep.subr.bf16.mxu0 0
      %1857 = vmatpush2.bf16.msra.mxu0 %v1824
      %1858 = vmatprep.mubr.bf16.mxu0 %v1796
      %1859 = vmatmul.mubr.bf16.gmra.mxu0 %v1777
      %v1860 = vpop.f32.mrf.mxu0
      %v1861 = vadd.f32 0.0, %v1860
      %v1862 = vpop.f32.mrf.mxu0
      %v1863 = vpop.f32.mrf.mxu0
      %v1864 = vadd.f32 0.0, %v1863
      %v1865 = vpop.f32.mrf.mxu0
      %1866 = vmatprep.mubr.bf16.mxu0 %v1799
      %1867 = vmatmul.mubr.bf16.gmra.mxu0 %v1779
      %v1868 = vpop.f32.mrf.mxu0
      %v1869 = vadd.f32 0.0, %v1868
      %v1870 = vpop.f32.mrf.mxu0
      %v1871 = vpop.f32.mrf.mxu0
      %v1872 = vadd.f32 0.0, %v1871
      %v1873 = vpop.f32.mrf.mxu0
      %1874 = vmatprep.mubr.bf16.mxu0 %v1802
      %1875 = vmatmul.mubr.bf16.gmra.mxu0 %v1781
      %v1876 = vpop.f32.mrf.mxu0
      %v1877 = vadd.f32 0.0, %v1876
      %v1878 = vpop.f32.mrf.mxu0
      %v1879 = vpop.f32.mrf.mxu0
      %v1880 = vadd.f32 0.0, %v1879
      %v1881 = vpop.f32.mrf.mxu0
      %1882 = vmatprep.mubr.bf16.mxu0 %v1805
      %1883 = vmatmul.mubr.bf16.gmra.mxu0 %v1783
      %v1884 = vpop.f32.mrf.mxu0
      %v1885 = vadd.f32 0.0, %v1884
      %v1886 = vpop.f32.mrf.mxu0
      %v1887 = vpop.f32.mrf.mxu0
      %v1888 = vadd.f32 0.0, %v1887
      %v1889 = vpop.f32.mrf.mxu0
      %1890 = vmatprep.mubr.bf16.mxu0 %v1808
      %1891 = vmatmul.mubr.bf16.gmra.mxu0 %v1785
      %v1892 = vpop.f32.mrf.mxu0
      %v1893 = vadd.f32 0.0, %v1892
      %v1894 = vpop.f32.mrf.mxu0
      %v1895 = vpop.f32.mrf.mxu0
      %v1896 = vadd.f32 0.0, %v1895
      %v1897 = vpop.f32.mrf.mxu0
      %1898 = vmatprep.mubr.bf16.mxu0 %v1811
      %1899 = vmatmul.mubr.bf16.gmra.mxu0 %v1787
      %v1900 = vpop.f32.mrf.mxu0
      %v1901 = vadd.f32 0.0, %v1900
      %v1902 = vpop.f32.mrf.mxu0
      %v1903 = vpop.f32.mrf.mxu0
      %v1904 = vadd.f32 0.0, %v1903
      %v1905 = vpop.f32.mrf.mxu0
      %1906 = vmatprep.mubr.bf16.mxu0 %v1814
      %1907 = vmatmul.mubr.bf16.gmra.mxu0 %v1789
      %v1908 = vpop.f32.mrf.mxu0
      %v1909 = vadd.f32 0.0, %v1908
      %v1910 = vpop.f32.mrf.mxu0
      %v1911 = vpop.f32.mrf.mxu0
      %v1912 = vadd.f32 0.0, %v1911
      %v1913 = vpop.f32.mrf.mxu0
      %1914 = vmatprep.mubr.bf16.mxu0 %v1817
      %1915 = vmatmul.mubr.bf16.gmra.mxu0 %v1791
      %v1916 = vpop.f32.mrf.mxu0
      %v1917 = vadd.f32 0.0, %v1916
      %v1918 = vpop.f32.mrf.mxu0
      %v1919 = vpop.f32.mrf.mxu0
      %v1920 = vadd.f32 0.0, %v1919
      %v1921 = vpop.f32.mrf.mxu0
      %1922 = vmatprep.mubr.bf16.mxu0 %v1820
      %1923 = vmatmul.mubr.bf16.gmra.mxu0 %v1793
      %v1924 = vpop.f32.mrf.mxu0
      %v1925 = vadd.f32 0.0, %v1924
      %v1926 = vpop.f32.mrf.mxu0
      %v1927 = vpop.f32.mrf.mxu0
      %v1928 = vpop.f32.mrf.mxu0
      %1929 = vdwg.mxu0
      %1939 = vrot.lane.b32.xlu0 %v1271, 112
      %v1940 = vpop.permute.xlu0 %1939
      %1941 = vrot.lane.b32.xlu0 %v1272, 112
      %v1942 = vpop.permute.xlu0 %1941
      %1943 = vrot.lane.b32.xlu0 %v1273, 112
      %v1944 = vpop.permute.xlu0 %1943
      %1945 = vrot.lane.b32.xlu0 %v1274, 112
      %v1946 = vpop.permute.xlu0 %1945
      %1947 = vrot.lane.b32.xlu0 %v1275, 112
      %v1948 = vpop.permute.xlu0 %1947
      %1949 = vrot.lane.b32.xlu0 %v1276, 112
      %v1950 = vpop.permute.xlu0 %1949
      %1951 = vrot.lane.b32.xlu0 %v1277, 112
      %v1952 = vpop.permute.xlu0 %1951
      %1953 = vrot.lane.b32.xlu0 %v1278, 112
      %v1954 = vpop.permute.xlu0 %1953
      %1955 = vrot.lane.b32.xlu0 %v1279, 112
      %v1956 = vpop.permute.xlu0 %1955
      %1957 = vrot.lane.b32.xlu0 %v1253, 48
      %v1958 = vpop.permute.xlu0 %1957
      %1959 = vrot.lane.b32.xlu0 %v1255, 48
      %v1960 = vpop.permute.xlu0 %1959
      %1961 = vrot.lane.b32.xlu0 %v1257, 48
      %v1962 = vpop.permute.xlu0 %1961
      %1963 = vrot.lane.b32.xlu0 %v1259, 48
      %v1964 = vpop.permute.xlu0 %1963
      %1965 = vrot.lane.b32.xlu0 %v1261, 48
      %v1966 = vpop.permute.xlu0 %1965
      %1967 = vrot.lane.b32.xlu0 %v1263, 48
      %v1968 = vpop.permute.xlu0 %1967
      %1969 = vrot.lane.b32.xlu0 %v1265, 48
      %v1970 = vpop.permute.xlu0 %1969
      %1971 = vrot.lane.b32.xlu0 %v1267, 48
      %v1972 = vpop.permute.xlu0 %1971
      %1973 = vrot.lane.b32.xlu0 %v1269, 48
      %v1974 = vpop.permute.xlu0 %1973
      %v1976 = vsel %vm1307, %v1940, 0
      %v1979 = vsel %vm1307, %v1942, 0
      %v1982 = vsel %vm1307, %v1944, 0
      %v1985 = vsel %vm1307, %v1946, 0
      %v1988 = vsel %vm1307, %v1948, 0
      %v1991 = vsel %vm1307, %v1950, 0
      %v1994 = vsel %vm1307, %v1952, 0
      %v1997 = vsel %vm1307, %v1954, 0
      %v2000 = vsel %vm1307, %v1956, 0
      %v2003 = vsel %vm1307, %v1958, 0
      %v2006 = vsel %vm1307, %v1960, 0
      %v2009 = vsel %vm1307, %v1962, 0
      %v2012 = vsel %vm1307, %v1964, 0
      %v2015 = vsel %vm1307, %v1966, 0
      %v2018 = vsel %vm1307, %v1968, 0
      %v2021 = vsel %vm1307, %v1970, 0
      %v2024 = vsel %vm1307, %v1972, 0
      %v2027 = vsel %vm1307, %v1974, 0
      %2029 = vmatprep.subr.bf16.mxu0 0
      %2030 = vmatpush1.bf16.xpose.msra.mxu0 %v2024
      %2031 = vmatprep.subr.bf16.mxu0 0
      %2032 = vmatpush1.bf16.xpose.msra.mxu0 %v2021
      %2033 = vmatprep.subr.bf16.mxu0 0
      %2034 = vmatpush1.bf16.xpose.msra.mxu0 %v2018
      %2035 = vmatprep.subr.bf16.mxu0 0
      %2036 = vmatpush1.bf16.xpose.msra.mxu0 %v2015
      %2037 = vmatprep.subr.bf16.mxu0 0
      %2038 = vmatpush1.bf16.xpose.msra.mxu0 %v2012
      %2039 = vmatprep.subr.bf16.mxu0 0
      %2040 = vmatpush1.bf16.xpose.msra.mxu0 %v2009
      %2041 = vmatprep.subr.bf16.mxu0 0
      %2042 = vmatpush1.bf16.xpose.msra.mxu0 %v2006
      %2043 = vmatprep.subr.bf16.mxu0 0
      %2044 = vmatpush1.bf16.xpose.msra.mxu0 %v2003
      %2045 = vmatprep.subr.bf16.mxu0 0
      %2046 = vmatpush2.bf16.xpose.msra.mxu0 0
      %2047 = vmatprep.subr.bf16.mxu0 0
      %2048 = vmatpush2.bf16.xpose.msra.mxu0 0
      %2049 = vmatprep.subr.bf16.mxu0 0
      %2050 = vmatpush2.bf16.xpose.msra.mxu0 0
      %2051 = vmatprep.subr.bf16.mxu0 0
      %2052 = vmatpush2.bf16.xpose.msra.mxu0 0
      %2053 = vmatprep.subr.bf16.mxu0 0
      %2054 = vmatpush2.bf16.xpose.msra.mxu0 0
      %2055 = vmatprep.subr.bf16.mxu0 0
      %2056 = vmatpush2.bf16.xpose.msra.mxu0 0
      %2057 = vmatprep.subr.bf16.mxu0 0
      %2058 = vmatpush2.bf16.xpose.msra.mxu0 0
      %2059 = vmatprep.subr.bf16.mxu0 0
      %2060 = vmatpush2.bf16.xpose.msra.mxu0 %v2027
      %2061 = vmatprep.mubr.bf16.mxu0 0
      %2062 = vmatmul.mubr.bf16.gmra.mxu0 %v1976
      %v2063 = vpop.f32.mrf.mxu0
      %v2064 = vadd.f32 0.0, %v2063
      %v2065 = vpop.f32.mrf.mxu0
      %v2066 = vadd.f32 0.0, %v2065
      %v2067 = vpop.f32.mrf.mxu0
      %v2068 = vadd.f32 0.0, %v2067
      %v2069 = vpop.f32.mrf.mxu0
      %v2070 = vadd.f32 0.0, %v2069
      %2071 = vmatprep.mubr.bf16.mxu0 0
      %2072 = vmatmul.mubr.bf16.gmra.mxu0 %v1979
      %v2073 = vpop.f32.mrf.mxu0
      %v2074 = vadd.f32 0.0, %v2073
      %v2075 = vpop.f32.mrf.mxu0
      %v2076 = vadd.f32 0.0, %v2075
      %v2077 = vpop.f32.mrf.mxu0
      %v2078 = vadd.f32 0.0, %v2077
      %v2079 = vpop.f32.mrf.mxu0
      %v2080 = vadd.f32 0.0, %v2079
      %2081 = vmatprep.mubr.bf16.mxu0 0
      %2082 = vmatmul.mubr.bf16.gmra.mxu0 %v1982
      %v2083 = vpop.f32.mrf.mxu0
      %v2084 = vadd.f32 0.0, %v2083
      %v2085 = vpop.f32.mrf.mxu0
      %v2086 = vadd.f32 0.0, %v2085
      %v2087 = vpop.f32.mrf.mxu0
      %v2088 = vadd.f32 0.0, %v2087
      %v2089 = vpop.f32.mrf.mxu0
      %v2090 = vadd.f32 0.0, %v2089
      %2091 = vmatprep.mubr.bf16.mxu0 0
      %2092 = vmatmul.mubr.bf16.gmra.mxu0 %v1985
      %v2093 = vpop.f32.mrf.mxu0
      %v2094 = vadd.f32 0.0, %v2093
      %v2095 = vpop.f32.mrf.mxu0
      %v2096 = vadd.f32 0.0, %v2095
      %v2097 = vpop.f32.mrf.mxu0
      %v2098 = vadd.f32 0.0, %v2097
      %v2099 = vpop.f32.mrf.mxu0
      %v2100 = vadd.f32 0.0, %v2099
      %2101 = vmatprep.mubr.bf16.mxu0 0
      %2102 = vmatmul.mubr.bf16.gmra.mxu0 %v1988
      %v2103 = vpop.f32.mrf.mxu0
      %v2104 = vadd.f32 0.0, %v2103
      %v2105 = vpop.f32.mrf.mxu0
      %v2106 = vadd.f32 0.0, %v2105
      %v2107 = vpop.f32.mrf.mxu0
      %v2108 = vadd.f32 0.0, %v2107
      %v2109 = vpop.f32.mrf.mxu0
      %v2110 = vadd.f32 0.0, %v2109
      %2111 = vmatprep.mubr.bf16.mxu0 0
      %2112 = vmatmul.mubr.bf16.gmra.mxu0 %v1991
      %v2113 = vpop.f32.mrf.mxu0
      %v2114 = vadd.f32 0.0, %v2113
      %v2115 = vpop.f32.mrf.mxu0
      %v2116 = vadd.f32 0.0, %v2115
      %v2117 = vpop.f32.mrf.mxu0
      %v2118 = vadd.f32 0.0, %v2117
      %v2119 = vpop.f32.mrf.mxu0
      %v2120 = vadd.f32 0.0, %v2119
      %2121 = vmatprep.mubr.bf16.mxu0 0
      %2122 = vmatmul.mubr.bf16.gmra.mxu0 %v1994
      %v2123 = vpop.f32.mrf.mxu0
      %v2124 = vadd.f32 0.0, %v2123
      %v2125 = vpop.f32.mrf.mxu0
      %v2126 = vadd.f32 0.0, %v2125
      %v2127 = vpop.f32.mrf.mxu0
      %v2128 = vadd.f32 0.0, %v2127
      %v2129 = vpop.f32.mrf.mxu0
      %v2130 = vadd.f32 0.0, %v2129
      %2131 = vmatprep.mubr.bf16.mxu0 0
      %2132 = vmatmul.mubr.bf16.gmra.mxu0 %v1997
      %v2133 = vpop.f32.mrf.mxu0
      %v2134 = vadd.f32 0.0, %v2133
      %v2135 = vpop.f32.mrf.mxu0
      %v2136 = vadd.f32 0.0, %v2135
      %v2137 = vpop.f32.mrf.mxu0
      %v2138 = vadd.f32 0.0, %v2137
      %v2139 = vpop.f32.mrf.mxu0
      %v2140 = vadd.f32 0.0, %v2139
      %2141 = vmatprep.mubr.bf16.mxu0 0
      %2142 = vmatmul.mubr.bf16.gmra.mxu0 %v2000
      %v2143 = vpop.f32.mrf.mxu0
      %v2144 = vadd.f32 0.0, %v2143
      %v2145 = vpop.f32.mrf.mxu0
      %v2146 = vadd.f32 0.0, %v2145
      %v2147 = vpop.f32.mrf.mxu0
      %v2148 = vpop.f32.mrf.mxu0
      %2149 = vdwg.mxu0
      %v2150 = vsel %vm1483, %v2066, -inf
      %v2151 = vmax.f32 %v2064, %v2150
      %2152 = vmax.xlane.f32.xlu0 %v2151
      %v2153 = vpop.xlane.xlu0 %2152
      %v2154 = vsel %vm1483, %v2070, -inf
      %v2155 = vmax.f32 %v2068, %v2154
      %2156 = vmax.xlane.f32.xlu0 %v2155
      %v2157 = vpop.xlane.xlu0 %2156
      %v2158 = vsel %vm1483, %v2076, -inf
      %v2159 = vmax.f32 %v2074, %v2158
      %2160 = vmax.xlane.f32.xlu0 %v2159
      %v2161 = vpop.xlane.xlu0 %2160
      %v2162 = vsel %vm1483, %v2080, -inf
      %v2163 = vmax.f32 %v2078, %v2162
      %2164 = vmax.xlane.f32.xlu0 %v2163
      %v2165 = vpop.xlane.xlu0 %2164
      %v2166 = vsel %vm1483, %v2086, -inf
      %v2167 = vmax.f32 %v2084, %v2166
      %2168 = vmax.xlane.f32.xlu0 %v2167
      %v2169 = vpop.xlane.xlu0 %2168
      %v2170 = vsel %vm1483, %v2090, -inf
      %v2171 = vmax.f32 %v2088, %v2170
      %2172 = vmax.xlane.f32.xlu0 %v2171
      %v2173 = vpop.xlane.xlu0 %2172
      %v2174 = vsel %vm1483, %v2096, -inf
      %v2175 = vmax.f32 %v2094, %v2174
      %2176 = vmax.xlane.f32.xlu0 %v2175
      %v2177 = vpop.xlane.xlu0 %2176
      %v2178 = vsel %vm1483, %v2100, -inf
      %v2179 = vmax.f32 %v2098, %v2178
      %2180 = vmax.xlane.f32.xlu0 %v2179
      %v2181 = vpop.xlane.xlu0 %2180
      %v2182 = vsel %vm1483, %v2106, -inf
      %v2183 = vmax.f32 %v2104, %v2182
      %2184 = vmax.xlane.f32.xlu0 %v2183
      %v2185 = vpop.xlane.xlu0 %2184
      %v2186 = vsel %vm1483, %v2110, -inf
      %v2187 = vmax.f32 %v2108, %v2186
      %2188 = vmax.xlane.f32.xlu0 %v2187
      %v2189 = vpop.xlane.xlu0 %2188
      %v2190 = vsel %vm1483, %v2116, -inf
      %v2191 = vmax.f32 %v2114, %v2190
      %2192 = vmax.xlane.f32.xlu0 %v2191
      %v2193 = vpop.xlane.xlu0 %2192
      %v2194 = vsel %vm1483, %v2120, -inf
      %v2195 = vmax.f32 %v2118, %v2194
      %2196 = vmax.xlane.f32.xlu0 %v2195
      %v2197 = vpop.xlane.xlu0 %2196
      %v2198 = vsel %vm1483, %v2126, -inf
      %v2199 = vmax.f32 %v2124, %v2198
      %2200 = vmax.xlane.f32.xlu0 %v2199
      %v2201 = vpop.xlane.xlu0 %2200
      %v2202 = vsel %vm1483, %v2130, -inf
      %v2203 = vmax.f32 %v2128, %v2202
      %2204 = vmax.xlane.f32.xlu0 %v2203
      %v2205 = vpop.xlane.xlu0 %2204
      %v2206 = vsel %vm1483, %v2136, -inf
      %v2207 = vmax.f32 %v2134, %v2206
      %2208 = vmax.xlane.f32.xlu0 %v2207
      %v2209 = vpop.xlane.xlu0 %2208
      %v2210 = vsel %vm1483, %v2140, -inf
      %v2211 = vmax.f32 %v2138, %v2210
      %2212 = vmax.xlane.f32.xlu0 %v2211
      %v2213 = vpop.xlane.xlu0 %2212
      %v2214 = vsel %vm1548, %v2144, -inf
      %v2215 = vsel %vm1550, %v2146, -inf
      %v2216 = vmax.f32 %v2214, %v2215
      %2217 = vmax.xlane.f32.xlu0 %v2216
      %v2218 = vpop.xlane.xlu0 %2217
      %v2219 = vsub.f32 %v2064, %v2153
      %v2220 = vsub.f32 %v2066, %v2153
      %v2221 = vsub.f32 %v2068, %v2157
      %v2222 = vsub.f32 %v2070, %v2157
      %v2223 = vsub.f32 %v2074, %v2161
      %v2224 = vsub.f32 %v2076, %v2161
      %v2225 = vsub.f32 %v2078, %v2165
      %v2226 = vsub.f32 %v2080, %v2165
      %v2227 = vsub.f32 %v2084, %v2169
      %v2228 = vsub.f32 %v2086, %v2169
      %v2229 = vsub.f32 %v2088, %v2173
      %v2230 = vsub.f32 %v2090, %v2173
      %v2231 = vsub.f32 %v2094, %v2177
      %v2232 = vsub.f32 %v2096, %v2177
      %v2233 = vsub.f32 %v2098, %v2181
      %v2234 = vsub.f32 %v2100, %v2181
      %v2235 = vsub.f32 %v2104, %v2185
      %v2236 = vsub.f32 %v2106, %v2185
      %v2237 = vsub.f32 %v2108, %v2189
      %v2238 = vsub.f32 %v2110, %v2189
      %v2239 = vsub.f32 %v2114, %v2193
      %v2240 = vsub.f32 %v2116, %v2193
      %v2241 = vsub.f32 %v2118, %v2197
      %v2242 = vsub.f32 %v2120, %v2197
      %v2243 = vsub.f32 %v2124, %v2201
      %v2244 = vsub.f32 %v2126, %v2201
      %v2245 = vsub.f32 %v2128, %v2205
      %v2246 = vsub.f32 %v2130, %v2205
      %v2247 = vsub.f32 %v2134, %v2209
      %v2248 = vsub.f32 %v2136, %v2209
      %v2249 = vsub.f32 %v2138, %v2213
      %v2250 = vsub.f32 %v2140, %v2213
      %v2251 = vsub.f32 %v2144, %v2218
      %v2252 = vsub.f32 %v2146, %v2218
      %v2253 = vmul.f32 %v2219, 1.442695
      %v2254 = vpow.pop %v2253
      %v2255 = vmul.f32 %v2220, 1.442695
      %v2256 = vpow.pop %v2255
      %v2257 = vmul.f32 %v2221, 1.442695
      %v2258 = vpow.pop %v2257
      %v2259 = vmul.f32 %v2222, 1.442695
      %v2260 = vpow.pop %v2259
      %v2261 = vmul.f32 %v2223, 1.442695
      %v2262 = vpow.pop %v2261
      %v2263 = vmul.f32 %v2224, 1.442695
      %v2264 = vpow.pop %v2263
      %v2265 = vmul.f32 %v2225, 1.442695
      %v2266 = vpow.pop %v2265
      %v2267 = vmul.f32 %v2226, 1.442695
      %v2268 = vpow.pop %v2267
      %v2269 = vmul.f32 %v2227, 1.442695
      %v2270 = vpow.pop %v2269
      %v2271 = vmul.f32 %v2228, 1.442695
      %v2272 = vpow.pop %v2271
      %v2273 = vmul.f32 %v2229, 1.442695
      %v2274 = vpow.pop %v2273
      %v2275 = vmul.f32 %v2230, 1.442695
      %v2276 = vpow.pop %v2275
      %v2277 = vmul.f32 %v2231, 1.442695
      %v2278 = vpow.pop %v2277
      %v2279 = vmul.f32 %v2232, 1.442695
      %v2280 = vpow.pop %v2279
      %v2281 = vmul.f32 %v2233, 1.442695
      %v2282 = vpow.pop %v2281
      %v2283 = vmul.f32 %v2234, 1.442695
      %v2284 = vpow.pop %v2283
      %v2285 = vmul.f32 %v2235, 1.442695
      %v2286 = vpow.pop %v2285
      %v2287 = vmul.f32 %v2236, 1.442695
      %v2288 = vpow.pop %v2287
      %v2289 = vmul.f32 %v2237, 1.442695
      %v2290 = vpow.pop %v2289
      %v2291 = vmul.f32 %v2238, 1.442695
      %v2292 = vpow.pop %v2291
      %v2293 = vmul.f32 %v2239, 1.442695
      %v2294 = vpow.pop %v2293
      %v2295 = vmul.f32 %v2240, 1.442695
      %v2296 = vpow.pop %v2295
      %v2297 = vmul.f32 %v2241, 1.442695
      %v2298 = vpow.pop %v2297
      %v2299 = vmul.f32 %v2242, 1.442695
      %v2300 = vpow.pop %v2299
      %v2301 = vmul.f32 %v2243, 1.442695
      %v2302 = vpow.pop %v2301
      %v2303 = vmul.f32 %v2244, 1.442695
      %v2304 = vpow.pop %v2303
      %v2305 = vmul.f32 %v2245, 1.442695
      %v2306 = vpow.pop %v2305
      %v2307 = vmul.f32 %v2246, 1.442695
      %v2308 = vpow.pop %v2307
      %v2309 = vmul.f32 %v2247, 1.442695
      %v2310 = vpow.pop %v2309
      %v2311 = vmul.f32 %v2248, 1.442695
      %v2312 = vpow.pop %v2311
      %v2313 = vmul.f32 %v2249, 1.442695
      %v2314 = vpow.pop %v2313
      %v2315 = vmul.f32 %v2250, 1.442695
      %v2316 = vpow.pop %v2315
      %v2317 = vmul.f32 %v2251, 1.442695
      %v2318 = vpow.pop %v2317
      %v2319 = vmul.f32 %v2252, 1.442695
      %v2320 = vpow.pop %v2319
      %v2321 = vsel %vm1483, %v2256, 0.0
      %v2322 = vadd.f32 %v2254, %v2321
      %2323 = vadd.xlane.f32.xlu0 %v2322
      %v2324 = vpop.xlane.xlu0 %2323
      %v2325 = vsel %vm1483, %v2260, 0.0
      %v2326 = vadd.f32 %v2258, %v2325
      %2327 = vadd.xlane.f32.xlu0 %v2326
      %v2328 = vpop.xlane.xlu0 %2327
      %v2329 = vsel %vm1483, %v2264, 0.0
      %v2330 = vadd.f32 %v2262, %v2329
      %2331 = vadd.xlane.f32.xlu0 %v2330
      %v2332 = vpop.xlane.xlu0 %2331
      %v2333 = vsel %vm1483, %v2268, 0.0
      %v2334 = vadd.f32 %v2266, %v2333
      %2335 = vadd.xlane.f32.xlu0 %v2334
      %v2336 = vpop.xlane.xlu0 %2335
      %v2337 = vsel %vm1483, %v2272, 0.0
      %v2338 = vadd.f32 %v2270, %v2337
      %2339 = vadd.xlane.f32.xlu0 %v2338
      %v2340 = vpop.xlane.xlu0 %2339
      %v2341 = vsel %vm1483, %v2276, 0.0
      %v2342 = vadd.f32 %v2274, %v2341
      %2343 = vadd.xlane.f32.xlu0 %v2342
      %v2344 = vpop.xlane.xlu0 %2343
      %v2345 = vsel %vm1483, %v2280, 0.0
      %v2346 = vadd.f32 %v2278, %v2345
      %2347 = vadd.xlane.f32.xlu0 %v2346
      %v2348 = vpop.xlane.xlu0 %2347
      %v2349 = vsel %vm1483, %v2284, 0.0
      %v2350 = vadd.f32 %v2282, %v2349
      %2351 = vadd.xlane.f32.xlu0 %v2350
      %v2352 = vpop.xlane.xlu0 %2351
      %v2353 = vsel %vm1483, %v2288, 0.0
      %v2354 = vadd.f32 %v2286, %v2353
      %2355 = vadd.xlane.f32.xlu0 %v2354
      %v2356 = vpop.xlane.xlu0 %2355
      %v2357 = vsel %vm1483, %v2292, 0.0
      %v2358 = vadd.f32 %v2290, %v2357
      %2359 = vadd.xlane.f32.xlu0 %v2358
      %v2360 = vpop.xlane.xlu0 %2359
      %v2361 = vsel %vm1483, %v2296, 0.0
      %v2362 = vadd.f32 %v2294, %v2361
      %2363 = vadd.xlane.f32.xlu0 %v2362
      %v2364 = vpop.xlane.xlu0 %2363
      %v2365 = vsel %vm1483, %v2300, 0.0
      %v2366 = vadd.f32 %v2298, %v2365
      %2367 = vadd.xlane.f32.xlu0 %v2366
      %v2368 = vpop.xlane.xlu0 %2367
      %v2369 = vsel %vm1483, %v2304, 0.0
      %v2370 = vadd.f32 %v2302, %v2369
      %2371 = vadd.xlane.f32.xlu0 %v2370
      %v2372 = vpop.xlane.xlu0 %2371
      %v2373 = vsel %vm1483, %v2308, 0.0
      %v2374 = vadd.f32 %v2306, %v2373
      %2375 = vadd.xlane.f32.xlu0 %v2374
      %v2376 = vpop.xlane.xlu0 %2375
      %v2377 = vsel %vm1483, %v2312, 0.0
      %v2378 = vadd.f32 %v2310, %v2377
      %2379 = vadd.xlane.f32.xlu0 %v2378
      %v2380 = vpop.xlane.xlu0 %2379
      %v2381 = vsel %vm1483, %v2316, 0.0
      %v2382 = vadd.f32 %v2314, %v2381
      %2383 = vadd.xlane.f32.xlu0 %v2382
      %v2384 = vpop.xlane.xlu0 %2383
      %v2385 = vsel %vm1548, %v2318, 0.0
      %v2386 = vsel %vm1550, %v2320, 0.0
      %v2387 = vadd.f32 %v2385, %v2386
      %2388 = vadd.xlane.f32.xlu0 %v2387
      %v2389 = vpop.xlane.xlu0 %2388
      %v2390 = vrcp.pop %v2324
      %v2391 = vrcp.pop %v2328
      %v2392 = vrcp.pop %v2332
      %v2393 = vrcp.pop %v2336
      %v2394 = vrcp.pop %v2340
      %v2395 = vrcp.pop %v2344
      %v2396 = vrcp.pop %v2348
      %v2397 = vrcp.pop %v2352
      %v2398 = vrcp.pop %v2356
      %v2399 = vrcp.pop %v2360
      %v2400 = vrcp.pop %v2364
      %v2401 = vrcp.pop %v2368
      %v2402 = vrcp.pop %v2372
      %v2403 = vrcp.pop %v2376
      %v2404 = vrcp.pop %v2380
      %v2405 = vrcp.pop %v2384
      %v2406 = vrcp.pop %v2389
      %v2407 = vmul.f32 %v2254, %v2390
      %v2408 = vmul.f32 %v2256, %v2390
      %v2409 = vmul.f32 %v2258, %v2391
      %v2410 = vmul.f32 %v2260, %v2391
      %v2411 = vmul.f32 %v2262, %v2392
      %v2412 = vmul.f32 %v2264, %v2392
      %v2413 = vmul.f32 %v2266, %v2393
      %v2414 = vmul.f32 %v2268, %v2393
      %v2415 = vmul.f32 %v2270, %v2394
      %v2416 = vmul.f32 %v2272, %v2394
      %v2417 = vmul.f32 %v2274, %v2395
      %v2418 = vmul.f32 %v2276, %v2395
      %v2419 = vmul.f32 %v2278, %v2396
      %v2420 = vmul.f32 %v2280, %v2396
      %v2421 = vmul.f32 %v2282, %v2397
      %v2422 = vmul.f32 %v2284, %v2397
      %v2423 = vmul.f32 %v2286, %v2398
      %v2424 = vmul.f32 %v2288, %v2398
      %v2425 = vmul.f32 %v2290, %v2399
      %v2426 = vmul.f32 %v2292, %v2399
      %v2427 = vmul.f32 %v2294, %v2400
      %v2428 = vmul.f32 %v2296, %v2400
      %v2429 = vmul.f32 %v2298, %v2401
      %v2430 = vmul.f32 %v2300, %v2401
      %v2431 = vmul.f32 %v2302, %v2402
      %v2432 = vmul.f32 %v2304, %v2402
      %v2433 = vmul.f32 %v2306, %v2403
      %v2434 = vmul.f32 %v2308, %v2403
      %v2435 = vmul.f32 %v2310, %v2404
      %v2436 = vmul.f32 %v2312, %v2404
      %v2437 = vmul.f32 %v2314, %v2405
      %v2438 = vmul.f32 %v2316, %v2405
      %v2439 = vmul.f32 %v2318, %v2406
      %v2440 = vmul.f32 %v2320, %v2406
      %v2441 = vpack.c.bf16 %v2409, %v2407
      %v2442 = vpack.c.bf16 %v2410, %v2408
      %v2443 = vpack.c.bf16 %v2413, %v2411
      %v2444 = vpack.c.bf16 %v2414, %v2412
      %v2445 = vpack.c.bf16 %v2417, %v2415
      %v2446 = vpack.c.bf16 %v2418, %v2416
      %v2447 = vpack.c.bf16 %v2421, %v2419
      %v2448 = vpack.c.bf16 %v2422, %v2420
      %v2449 = vpack.c.bf16 %v2425, %v2423
      %v2450 = vpack.c.bf16 %v2426, %v2424
      %v2451 = vpack.c.bf16 %v2429, %v2427
      %v2452 = vpack.c.bf16 %v2430, %v2428
      %v2453 = vpack.c.bf16 %v2433, %v2431
      %v2454 = vpack.c.bf16 %v2434, %v2432
      %v2455 = vpack.c.bf16 %v2437, %v2435
      %v2456 = vpack.c.bf16 %v2438, %v2436
      %v2457 = vpack.c.bf16 %v2439, %v2439
      %v2458 = vpack.c.bf16 %v2440, %v2440
      %2468 = vrot.lane.b32.xlu0 %v1254, 112
      %v2469 = vpop.permute.xlu0 %2468
      %2470 = vrot.lane.b32.xlu0 %v1256, 112
      %v2471 = vpop.permute.xlu0 %2470
      %2472 = vrot.lane.b32.xlu0 %v1258, 112
      %v2473 = vpop.permute.xlu0 %2472
      %2474 = vrot.lane.b32.xlu0 %v1260, 112
      %v2475 = vpop.permute.xlu0 %2474
      %2476 = vrot.lane.b32.xlu0 %v1262, 112
      %v2477 = vpop.permute.xlu0 %2476
      %2478 = vrot.lane.b32.xlu0 %v1264, 112
      %v2479 = vpop.permute.xlu0 %2478
      %2480 = vrot.lane.b32.xlu0 %v1266, 112
      %v2481 = vpop.permute.xlu0 %2480
      %2482 = vrot.lane.b32.xlu0 %v1268, 112
      %v2483 = vpop.permute.xlu0 %2482
      %2484 = vrot.lane.b32.xlu0 %v1270, 112
      %v2485 = vpop.permute.xlu0 %2484
      %v2495 = vsel %vm1483, %v2442, 0
      %v2498 = vsel %vm1483, %v2444, 0
      %v2501 = vsel %vm1483, %v2446, 0
      %v2504 = vsel %vm1483, %v2448, 0
      %v2507 = vsel %vm1483, %v2450, 0
      %v2510 = vsel %vm1483, %v2452, 0
      %v2513 = vsel %vm1483, %v2454, 0
      %v2516 = vsel %vm1483, %v2456, 0
      %v2519 = vsel %vm1483, %v2458, 0
      %v2522 = vsel %vm1822, %v2485, 0
      %2524 = vmatprep.subr.bf16.mxu0 0
      %2525 = vmatpush1.bf16.msra.mxu0 %v2483
      %2526 = vmatprep.subr.bf16.mxu0 0
      %2527 = vmatpush1.bf16.msra.mxu0 %v2481
      %2528 = vmatprep.subr.bf16.mxu0 0
      %2529 = vmatpush1.bf16.msra.mxu0 %v2479
      %2530 = vmatprep.subr.bf16.mxu0 0
      %2531 = vmatpush1.bf16.msra.mxu0 %v2477
      %2532 = vmatprep.subr.bf16.mxu0 0
      %2533 = vmatpush1.bf16.msra.mxu0 %v2475
      %2534 = vmatprep.subr.bf16.mxu0 0
      %2535 = vmatpush1.bf16.msra.mxu0 %v2473
      %2536 = vmatprep.subr.bf16.mxu0 0
      %2537 = vmatpush1.bf16.msra.mxu0 %v2471
      %2538 = vmatprep.subr.bf16.mxu0 0
      %2539 = vmatpush1.bf16.msra.mxu0 %v2469
      %2540 = vmatprep.subr.bf16.mxu0 0
      %2541 = vmatpush2.bf16.msra.mxu0 0
      %2542 = vmatprep.subr.bf16.mxu0 0
      %2543 = vmatpush2.bf16.msra.mxu0 0
      %2544 = vmatprep.subr.bf16.mxu0 0
      %2545 = vmatpush2.bf16.msra.mxu0 0
      %2546 = vmatprep.subr.bf16.mxu0 0
      %2547 = vmatpush2.bf16.msra.mxu0 0
      %2548 = vmatprep.subr.bf16.mxu0 0
      %2549 = vmatpush2.bf16.msra.mxu0 0
      %2550 = vmatprep.subr.bf16.mxu0 0
      %2551 = vmatpush2.bf16.msra.mxu0 0
      %2552 = vmatprep.subr.bf16.mxu0 0
      %2553 = vmatpush2.bf16.msra.mxu0 0
      %2554 = vmatprep.subr.bf16.mxu0 0
      %2555 = vmatpush2.bf16.msra.mxu0 %v2522
      %2556 = vmatprep.mubr.bf16.mxu0 %v2495
      %2557 = vmatmul.mubr.bf16.gmra.mxu0 %v2441
      %v2558 = vpop.f32.mrf.mxu0
      %v2559 = vadd.f32 0.0, %v2558
      %v2560 = vpop.f32.mrf.mxu0
      %v2561 = vpop.f32.mrf.mxu0
      %v2562 = vadd.f32 0.0, %v2561
      %v2563 = vpop.f32.mrf.mxu0
      %2564 = vmatprep.mubr.bf16.mxu0 %v2498
      %2565 = vmatmul.mubr.bf16.gmra.mxu0 %v2443
      %v2566 = vpop.f32.mrf.mxu0
      %v2567 = vadd.f32 0.0, %v2566
      %v2568 = vpop.f32.mrf.mxu0
      %v2569 = vpop.f32.mrf.mxu0
      %v2570 = vadd.f32 0.0, %v2569
      %v2571 = vpop.f32.mrf.mxu0
      %2572 = vmatprep.mubr.bf16.mxu0 %v2501
      %2573 = vmatmul.mubr.bf16.gmra.mxu0 %v2445
      %v2574 = vpop.f32.mrf.mxu0
      %v2575 = vadd.f32 0.0, %v2574
      %v2576 = vpop.f32.mrf.mxu0
      %v2577 = vpop.f32.mrf.mxu0
      %v2578 = vadd.f32 0.0, %v2577
      %v2579 = vpop.f32.mrf.mxu0
      %2580 = vmatprep.mubr.bf16.mxu0 %v2504
      %2581 = vmatmul.mubr.bf16.gmra.mxu0 %v2447
      %v2582 = vpop.f32.mrf.mxu0
      %v2583 = vadd.f32 0.0, %v2582
      %v2584 = vpop.f32.mrf.mxu0
      %v2585 = vpop.f32.mrf.mxu0
      %v2586 = vadd.f32 0.0, %v2585
      %v2587 = vpop.f32.mrf.mxu0
      %2588 = vmatprep.mubr.bf16.mxu0 %v2507
      %2589 = vmatmul.mubr.bf16.gmra.mxu0 %v2449
      %v2590 = vpop.f32.mrf.mxu0
      %v2591 = vadd.f32 0.0, %v2590
      %v2592 = vpop.f32.mrf.mxu0
      %v2593 = vpop.f32.mrf.mxu0
      %v2594 = vadd.f32 0.0, %v2593
      %v2595 = vpop.f32.mrf.mxu0
      %2596 = vmatprep.mubr.bf16.mxu0 %v2510
      %2597 = vmatmul.mubr.bf16.gmra.mxu0 %v2451
      %v2598 = vpop.f32.mrf.mxu0
      %v2599 = vadd.f32 0.0, %v2598
      %v2600 = vpop.f32.mrf.mxu0
      %v2601 = vpop.f32.mrf.mxu0
      %v2602 = vadd.f32 0.0, %v2601
      %v2603 = vpop.f32.mrf.mxu0
      %2604 = vmatprep.mubr.bf16.mxu0 %v2513
      %2605 = vmatmul.mubr.bf16.gmra.mxu0 %v2453
      %v2606 = vpop.f32.mrf.mxu0
      %v2607 = vadd.f32 0.0, %v2606
      %v2608 = vpop.f32.mrf.mxu0
      %v2609 = vpop.f32.mrf.mxu0
      %v2610 = vadd.f32 0.0, %v2609
      %v2611 = vpop.f32.mrf.mxu0
      %2612 = vmatprep.mubr.bf16.mxu0 %v2516
      %2613 = vmatmul.mubr.bf16.gmra.mxu0 %v2455
      %v2614 = vpop.f32.mrf.mxu0
      %v2615 = vadd.f32 0.0, %v2614
      %v2616 = vpop.f32.mrf.mxu0
      %v2617 = vpop.f32.mrf.mxu0
      %v2618 = vadd.f32 0.0, %v2617
      %v2619 = vpop.f32.mrf.mxu0
      %2620 = vmatprep.mubr.bf16.mxu0 %v2519
      %2621 = vmatmul.mubr.bf16.gmra.mxu0 %v2457
      %v2622 = vpop.f32.mrf.mxu0
      %v2623 = vadd.f32 0.0, %v2622
      %v2624 = vpop.f32.mrf.mxu0
      %v2625 = vpop.f32.mrf.mxu0
      %v2626 = vpop.f32.mrf.mxu0
      %2627 = vdwg.mxu0
      %2628 = vrot.lane.b32.xlu0 %v1271, 96
      %v2629 = vpop.permute.xlu0 %2628
      %2630 = vrot.lane.b32.xlu0 %v1272, 96
      %v2631 = vpop.permute.xlu0 %2630
      %2632 = vrot.lane.b32.xlu0 %v1273, 96
      %v2633 = vpop.permute.xlu0 %2632
      %2634 = vrot.lane.b32.xlu0 %v1274, 96
      %v2635 = vpop.permute.xlu0 %2634
      %2636 = vrot.lane.b32.xlu0 %v1275, 96
      %v2637 = vpop.permute.xlu0 %2636
      %2638 = vrot.lane.b32.xlu0 %v1276, 96
      %v2639 = vpop.permute.xlu0 %2638
      %2640 = vrot.lane.b32.xlu0 %v1277, 96
      %v2641 = vpop.permute.xlu0 %2640
      %2642 = vrot.lane.b32.xlu0 %v1278, 96
      %v2643 = vpop.permute.xlu0 %2642
      %2644 = vrot.lane.b32.xlu0 %v1279, 96
      %v2645 = vpop.permute.xlu0 %2644
      %2646 = vrot.lane.b32.xlu0 %v1253, 32
      %v2647 = vpop.permute.xlu0 %2646
      %2648 = vrot.lane.b32.xlu0 %v1255, 32
      %v2649 = vpop.permute.xlu0 %2648
      %2650 = vrot.lane.b32.xlu0 %v1257, 32
      %v2651 = vpop.permute.xlu0 %2650
      %2652 = vrot.lane.b32.xlu0 %v1259, 32
      %v2653 = vpop.permute.xlu0 %2652
      %2654 = vrot.lane.b32.xlu0 %v1261, 32
      %v2655 = vpop.permute.xlu0 %2654
      %2656 = vrot.lane.b32.xlu0 %v1263, 32
      %v2657 = vpop.permute.xlu0 %2656
      %2658 = vrot.lane.b32.xlu0 %v1265, 32
      %v2659 = vpop.permute.xlu0 %2658
      %2660 = vrot.lane.b32.xlu0 %v1267, 32
      %v2661 = vpop.permute.xlu0 %2660
      %2662 = vrot.lane.b32.xlu0 %v1269, 32
      %v2663 = vpop.permute.xlu0 %2662
      %v2665 = vsel %vm1307, %v2629, 0
      %v2668 = vsel %vm1307, %v2631, 0
      %v2671 = vsel %vm1307, %v2633, 0
      %v2674 = vsel %vm1307, %v2635, 0
      %v2677 = vsel %vm1307, %v2637, 0
      %v2680 = vsel %vm1307, %v2639, 0
      %v2683 = vsel %vm1307, %v2641, 0
      %v2686 = vsel %vm1307, %v2643, 0
      %v2689 = vsel %vm1307, %v2645, 0
      %v2692 = vsel %vm1307, %v2647, 0
      %v2695 = vsel %vm1307, %v2649, 0
      %v2698 = vsel %vm1307, %v2651, 0
      %v2701 = vsel %vm1307, %v2653, 0
      %v2704 = vsel %vm1307, %v2655, 0
      %v2707 = vsel %vm1307, %v2657, 0
      %v2710 = vsel %vm1307, %v2659, 0
      %v2713 = vsel %vm1307, %v2661, 0
      %v2716 = vsel %vm1307, %v2663, 0
      %2718 = vmatprep.subr.bf16.mxu0 0
      %2719 = vmatpush1.bf16.xpose.msra.mxu0 %v2713
      %2720 = vmatprep.subr.bf16.mxu0 0
      %2721 = vmatpush1.bf16.xpose.msra.mxu0 %v2710
      %2722 = vmatprep.subr.bf16.mxu0 0
      %2723 = vmatpush1.bf16.xpose.msra.mxu0 %v2707
      %2724 = vmatprep.subr.bf16.mxu0 0
      %2725 = vmatpush1.bf16.xpose.msra.mxu0 %v2704
      %2726 = vmatprep.subr.bf16.mxu0 0
      %2727 = vmatpush1.bf16.xpose.msra.mxu0 %v2701
      %2728 = vmatprep.subr.bf16.mxu0 0
      %2729 = vmatpush1.bf16.xpose.msra.mxu0 %v2698
      %2730 = vmatprep.subr.bf16.mxu0 0
      %2731 = vmatpush1.bf16.xpose.msra.mxu0 %v2695
      %2732 = vmatprep.subr.bf16.mxu0 0
      %2733 = vmatpush1.bf16.xpose.msra.mxu0 %v2692
      %2734 = vmatprep.subr.bf16.mxu0 0
      %2735 = vmatpush2.bf16.xpose.msra.mxu0 0
      %2736 = vmatprep.subr.bf16.mxu0 0
      %2737 = vmatpush2.bf16.xpose.msra.mxu0 0
      %2738 = vmatprep.subr.bf16.mxu0 0
      %2739 = vmatpush2.bf16.xpose.msra.mxu0 0
      %2740 = vmatprep.subr.bf16.mxu0 0
      %2741 = vmatpush2.bf16.xpose.msra.mxu0 0
      %2742 = vmatprep.subr.bf16.mxu0 0
      %2743 = vmatpush2.bf16.xpose.msra.mxu0 0
      %2744 = vmatprep.subr.bf16.mxu0 0
      %2745 = vmatpush2.bf16.xpose.msra.mxu0 0
      %2746 = vmatprep.subr.bf16.mxu0 0
      %2747 = vmatpush2.bf16.xpose.msra.mxu0 0
      %2748 = vmatprep.subr.bf16.mxu0 0
      %2749 = vmatpush2.bf16.xpose.msra.mxu0 %v2716
      %2750 = vmatprep.mubr.bf16.mxu0 0
      %2751 = vmatmul.mubr.bf16.gmra.mxu0 %v2665
      %v2752 = vpop.f32.mrf.mxu0
      %v2753 = vadd.f32 0.0, %v2752
      %v2754 = vpop.f32.mrf.mxu0
      %v2755 = vadd.f32 0.0, %v2754
      %v2756 = vpop.f32.mrf.mxu0
      %v2757 = vadd.f32 0.0, %v2756
      %v2758 = vpop.f32.mrf.mxu0
      %v2759 = vadd.f32 0.0, %v2758
      %2760 = vmatprep.mubr.bf16.mxu0 0
      %2761 = vmatmul.mubr.bf16.gmra.mxu0 %v2668
      %v2762 = vpop.f32.mrf.mxu0
      %v2763 = vadd.f32 0.0, %v2762
      %v2764 = vpop.f32.mrf.mxu0
      %v2765 = vadd.f32 0.0, %v2764
      %v2766 = vpop.f32.mrf.mxu0
      %v2767 = vadd.f32 0.0, %v2766
      %v2768 = vpop.f32.mrf.mxu0
      %v2769 = vadd.f32 0.0, %v2768
      %2770 = vmatprep.mubr.bf16.mxu0 0
      %2771 = vmatmul.mubr.bf16.gmra.mxu0 %v2671
      %v2772 = vpop.f32.mrf.mxu0
      %v2773 = vadd.f32 0.0, %v2772
      %v2774 = vpop.f32.mrf.mxu0
      %v2775 = vadd.f32 0.0, %v2774
      %v2776 = vpop.f32.mrf.mxu0
      %v2777 = vadd.f32 0.0, %v2776
      %v2778 = vpop.f32.mrf.mxu0
      %v2779 = vadd.f32 0.0, %v2778
      %2780 = vmatprep.mubr.bf16.mxu0 0
      %2781 = vmatmul.mubr.bf16.gmra.mxu0 %v2674
      %v2782 = vpop.f32.mrf.mxu0
      %v2783 = vadd.f32 0.0, %v2782
      %v2784 = vpop.f32.mrf.mxu0
      %v2785 = vadd.f32 0.0, %v2784
      %v2786 = vpop.f32.mrf.mxu0
      %v2787 = vadd.f32 0.0, %v2786
      %v2788 = vpop.f32.mrf.mxu0
      %v2789 = vadd.f32 0.0, %v2788
      %2790 = vmatprep.mubr.bf16.mxu0 0
      %2791 = vmatmul.mubr.bf16.gmra.mxu0 %v2677
      %v2792 = vpop.f32.mrf.mxu0
      %v2793 = vadd.f32 0.0, %v2792
      %v2794 = vpop.f32.mrf.mxu0
      %v2795 = vadd.f32 0.0, %v2794
      %v2796 = vpop.f32.mrf.mxu0
      %v2797 = vadd.f32 0.0, %v2796
      %v2798 = vpop.f32.mrf.mxu0
      %v2799 = vadd.f32 0.0, %v2798
      %2800 = vmatprep.mubr.bf16.mxu0 0
      %2801 = vmatmul.mubr.bf16.gmra.mxu0 %v2680
      %v2802 = vpop.f32.mrf.mxu0
      %v2803 = vadd.f32 0.0, %v2802
      %v2804 = vpop.f32.mrf.mxu0
      %v2805 = vadd.f32 0.0, %v2804
      %v2806 = vpop.f32.mrf.mxu0
      %v2807 = vadd.f32 0.0, %v2806
      %v2808 = vpop.f32.mrf.mxu0
      %v2809 = vadd.f32 0.0, %v2808
      %2810 = vmatprep.mubr.bf16.mxu0 0
      %2811 = vmatmul.mubr.bf16.gmra.mxu0 %v2683
      %v2812 = vpop.f32.mrf.mxu0
      %v2813 = vadd.f32 0.0, %v2812
      %v2814 = vpop.f32.mrf.mxu0
      %v2815 = vadd.f32 0.0, %v2814
      %v2816 = vpop.f32.mrf.mxu0
      %v2817 = vadd.f32 0.0, %v2816
      %v2818 = vpop.f32.mrf.mxu0
      %v2819 = vadd.f32 0.0, %v2818
      %2820 = vmatprep.mubr.bf16.mxu0 0
      %2821 = vmatmul.mubr.bf16.gmra.mxu0 %v2686
      %v2822 = vpop.f32.mrf.mxu0
      %v2823 = vadd.f32 0.0, %v2822
      %v2824 = vpop.f32.mrf.mxu0
      %v2825 = vadd.f32 0.0, %v2824
      %v2826 = vpop.f32.mrf.mxu0
      %v2827 = vadd.f32 0.0, %v2826
      %v2828 = vpop.f32.mrf.mxu0
      %v2829 = vadd.f32 0.0, %v2828
      %2830 = vmatprep.mubr.bf16.mxu0 0
      %2831 = vmatmul.mubr.bf16.gmra.mxu0 %v2689
      %v2832 = vpop.f32.mrf.mxu0
      %v2833 = vadd.f32 0.0, %v2832
      %v2834 = vpop.f32.mrf.mxu0
      %v2835 = vadd.f32 0.0, %v2834
      %v2836 = vpop.f32.mrf.mxu0
      %v2837 = vpop.f32.mrf.mxu0
      %2838 = vdwg.mxu0
      %v2839 = vsel %vm1483, %v2755, -inf
      %v2840 = vmax.f32 %v2753, %v2839
      %2841 = vmax.xlane.f32.xlu0 %v2840
      %v2842 = vpop.xlane.xlu0 %2841
      %v2843 = vsel %vm1483, %v2759, -inf
      %v2844 = vmax.f32 %v2757, %v2843
      %2845 = vmax.xlane.f32.xlu0 %v2844
      %v2846 = vpop.xlane.xlu0 %2845
      %v2847 = vsel %vm1483, %v2765, -inf
      %v2848 = vmax.f32 %v2763, %v2847
      %2849 = vmax.xlane.f32.xlu0 %v2848
      %v2850 = vpop.xlane.xlu0 %2849
      %v2851 = vsel %vm1483, %v2769, -inf
      %v2852 = vmax.f32 %v2767, %v2851
      %2853 = vmax.xlane.f32.xlu0 %v2852
      %v2854 = vpop.xlane.xlu0 %2853
      %v2855 = vsel %vm1483, %v2775, -inf
      %v2856 = vmax.f32 %v2773, %v2855
      %2857 = vmax.xlane.f32.xlu0 %v2856
      %v2858 = vpop.xlane.xlu0 %2857
      %v2859 = vsel %vm1483, %v2779, -inf
      %v2860 = vmax.f32 %v2777, %v2859
      %2861 = vmax.xlane.f32.xlu0 %v2860
      %v2862 = vpop.xlane.xlu0 %2861
      %v2863 = vsel %vm1483, %v2785, -inf
      %v2864 = vmax.f32 %v2783, %v2863
      %2865 = vmax.xlane.f32.xlu0 %v2864
      %v2866 = vpop.xlane.xlu0 %2865
      %v2867 = vsel %vm1483, %v2789, -inf
      %v2868 = vmax.f32 %v2787, %v2867
      %2869 = vmax.xlane.f32.xlu0 %v2868
      %v2870 = vpop.xlane.xlu0 %2869
      %v2871 = vsel %vm1483, %v2795, -inf
      %v2872 = vmax.f32 %v2793, %v2871
      %2873 = vmax.xlane.f32.xlu0 %v2872
      %v2874 = vpop.xlane.xlu0 %2873
      %v2875 = vsel %vm1483, %v2799, -inf
      %v2876 = vmax.f32 %v2797, %v2875
      %2877 = vmax.xlane.f32.xlu0 %v2876
      %v2878 = vpop.xlane.xlu0 %2877
      %v2879 = vsel %vm1483, %v2805, -inf
      %v2880 = vmax.f32 %v2803, %v2879
      %2881 = vmax.xlane.f32.xlu0 %v2880
      %v2882 = vpop.xlane.xlu0 %2881
      %v2883 = vsel %vm1483, %v2809, -inf
      %v2884 = vmax.f32 %v2807, %v2883
      %2885 = vmax.xlane.f32.xlu0 %v2884
      %v2886 = vpop.xlane.xlu0 %2885
      %v2887 = vsel %vm1483, %v2815, -inf
      %v2888 = vmax.f32 %v2813, %v2887
      %2889 = vmax.xlane.f32.xlu0 %v2888
      %v2890 = vpop.xlane.xlu0 %2889
      %v2891 = vsel %vm1483, %v2819, -inf
      %v2892 = vmax.f32 %v2817, %v2891
      %2893 = vmax.xlane.f32.xlu0 %v2892
      %v2894 = vpop.xlane.xlu0 %2893
      %v2895 = vsel %vm1483, %v2825, -inf
      %v2896 = vmax.f32 %v2823, %v2895
      %2897 = vmax.xlane.f32.xlu0 %v2896
      %v2898 = vpop.xlane.xlu0 %2897
      %v2899 = vsel %vm1483, %v2829, -inf
      %v2900 = vmax.f32 %v2827, %v2899
      %2901 = vmax.xlane.f32.xlu0 %v2900
      %v2902 = vpop.xlane.xlu0 %2901
      %v2903 = vsel %vm1548, %v2833, -inf
      %v2904 = vsel %vm1550, %v2835, -inf
      %v2905 = vmax.f32 %v2903, %v2904
      %2906 = vmax.xlane.f32.xlu0 %v2905
      %v2907 = vpop.xlane.xlu0 %2906
      %v2908 = vsub.f32 %v2753, %v2842
      %v2909 = vsub.f32 %v2755, %v2842
      %v2910 = vsub.f32 %v2757, %v2846
      %v2911 = vsub.f32 %v2759, %v2846
      %v2912 = vsub.f32 %v2763, %v2850
      %v2913 = vsub.f32 %v2765, %v2850
      %v2914 = vsub.f32 %v2767, %v2854
      %v2915 = vsub.f32 %v2769, %v2854
      %v2916 = vsub.f32 %v2773, %v2858
      %v2917 = vsub.f32 %v2775, %v2858
      %v2918 = vsub.f32 %v2777, %v2862
      %v2919 = vsub.f32 %v2779, %v2862
      %v2920 = vsub.f32 %v2783, %v2866
      %v2921 = vsub.f32 %v2785, %v2866
      %v2922 = vsub.f32 %v2787, %v2870
      %v2923 = vsub.f32 %v2789, %v2870
      %v2924 = vsub.f32 %v2793, %v2874
      %v2925 = vsub.f32 %v2795, %v2874
      %v2926 = vsub.f32 %v2797, %v2878
      %v2927 = vsub.f32 %v2799, %v2878
      %v2928 = vsub.f32 %v2803, %v2882
      %v2929 = vsub.f32 %v2805, %v2882
      %v2930 = vsub.f32 %v2807, %v2886
      %v2931 = vsub.f32 %v2809, %v2886
      %v2932 = vsub.f32 %v2813, %v2890
      %v2933 = vsub.f32 %v2815, %v2890
      %v2934 = vsub.f32 %v2817, %v2894
      %v2935 = vsub.f32 %v2819, %v2894
      %v2936 = vsub.f32 %v2823, %v2898
      %v2937 = vsub.f32 %v2825, %v2898
      %v2938 = vsub.f32 %v2827, %v2902
      %v2939 = vsub.f32 %v2829, %v2902
      %v2940 = vsub.f32 %v2833, %v2907
      %v2941 = vsub.f32 %v2835, %v2907
      %v2942 = vmul.f32 %v2908, 1.442695
      %v2943 = vpow.pop %v2942
      %v2944 = vmul.f32 %v2909, 1.442695
      %v2945 = vpow.pop %v2944
      %v2946 = vmul.f32 %v2910, 1.442695
      %v2947 = vpow.pop %v2946
      %v2948 = vmul.f32 %v2911, 1.442695
      %v2949 = vpow.pop %v2948
      %v2950 = vmul.f32 %v2912, 1.442695
      %v2951 = vpow.pop %v2950
      %v2952 = vmul.f32 %v2913, 1.442695
      %v2953 = vpow.pop %v2952
      %v2954 = vmul.f32 %v2914, 1.442695
      %v2955 = vpow.pop %v2954
      %v2956 = vmul.f32 %v2915, 1.442695
      %v2957 = vpow.pop %v2956
      %v2958 = vmul.f32 %v2916, 1.442695
      %v2959 = vpow.pop %v2958
      %v2960 = vmul.f32 %v2917, 1.442695
      %v2961 = vpow.pop %v2960
      %v2962 = vmul.f32 %v2918, 1.442695
      %v2963 = vpow.pop %v2962
      %v2964 = vmul.f32 %v2919, 1.442695
      %v2965 = vpow.pop %v2964
      %v2966 = vmul.f32 %v2920, 1.442695
      %v2967 = vpow.pop %v2966
      %v2968 = vmul.f32 %v2921, 1.442695
      %v2969 = vpow.pop %v2968
      %v2970 = vmul.f32 %v2922, 1.442695
      %v2971 = vpow.pop %v2970
      %v2972 = vmul.f32 %v2923, 1.442695
      %v2973 = vpow.pop %v2972
      %v2974 = vmul.f32 %v2924, 1.442695
      %v2975 = vpow.pop %v2974
      %v2976 = vmul.f32 %v2925, 1.442695
      %v2977 = vpow.pop %v2976
      %v2978 = vmul.f32 %v2926, 1.442695
      %v2979 = vpow.pop %v2978
      %v2980 = vmul.f32 %v2927, 1.442695
      %v2981 = vpow.pop %v2980
      %v2982 = vmul.f32 %v2928, 1.442695
      %v2983 = vpow.pop %v2982
      %v2984 = vmul.f32 %v2929, 1.442695
      %v2985 = vpow.pop %v2984
      %v2986 = vmul.f32 %v2930, 1.442695
      %v2987 = vpow.pop %v2986
      %v2988 = vmul.f32 %v2931, 1.442695
      %v2989 = vpow.pop %v2988
      %v2990 = vmul.f32 %v2932, 1.442695
      %v2991 = vpow.pop %v2990
      %v2992 = vmul.f32 %v2933, 1.442695
      %v2993 = vpow.pop %v2992
      %v2994 = vmul.f32 %v2934, 1.442695
      %v2995 = vpow.pop %v2994
      %v2996 = vmul.f32 %v2935, 1.442695
      %v2997 = vpow.pop %v2996
      %v2998 = vmul.f32 %v2936, 1.442695
      %v2999 = vpow.pop %v2998
      %v3000 = vmul.f32 %v2937, 1.442695
      %v3001 = vpow.pop %v3000
      %v3002 = vmul.f32 %v2938, 1.442695
      %v3003 = vpow.pop %v3002
      %v3004 = vmul.f32 %v2939, 1.442695
      %v3005 = vpow.pop %v3004
      %v3006 = vmul.f32 %v2940, 1.442695
      %v3007 = vpow.pop %v3006
      %v3008 = vmul.f32 %v2941, 1.442695
      %v3009 = vpow.pop %v3008
      %v3010 = vsel %vm1483, %v2945, 0.0
      %v3011 = vadd.f32 %v2943, %v3010
      %3012 = vadd.xlane.f32.xlu0 %v3011
      %v3013 = vpop.xlane.xlu0 %3012
      %v3014 = vsel %vm1483, %v2949, 0.0
      %v3015 = vadd.f32 %v2947, %v3014
      %3016 = vadd.xlane.f32.xlu0 %v3015
      %v3017 = vpop.xlane.xlu0 %3016
      %v3018 = vsel %vm1483, %v2953, 0.0
      %v3019 = vadd.f32 %v2951, %v3018
      %3020 = vadd.xlane.f32.xlu0 %v3019
      %v3021 = vpop.xlane.xlu0 %3020
      %v3022 = vsel %vm1483, %v2957, 0.0
      %v3023 = vadd.f32 %v2955, %v3022
      %3024 = vadd.xlane.f32.xlu0 %v3023
      %v3025 = vpop.xlane.xlu0 %3024
      %v3026 = vsel %vm1483, %v2961, 0.0
      %v3027 = vadd.f32 %v2959, %v3026
      %3028 = vadd.xlane.f32.xlu0 %v3027
      %v3029 = vpop.xlane.xlu0 %3028
      %v3030 = vsel %vm1483, %v2965, 0.0
      %v3031 = vadd.f32 %v2963, %v3030
      %3032 = vadd.xlane.f32.xlu0 %v3031
      %v3033 = vpop.xlane.xlu0 %3032
      %v3034 = vsel %vm1483, %v2969, 0.0
      %v3035 = vadd.f32 %v2967, %v3034
      %3036 = vadd.xlane.f32.xlu0 %v3035
      %v3037 = vpop.xlane.xlu0 %3036
      %v3038 = vsel %vm1483, %v2973, 0.0
      %v3039 = vadd.f32 %v2971, %v3038
      %3040 = vadd.xlane.f32.xlu0 %v3039
      %v3041 = vpop.xlane.xlu0 %3040
      %v3042 = vsel %vm1483, %v2977, 0.0
      %v3043 = vadd.f32 %v2975, %v3042
      %3044 = vadd.xlane.f32.xlu0 %v3043
      %v3045 = vpop.xlane.xlu0 %3044
      %v3046 = vsel %vm1483, %v2981, 0.0
      %v3047 = vadd.f32 %v2979, %v3046
      %3048 = vadd.xlane.f32.xlu0 %v3047
      %v3049 = vpop.xlane.xlu0 %3048
      %v3050 = vsel %vm1483, %v2985, 0.0
      %v3051 = vadd.f32 %v2983, %v3050
      %3052 = vadd.xlane.f32.xlu0 %v3051
      %v3053 = vpop.xlane.xlu0 %3052
      %v3054 = vsel %vm1483, %v2989, 0.0
      %v3055 = vadd.f32 %v2987, %v3054
      %3056 = vadd.xlane.f32.xlu0 %v3055
      %v3057 = vpop.xlane.xlu0 %3056
      %v3058 = vsel %vm1483, %v2993, 0.0
      %v3059 = vadd.f32 %v2991, %v3058
      %3060 = vadd.xlane.f32.xlu0 %v3059
      %v3061 = vpop.xlane.xlu0 %3060
      %v3062 = vsel %vm1483, %v2997, 0.0
      %v3063 = vadd.f32 %v2995, %v3062
      %3064 = vadd.xlane.f32.xlu0 %v3063
      %v3065 = vpop.xlane.xlu0 %3064
      %v3066 = vsel %vm1483, %v3001, 0.0
      %v3067 = vadd.f32 %v2999, %v3066
      %3068 = vadd.xlane.f32.xlu0 %v3067
      %v3069 = vpop.xlane.xlu0 %3068
      %v3070 = vsel %vm1483, %v3005, 0.0
      %v3071 = vadd.f32 %v3003, %v3070
      %3072 = vadd.xlane.f32.xlu0 %v3071
      %v3073 = vpop.xlane.xlu0 %3072
      %v3074 = vsel %vm1548, %v3007, 0.0
      %v3075 = vsel %vm1550, %v3009, 0.0
      %v3076 = vadd.f32 %v3074, %v3075
      %3077 = vadd.xlane.f32.xlu0 %v3076
      %v3078 = vpop.xlane.xlu0 %3077
      %v3079 = vrcp.pop %v3013
      %v3080 = vrcp.pop %v3017
      %v3081 = vrcp.pop %v3021
      %v3082 = vrcp.pop %v3025
      %v3083 = vrcp.pop %v3029
      %v3084 = vrcp.pop %v3033
      %v3085 = vrcp.pop %v3037
      %v3086 = vrcp.pop %v3041
      %v3087 = vrcp.pop %v3045
      %v3088 = vrcp.pop %v3049
      %v3089 = vrcp.pop %v3053
      %v3090 = vrcp.pop %v3057
      %v3091 = vrcp.pop %v3061
      %v3092 = vrcp.pop %v3065
      %v3093 = vrcp.pop %v3069
      %v3094 = vrcp.pop %v3073
      %v3095 = vrcp.pop %v3078
      %v3096 = vmul.f32 %v2943, %v3079
      %v3097 = vmul.f32 %v2945, %v3079
      %v3098 = vmul.f32 %v2947, %v3080
      %v3099 = vmul.f32 %v2949, %v3080
      %v3100 = vmul.f32 %v2951, %v3081
      %v3101 = vmul.f32 %v2953, %v3081
      %v3102 = vmul.f32 %v2955, %v3082
      %v3103 = vmul.f32 %v2957, %v3082
      %v3104 = vmul.f32 %v2959, %v3083
      %v3105 = vmul.f32 %v2961, %v3083
      %v3106 = vmul.f32 %v2963, %v3084
      %v3107 = vmul.f32 %v2965, %v3084
      %v3108 = vmul.f32 %v2967, %v3085
      %v3109 = vmul.f32 %v2969, %v3085
      %v3110 = vmul.f32 %v2971, %v3086
      %v3111 = vmul.f32 %v2973, %v3086
      %v3112 = vmul.f32 %v2975, %v3087
      %v3113 = vmul.f32 %v2977, %v3087
      %v3114 = vmul.f32 %v2979, %v3088
      %v3115 = vmul.f32 %v2981, %v3088
      %v3116 = vmul.f32 %v2983, %v3089
      %v3117 = vmul.f32 %v2985, %v3089
      %v3118 = vmul.f32 %v2987, %v3090
      %v3119 = vmul.f32 %v2989, %v3090
      %v3120 = vmul.f32 %v2991, %v3091
      %v3121 = vmul.f32 %v2993, %v3091
      %v3122 = vmul.f32 %v2995, %v3092
      %v3123 = vmul.f32 %v2997, %v3092
      %v3124 = vmul.f32 %v2999, %v3093
      %v3125 = vmul.f32 %v3001, %v3093
      %v3126 = vmul.f32 %v3003, %v3094
      %v3127 = vmul.f32 %v3005, %v3094
      %v3128 = vmul.f32 %v3007, %v3095
      %v3129 = vmul.f32 %v3009, %v3095
      %v3130 = vpack.c.bf16 %v3098, %v3096
      %v3131 = vpack.c.bf16 %v3099, %v3097
      %v3132 = vpack.c.bf16 %v3102, %v3100
      %v3133 = vpack.c.bf16 %v3103, %v3101
      %v3134 = vpack.c.bf16 %v3106, %v3104
      %v3135 = vpack.c.bf16 %v3107, %v3105
      %v3136 = vpack.c.bf16 %v3110, %v3108
      %v3137 = vpack.c.bf16 %v3111, %v3109
      %v3138 = vpack.c.bf16 %v3114, %v3112
      %v3139 = vpack.c.bf16 %v3115, %v3113
      %v3140 = vpack.c.bf16 %v3118, %v3116
      %v3141 = vpack.c.bf16 %v3119, %v3117
      %v3142 = vpack.c.bf16 %v3122, %v3120
      %v3143 = vpack.c.bf16 %v3123, %v3121
      %v3144 = vpack.c.bf16 %v3126, %v3124
      %v3145 = vpack.c.bf16 %v3127, %v3125
      %v3146 = vpack.c.bf16 %v3128, %v3128
      %v3147 = vpack.c.bf16 %v3129, %v3129
      %3148 = vrot.lane.b32.xlu0 %v1254, 96
      %v3149 = vpop.permute.xlu0 %3148
      %3150 = vrot.lane.b32.xlu0 %v1256, 96
      %v3151 = vpop.permute.xlu0 %3150
      %3152 = vrot.lane.b32.xlu0 %v1258, 96
      %v3153 = vpop.permute.xlu0 %3152
      %3154 = vrot.lane.b32.xlu0 %v1260, 96
      %v3155 = vpop.permute.xlu0 %3154
      %3156 = vrot.lane.b32.xlu0 %v1262, 96
      %v3157 = vpop.permute.xlu0 %3156
      %3158 = vrot.lane.b32.xlu0 %v1264, 96
      %v3159 = vpop.permute.xlu0 %3158
      %3160 = vrot.lane.b32.xlu0 %v1266, 96
      %v3161 = vpop.permute.xlu0 %3160
      %3162 = vrot.lane.b32.xlu0 %v1268, 96
      %v3163 = vpop.permute.xlu0 %3162
      %3164 = vrot.lane.b32.xlu0 %v1270, 96
      %v3165 = vpop.permute.xlu0 %3164
      %v3175 = vsel %vm1483, %v3131, 0
      %v3178 = vsel %vm1483, %v3133, 0
      %v3181 = vsel %vm1483, %v3135, 0
      %v3184 = vsel %vm1483, %v3137, 0
      %v3187 = vsel %vm1483, %v3139, 0
      %v3190 = vsel %vm1483, %v3141, 0
      %v3193 = vsel %vm1483, %v3143, 0
      %v3196 = vsel %vm1483, %v3145, 0
      %v3199 = vsel %vm1483, %v3147, 0
      %v3202 = vsel %vm1822, %v3165, 0
      %3204 = vmatprep.subr.bf16.mxu0 0
      %3205 = vmatpush1.bf16.msra.mxu0 %v3163
      %3206 = vmatprep.subr.bf16.mxu0 0
      %3207 = vmatpush1.bf16.msra.mxu0 %v3161
      %3208 = vmatprep.subr.bf16.mxu0 0
      %3209 = vmatpush1.bf16.msra.mxu0 %v3159
      %3210 = vmatprep.subr.bf16.mxu0 0
      %3211 = vmatpush1.bf16.msra.mxu0 %v3157
      %3212 = vmatprep.subr.bf16.mxu0 0
      %3213 = vmatpush1.bf16.msra.mxu0 %v3155
      %3214 = vmatprep.subr.bf16.mxu0 0
      %3215 = vmatpush1.bf16.msra.mxu0 %v3153
      %3216 = vmatprep.subr.bf16.mxu0 0
      %3217 = vmatpush1.bf16.msra.mxu0 %v3151
      %3218 = vmatprep.subr.bf16.mxu0 0
      %3219 = vmatpush1.bf16.msra.mxu0 %v3149
      %3220 = vmatprep.subr.bf16.mxu0 0
      %3221 = vmatpush2.bf16.msra.mxu0 0
      %3222 = vmatprep.subr.bf16.mxu0 0
      %3223 = vmatpush2.bf16.msra.mxu0 0
      %3224 = vmatprep.subr.bf16.mxu0 0
      %3225 = vmatpush2.bf16.msra.mxu0 0
      %3226 = vmatprep.subr.bf16.mxu0 0
      %3227 = vmatpush2.bf16.msra.mxu0 0
      %3228 = vmatprep.subr.bf16.mxu0 0
      %3229 = vmatpush2.bf16.msra.mxu0 0
      %3230 = vmatprep.subr.bf16.mxu0 0
      %3231 = vmatpush2.bf16.msra.mxu0 0
      %3232 = vmatprep.subr.bf16.mxu0 0
      %3233 = vmatpush2.bf16.msra.mxu0 0
      %3234 = vmatprep.subr.bf16.mxu0 0
      %3235 = vmatpush2.bf16.msra.mxu0 %v3202
      %3236 = vmatprep.mubr.bf16.mxu0 %v3175
      %3237 = vmatmul.mubr.bf16.gmra.mxu0 %v3130
      %v3238 = vpop.f32.mrf.mxu0
      %v3239 = vadd.f32 0.0, %v3238
      %v3240 = vpop.f32.mrf.mxu0
      %v3241 = vpop.f32.mrf.mxu0
      %v3242 = vadd.f32 0.0, %v3241
      %v3243 = vpop.f32.mrf.mxu0
      %3244 = vmatprep.mubr.bf16.mxu0 %v3178
      %3245 = vmatmul.mubr.bf16.gmra.mxu0 %v3132
      %v3246 = vpop.f32.mrf.mxu0
      %v3247 = vadd.f32 0.0, %v3246
      %v3248 = vpop.f32.mrf.mxu0
      %v3249 = vpop.f32.mrf.mxu0
      %v3250 = vadd.f32 0.0, %v3249
      %v3251 = vpop.f32.mrf.mxu0
      %3252 = vmatprep.mubr.bf16.mxu0 %v3181
      %3253 = vmatmul.mubr.bf16.gmra.mxu0 %v3134
      %v3254 = vpop.f32.mrf.mxu0
      %v3255 = vadd.f32 0.0, %v3254
      %v3256 = vpop.f32.mrf.mxu0
      %v3257 = vpop.f32.mrf.mxu0
      %v3258 = vadd.f32 0.0, %v3257
      %v3259 = vpop.f32.mrf.mxu0
      %3260 = vmatprep.mubr.bf16.mxu0 %v3184
      %3261 = vmatmul.mubr.bf16.gmra.mxu0 %v3136
      %v3262 = vpop.f32.mrf.mxu0
      %v3263 = vadd.f32 0.0, %v3262
      %v3264 = vpop.f32.mrf.mxu0
      %v3265 = vpop.f32.mrf.mxu0
      %v3266 = vadd.f32 0.0, %v3265
      %v3267 = vpop.f32.mrf.mxu0
      %3268 = vmatprep.mubr.bf16.mxu0 %v3187
      %3269 = vmatmul.mubr.bf16.gmra.mxu0 %v3138
      %v3270 = vpop.f32.mrf.mxu0
      %v3271 = vadd.f32 0.0, %v3270
      %v3272 = vpop.f32.mrf.mxu0
      %v3273 = vpop.f32.mrf.mxu0
      %v3274 = vadd.f32 0.0, %v3273
      %v3275 = vpop.f32.mrf.mxu0
      %3276 = vmatprep.mubr.bf16.mxu0 %v3190
      %3277 = vmatmul.mubr.bf16.gmra.mxu0 %v3140
      %v3278 = vpop.f32.mrf.mxu0
      %v3279 = vadd.f32 0.0, %v3278
      %v3280 = vpop.f32.mrf.mxu0
      %v3281 = vpop.f32.mrf.mxu0
      %v3282 = vadd.f32 0.0, %v3281
      %v3283 = vpop.f32.mrf.mxu0
      %3284 = vmatprep.mubr.bf16.mxu0 %v3193
      %3285 = vmatmul.mubr.bf16.gmra.mxu0 %v3142
      %v3286 = vpop.f32.mrf.mxu0
      %v3287 = vadd.f32 0.0, %v3286
      %v3288 = vpop.f32.mrf.mxu0
      %v3289 = vpop.f32.mrf.mxu0
      %v3290 = vadd.f32 0.0, %v3289
      %v3291 = vpop.f32.mrf.mxu0
      %3292 = vmatprep.mubr.bf16.mxu0 %v3196
      %3293 = vmatmul.mubr.bf16.gmra.mxu0 %v3144
      %v3294 = vpop.f32.mrf.mxu0
      %v3295 = vadd.f32 0.0, %v3294
      %v3296 = vpop.f32.mrf.mxu0
      %v3297 = vpop.f32.mrf.mxu0
      %v3298 = vadd.f32 0.0, %v3297
      %v3299 = vpop.f32.mrf.mxu0
      %3300 = vmatprep.mubr.bf16.mxu0 %v3199
      %3301 = vmatmul.mubr.bf16.gmra.mxu0 %v3146
      %v3302 = vpop.f32.mrf.mxu0
      %v3303 = vadd.f32 0.0, %v3302
      %v3304 = vpop.f32.mrf.mxu0
      %v3305 = vpop.f32.mrf.mxu0
      %v3306 = vpop.f32.mrf.mxu0
      %3307 = vdwg.mxu0
      %3308 = vrot.lane.b32.xlu0 %v1271, 80
      %v3309 = vpop.permute.xlu0 %3308
      %3310 = vrot.lane.b32.xlu0 %v1272, 80
      %v3311 = vpop.permute.xlu0 %3310
      %3312 = vrot.lane.b32.xlu0 %v1273, 80
      %v3313 = vpop.permute.xlu0 %3312
      %3314 = vrot.lane.b32.xlu0 %v1274, 80
      %v3315 = vpop.permute.xlu0 %3314
      %3316 = vrot.lane.b32.xlu0 %v1275, 80
      %v3317 = vpop.permute.xlu0 %3316
      %3318 = vrot.lane.b32.xlu0 %v1276, 80
      %v3319 = vpop.permute.xlu0 %3318
      %3320 = vrot.lane.b32.xlu0 %v1277, 80
      %v3321 = vpop.permute.xlu0 %3320
      %3322 = vrot.lane.b32.xlu0 %v1278, 80
      %v3323 = vpop.permute.xlu0 %3322
      %3324 = vrot.lane.b32.xlu0 %v1279, 80
      %v3325 = vpop.permute.xlu0 %3324
      %3326 = vrot.lane.b32.xlu0 %v1253, 16
      %v3327 = vpop.permute.xlu0 %3326
      %3328 = vrot.lane.b32.xlu0 %v1255, 16
      %v3329 = vpop.permute.xlu0 %3328
      %3330 = vrot.lane.b32.xlu0 %v1257, 16
      %v3331 = vpop.permute.xlu0 %3330
      %3332 = vrot.lane.b32.xlu0 %v1259, 16
      %v3333 = vpop.permute.xlu0 %3332
      %3334 = vrot.lane.b32.xlu0 %v1261, 16
      %v3335 = vpop.permute.xlu0 %3334
      %3336 = vrot.lane.b32.xlu0 %v1263, 16
      %v3337 = vpop.permute.xlu0 %3336
      %3338 = vrot.lane.b32.xlu0 %v1265, 16
      %v3339 = vpop.permute.xlu0 %3338
      %3340 = vrot.lane.b32.xlu0 %v1267, 16
      %v3341 = vpop.permute.xlu0 %3340
      %3342 = vrot.lane.b32.xlu0 %v1269, 16
      %v3343 = vpop.permute.xlu0 %3342
      %v3345 = vsel %vm1307, %v3309, 0
      %v3348 = vsel %vm1307, %v3311, 0
      %v3351 = vsel %vm1307, %v3313, 0
      %v3354 = vsel %vm1307, %v3315, 0
      %v3357 = vsel %vm1307, %v3317, 0
      %v3360 = vsel %vm1307, %v3319, 0
      %v3363 = vsel %vm1307, %v3321, 0
      %v3366 = vsel %vm1307, %v3323, 0
      %v3369 = vsel %vm1307, %v3325, 0
      %v3372 = vsel %vm1307, %v3327, 0
      %v3375 = vsel %vm1307, %v3329, 0
      %v3378 = vsel %vm1307, %v3331, 0
      %v3381 = vsel %vm1307, %v3333, 0
      %v3384 = vsel %vm1307, %v3335, 0
      %v3387 = vsel %vm1307, %v3337, 0
      %v3390 = vsel %vm1307, %v3339, 0
      %v3393 = vsel %vm1307, %v3341, 0
      %v3396 = vsel %vm1307, %v3343, 0
      %3398 = vmatprep.subr.bf16.mxu0 0
      %3399 = vmatpush1.bf16.xpose.msra.mxu0 %v3393
      %3400 = vmatprep.subr.bf16.mxu0 0
      %3401 = vmatpush1.bf16.xpose.msra.mxu0 %v3390
      %3402 = vmatprep.subr.bf16.mxu0 0
      %3403 = vmatpush1.bf16.xpose.msra.mxu0 %v3387
      %3404 = vmatprep.subr.bf16.mxu0 0
      %3405 = vmatpush1.bf16.xpose.msra.mxu0 %v3384
      %3406 = vmatprep.subr.bf16.mxu0 0
      %3407 = vmatpush1.bf16.xpose.msra.mxu0 %v3381
      %3408 = vmatprep.subr.bf16.mxu0 0
      %3409 = vmatpush1.bf16.xpose.msra.mxu0 %v3378
      %3410 = vmatprep.subr.bf16.mxu0 0
      %3411 = vmatpush1.bf16.xpose.msra.mxu0 %v3375
      %3412 = vmatprep.subr.bf16.mxu0 0
      %3413 = vmatpush1.bf16.xpose.msra.mxu0 %v3372
      %3414 = vmatprep.subr.bf16.mxu0 0
      %3415 = vmatpush2.bf16.xpose.msra.mxu0 0
      %3416 = vmatprep.subr.bf16.mxu0 0
      %3417 = vmatpush2.bf16.xpose.msra.mxu0 0
      %3418 = vmatprep.subr.bf16.mxu0 0
      %3419 = vmatpush2.bf16.xpose.msra.mxu0 0
      %3420 = vmatprep.subr.bf16.mxu0 0
      %3421 = vmatpush2.bf16.xpose.msra.mxu0 0
      %3422 = vmatprep.subr.bf16.mxu0 0
      %3423 = vmatpush2.bf16.xpose.msra.mxu0 0
      %3424 = vmatprep.subr.bf16.mxu0 0
      %3425 = vmatpush2.bf16.xpose.msra.mxu0 0
      %3426 = vmatprep.subr.bf16.mxu0 0
      %3427 = vmatpush2.bf16.xpose.msra.mxu0 0
      %3428 = vmatprep.subr.bf16.mxu0 0
      %3429 = vmatpush2.bf16.xpose.msra.mxu0 %v3396
      %3430 = vmatprep.mubr.bf16.mxu0 0
      %3431 = vmatmul.mubr.bf16.gmra.mxu0 %v3345
      %v3432 = vpop.f32.mrf.mxu0
      %v3433 = vadd.f32 0.0, %v3432
      %v3434 = vpop.f32.mrf.mxu0
      %v3435 = vadd.f32 0.0, %v3434
      %v3436 = vpop.f32.mrf.mxu0
      %v3437 = vadd.f32 0.0, %v3436
      %v3438 = vpop.f32.mrf.mxu0
      %v3439 = vadd.f32 0.0, %v3438
      %3440 = vmatprep.mubr.bf16.mxu0 0
      %3441 = vmatmul.mubr.bf16.gmra.mxu0 %v3348
      %v3442 = vpop.f32.mrf.mxu0
      %v3443 = vadd.f32 0.0, %v3442
      %v3444 = vpop.f32.mrf.mxu0
      %v3445 = vadd.f32 0.0, %v3444
      %v3446 = vpop.f32.mrf.mxu0
      %v3447 = vadd.f32 0.0, %v3446
      %v3448 = vpop.f32.mrf.mxu0
      %v3449 = vadd.f32 0.0, %v3448
      %3450 = vmatprep.mubr.bf16.mxu0 0
      %3451 = vmatmul.mubr.bf16.gmra.mxu0 %v3351
      %v3452 = vpop.f32.mrf.mxu0
      %v3453 = vadd.f32 0.0, %v3452
      %v3454 = vpop.f32.mrf.mxu0
      %v3455 = vadd.f32 0.0, %v3454
      %v3456 = vpop.f32.mrf.mxu0
      %v3457 = vadd.f32 0.0, %v3456
      %v3458 = vpop.f32.mrf.mxu0
      %v3459 = vadd.f32 0.0, %v3458
      %3460 = vmatprep.mubr.bf16.mxu0 0
      %3461 = vmatmul.mubr.bf16.gmra.mxu0 %v3354
      %v3462 = vpop.f32.mrf.mxu0
      %v3463 = vadd.f32 0.0, %v3462
      %v3464 = vpop.f32.mrf.mxu0
      %v3465 = vadd.f32 0.0, %v3464
      %v3466 = vpop.f32.mrf.mxu0
      %v3467 = vadd.f32 0.0, %v3466
      %v3468 = vpop.f32.mrf.mxu0
      %v3469 = vadd.f32 0.0, %v3468
      %3470 = vmatprep.mubr.bf16.mxu0 0
      %3471 = vmatmul.mubr.bf16.gmra.mxu0 %v3357
      %v3472 = vpop.f32.mrf.mxu0
      %v3473 = vadd.f32 0.0, %v3472
      %v3474 = vpop.f32.mrf.mxu0
      %v3475 = vadd.f32 0.0, %v3474
      %v3476 = vpop.f32.mrf.mxu0
      %v3477 = vadd.f32 0.0, %v3476
      %v3478 = vpop.f32.mrf.mxu0
      %v3479 = vadd.f32 0.0, %v3478
      %3480 = vmatprep.mubr.bf16.mxu0 0
      %3481 = vmatmul.mubr.bf16.gmra.mxu0 %v3360
      %v3482 = vpop.f32.mrf.mxu0
      %v3483 = vadd.f32 0.0, %v3482
      %v3484 = vpop.f32.mrf.mxu0
      %v3485 = vadd.f32 0.0, %v3484
      %v3486 = vpop.f32.mrf.mxu0
      %v3487 = vadd.f32 0.0, %v3486
      %v3488 = vpop.f32.mrf.mxu0
      %v3489 = vadd.f32 0.0, %v3488
      %3490 = vmatprep.mubr.bf16.mxu0 0
      %3491 = vmatmul.mubr.bf16.gmra.mxu0 %v3363
      %v3492 = vpop.f32.mrf.mxu0
      %v3493 = vadd.f32 0.0, %v3492
      %v3494 = vpop.f32.mrf.mxu0
      %v3495 = vadd.f32 0.0, %v3494
      %v3496 = vpop.f32.mrf.mxu0
      %v3497 = vadd.f32 0.0, %v3496
      %v3498 = vpop.f32.mrf.mxu0
      %v3499 = vadd.f32 0.0, %v3498
      %3500 = vmatprep.mubr.bf16.mxu0 0
      %3501 = vmatmul.mubr.bf16.gmra.mxu0 %v3366
      %v3502 = vpop.f32.mrf.mxu0
      %v3503 = vadd.f32 0.0, %v3502
      %v3504 = vpop.f32.mrf.mxu0
      %v3505 = vadd.f32 0.0, %v3504
      %v3506 = vpop.f32.mrf.mxu0
      %v3507 = vadd.f32 0.0, %v3506
      %v3508 = vpop.f32.mrf.mxu0
      %v3509 = vadd.f32 0.0, %v3508
      %3510 = vmatprep.mubr.bf16.mxu0 0
      %3511 = vmatmul.mubr.bf16.gmra.mxu0 %v3369
      %v3512 = vpop.f32.mrf.mxu0
      %v3513 = vadd.f32 0.0, %v3512
      %v3514 = vpop.f32.mrf.mxu0
      %v3515 = vadd.f32 0.0, %v3514
      %v3516 = vpop.f32.mrf.mxu0
      %v3517 = vpop.f32.mrf.mxu0
      %3518 = vdwg.mxu0
      %v3519 = vsel %vm1483, %v3435, -inf
      %v3520 = vmax.f32 %v3433, %v3519
      %3521 = vmax.xlane.f32.xlu0 %v3520
      %v3522 = vpop.xlane.xlu0 %3521
      %v3523 = vsel %vm1483, %v3439, -inf
      %v3524 = vmax.f32 %v3437, %v3523
      %3525 = vmax.xlane.f32.xlu0 %v3524
      %v3526 = vpop.xlane.xlu0 %3525
      %v3527 = vsel %vm1483, %v3445, -inf
      %v3528 = vmax.f32 %v3443, %v3527
      %3529 = vmax.xlane.f32.xlu0 %v3528
      %v3530 = vpop.xlane.xlu0 %3529
      %v3531 = vsel %vm1483, %v3449, -inf
      %v3532 = vmax.f32 %v3447, %v3531
      %3533 = vmax.xlane.f32.xlu0 %v3532
      %v3534 = vpop.xlane.xlu0 %3533
      %v3535 = vsel %vm1483, %v3455, -inf
      %v3536 = vmax.f32 %v3453, %v3535
      %3537 = vmax.xlane.f32.xlu0 %v3536
      %v3538 = vpop.xlane.xlu0 %3537
      %v3539 = vsel %vm1483, %v3459, -inf
      %v3540 = vmax.f32 %v3457, %v3539
      %3541 = vmax.xlane.f32.xlu0 %v3540
      %v3542 = vpop.xlane.xlu0 %3541
      %v3543 = vsel %vm1483, %v3465, -inf
      %v3544 = vmax.f32 %v3463, %v3543
      %3545 = vmax.xlane.f32.xlu0 %v3544
      %v3546 = vpop.xlane.xlu0 %3545
      %v3547 = vsel %vm1483, %v3469, -inf
      %v3548 = vmax.f32 %v3467, %v3547
      %3549 = vmax.xlane.f32.xlu0 %v3548
      %v3550 = vpop.xlane.xlu0 %3549
      %v3551 = vsel %vm1483, %v3475, -inf
      %v3552 = vmax.f32 %v3473, %v3551
      %3553 = vmax.xlane.f32.xlu0 %v3552
      %v3554 = vpop.xlane.xlu0 %3553
      %v3555 = vsel %vm1483, %v3479, -inf
      %v3556 = vmax.f32 %v3477, %v3555
      %3557 = vmax.xlane.f32.xlu0 %v3556
      %v3558 = vpop.xlane.xlu0 %3557
      %v3559 = vsel %vm1483, %v3485, -inf
      %v3560 = vmax.f32 %v3483, %v3559
      %3561 = vmax.xlane.f32.xlu0 %v3560
      %v3562 = vpop.xlane.xlu0 %3561
      %v3563 = vsel %vm1483, %v3489, -inf
      %v3564 = vmax.f32 %v3487, %v3563
      %3565 = vmax.xlane.f32.xlu0 %v3564
      %v3566 = vpop.xlane.xlu0 %3565
      %v3567 = vsel %vm1483, %v3495, -inf
      %v3568 = vmax.f32 %v3493, %v3567
      %3569 = vmax.xlane.f32.xlu0 %v3568
      %v3570 = vpop.xlane.xlu0 %3569
      %v3571 = vsel %vm1483, %v3499, -inf
      %v3572 = vmax.f32 %v3497, %v3571
      %3573 = vmax.xlane.f32.xlu0 %v3572
      %v3574 = vpop.xlane.xlu0 %3573
      %v3575 = vsel %vm1483, %v3505, -inf
      %v3576 = vmax.f32 %v3503, %v3575
      %3577 = vmax.xlane.f32.xlu0 %v3576
      %v3578 = vpop.xlane.xlu0 %3577
      %v3579 = vsel %vm1483, %v3509, -inf
      %v3580 = vmax.f32 %v3507, %v3579
      %3581 = vmax.xlane.f32.xlu0 %v3580
      %v3582 = vpop.xlane.xlu0 %3581
      %v3583 = vsel %vm1548, %v3513, -inf
      %v3584 = vsel %vm1550, %v3515, -inf
      %v3585 = vmax.f32 %v3583, %v3584
      %3586 = vmax.xlane.f32.xlu0 %v3585
      %v3587 = vpop.xlane.xlu0 %3586
      %v3588 = vsub.f32 %v3433, %v3522
      %v3589 = vsub.f32 %v3435, %v3522
      %v3590 = vsub.f32 %v3437, %v3526
      %v3591 = vsub.f32 %v3439, %v3526
      %v3592 = vsub.f32 %v3443, %v3530
      %v3593 = vsub.f32 %v3445, %v3530
      %v3594 = vsub.f32 %v3447, %v3534
      %v3595 = vsub.f32 %v3449, %v3534
      %v3596 = vsub.f32 %v3453, %v3538
      %v3597 = vsub.f32 %v3455, %v3538
      %v3598 = vsub.f32 %v3457, %v3542
      %v3599 = vsub.f32 %v3459, %v3542
      %v3600 = vsub.f32 %v3463, %v3546
      %v3601 = vsub.f32 %v3465, %v3546
      %v3602 = vsub.f32 %v3467, %v3550
      %v3603 = vsub.f32 %v3469, %v3550
      %v3604 = vsub.f32 %v3473, %v3554
      %v3605 = vsub.f32 %v3475, %v3554
      %v3606 = vsub.f32 %v3477, %v3558
      %v3607 = vsub.f32 %v3479, %v3558
      %v3608 = vsub.f32 %v3483, %v3562
      %v3609 = vsub.f32 %v3485, %v3562
      %v3610 = vsub.f32 %v3487, %v3566
      %v3611 = vsub.f32 %v3489, %v3566
      %v3612 = vsub.f32 %v3493, %v3570
      %v3613 = vsub.f32 %v3495, %v3570
      %v3614 = vsub.f32 %v3497, %v3574
      %v3615 = vsub.f32 %v3499, %v3574
      %v3616 = vsub.f32 %v3503, %v3578
      %v3617 = vsub.f32 %v3505, %v3578
      %v3618 = vsub.f32 %v3507, %v3582
      %v3619 = vsub.f32 %v3509, %v3582
      %v3620 = vsub.f32 %v3513, %v3587
      %v3621 = vsub.f32 %v3515, %v3587
      %v3622 = vmul.f32 %v3588, 1.442695
      %v3623 = vpow.pop %v3622
      %v3624 = vmul.f32 %v3589, 1.442695
      %v3625 = vpow.pop %v3624
      %v3626 = vmul.f32 %v3590, 1.442695
      %v3627 = vpow.pop %v3626
      %v3628 = vmul.f32 %v3591, 1.442695
      %v3629 = vpow.pop %v3628
      %v3630 = vmul.f32 %v3592, 1.442695
      %v3631 = vpow.pop %v3630
      %v3632 = vmul.f32 %v3593, 1.442695
      %v3633 = vpow.pop %v3632
      %v3634 = vmul.f32 %v3594, 1.442695
      %v3635 = vpow.pop %v3634
      %v3636 = vmul.f32 %v3595, 1.442695
      %v3637 = vpow.pop %v3636
      %v3638 = vmul.f32 %v3596, 1.442695
      %v3639 = vpow.pop %v3638
      %v3640 = vmul.f32 %v3597, 1.442695
      %v3641 = vpow.pop %v3640
      %v3642 = vmul.f32 %v3598, 1.442695
      %v3643 = vpow.pop %v3642
      %v3644 = vmul.f32 %v3599, 1.442695
      %v3645 = vpow.pop %v3644
      %v3646 = vmul.f32 %v3600, 1.442695
      %v3647 = vpow.pop %v3646
      %v3648 = vmul.f32 %v3601, 1.442695
      %v3649 = vpow.pop %v3648
      %v3650 = vmul.f32 %v3602, 1.442695
      %v3651 = vpow.pop %v3650
      %v3652 = vmul.f32 %v3603, 1.442695
      %v3653 = vpow.pop %v3652
      %v3654 = vmul.f32 %v3604, 1.442695
      %v3655 = vpow.pop %v3654
      %v3656 = vmul.f32 %v3605, 1.442695
      %v3657 = vpow.pop %v3656
      %v3658 = vmul.f32 %v3606, 1.442695
      %v3659 = vpow.pop %v3658
      %v3660 = vmul.f32 %v3607, 1.442695
      %v3661 = vpow.pop %v3660
      %v3662 = vmul.f32 %v3608, 1.442695
      %v3663 = vpow.pop %v3662
      %v3664 = vmul.f32 %v3609, 1.442695
      %v3665 = vpow.pop %v3664
      %v3666 = vmul.f32 %v3610, 1.442695
      %v3667 = vpow.pop %v3666
      %v3668 = vmul.f32 %v3611, 1.442695
      %v3669 = vpow.pop %v3668
      %v3670 = vmul.f32 %v3612, 1.442695
      %v3671 = vpow.pop %v3670
      %v3672 = vmul.f32 %v3613, 1.442695
      %v3673 = vpow.pop %v3672
      %v3674 = vmul.f32 %v3614, 1.442695
      %v3675 = vpow.pop %v3674
      %v3676 = vmul.f32 %v3615, 1.442695
      %v3677 = vpow.pop %v3676
      %v3678 = vmul.f32 %v3616, 1.442695
      %v3679 = vpow.pop %v3678
      %v3680 = vmul.f32 %v3617, 1.442695
      %v3681 = vpow.pop %v3680
      %v3682 = vmul.f32 %v3618, 1.442695
      %v3683 = vpow.pop %v3682
      %v3684 = vmul.f32 %v3619, 1.442695
      %v3685 = vpow.pop %v3684
      %v3686 = vmul.f32 %v3620, 1.442695
      %v3687 = vpow.pop %v3686
      %v3688 = vmul.f32 %v3621, 1.442695
      %v3689 = vpow.pop %v3688
      %v3690 = vsel %vm1483, %v3625, 0.0
      %v3691 = vadd.f32 %v3623, %v3690
      %3692 = vadd.xlane.f32.xlu0 %v3691
      %v3693 = vpop.xlane.xlu0 %3692
      %v3694 = vsel %vm1483, %v3629, 0.0
      %v3695 = vadd.f32 %v3627, %v3694
      %3696 = vadd.xlane.f32.xlu0 %v3695
      %v3697 = vpop.xlane.xlu0 %3696
      %v3698 = vsel %vm1483, %v3633, 0.0
      %v3699 = vadd.f32 %v3631, %v3698
      %3700 = vadd.xlane.f32.xlu0 %v3699
      %v3701 = vpop.xlane.xlu0 %3700
      %v3702 = vsel %vm1483, %v3637, 0.0
      %v3703 = vadd.f32 %v3635, %v3702
      %3704 = vadd.xlane.f32.xlu0 %v3703
      %v3705 = vpop.xlane.xlu0 %3704
      %v3706 = vsel %vm1483, %v3641, 0.0
      %v3707 = vadd.f32 %v3639, %v3706
      %3708 = vadd.xlane.f32.xlu0 %v3707
      %v3709 = vpop.xlane.xlu0 %3708
      %v3710 = vsel %vm1483, %v3645, 0.0
      %v3711 = vadd.f32 %v3643, %v3710
      %3712 = vadd.xlane.f32.xlu0 %v3711
      %v3713 = vpop.xlane.xlu0 %3712
      %v3714 = vsel %vm1483, %v3649, 0.0
      %v3715 = vadd.f32 %v3647, %v3714
      %3716 = vadd.xlane.f32.xlu0 %v3715
      %v3717 = vpop.xlane.xlu0 %3716
      %v3718 = vsel %vm1483, %v3653, 0.0
      %v3719 = vadd.f32 %v3651, %v3718
      %3720 = vadd.xlane.f32.xlu0 %v3719
      %v3721 = vpop.xlane.xlu0 %3720
      %v3722 = vsel %vm1483, %v3657, 0.0
      %v3723 = vadd.f32 %v3655, %v3722
      %3724 = vadd.xlane.f32.xlu0 %v3723
      %v3725 = vpop.xlane.xlu0 %3724
      %v3726 = vsel %vm1483, %v3661, 0.0
      %v3727 = vadd.f32 %v3659, %v3726
      %3728 = vadd.xlane.f32.xlu0 %v3727
      %v3729 = vpop.xlane.xlu0 %3728
      %v3730 = vsel %vm1483, %v3665, 0.0
      %v3731 = vadd.f32 %v3663, %v3730
      %3732 = vadd.xlane.f32.xlu0 %v3731
      %v3733 = vpop.xlane.xlu0 %3732
      %v3734 = vsel %vm1483, %v3669, 0.0
      %v3735 = vadd.f32 %v3667, %v3734
      %3736 = vadd.xlane.f32.xlu0 %v3735
      %v3737 = vpop.xlane.xlu0 %3736
      %v3738 = vsel %vm1483, %v3673, 0.0
      %v3739 = vadd.f32 %v3671, %v3738
      %3740 = vadd.xlane.f32.xlu0 %v3739
      %v3741 = vpop.xlane.xlu0 %3740
      %v3742 = vsel %vm1483, %v3677, 0.0
      %v3743 = vadd.f32 %v3675, %v3742
      %3744 = vadd.xlane.f32.xlu0 %v3743
      %v3745 = vpop.xlane.xlu0 %3744
      %v3746 = vsel %vm1483, %v3681, 0.0
      %v3747 = vadd.f32 %v3679, %v3746
      %3748 = vadd.xlane.f32.xlu0 %v3747
      %v3749 = vpop.xlane.xlu0 %3748
      %v3750 = vsel %vm1483, %v3685, 0.0
      %v3751 = vadd.f32 %v3683, %v3750
      %3752 = vadd.xlane.f32.xlu0 %v3751
      %v3753 = vpop.xlane.xlu0 %3752
      %v3754 = vsel %vm1548, %v3687, 0.0
      %v3755 = vsel %vm1550, %v3689, 0.0
      %v3756 = vadd.f32 %v3754, %v3755
      %3757 = vadd.xlane.f32.xlu0 %v3756
      %v3758 = vpop.xlane.xlu0 %3757
      %v3759 = vrcp.pop %v3693
      %v3760 = vrcp.pop %v3697
      %v3761 = vrcp.pop %v3701
      %v3762 = vrcp.pop %v3705
      %v3763 = vrcp.pop %v3709
      %v3764 = vrcp.pop %v3713
      %v3765 = vrcp.pop %v3717
      %v3766 = vrcp.pop %v3721
      %v3767 = vrcp.pop %v3725
      %v3768 = vrcp.pop %v3729
      %v3769 = vrcp.pop %v3733
      %v3770 = vrcp.pop %v3737
      %v3771 = vrcp.pop %v3741
      %v3772 = vrcp.pop %v3745
      %v3773 = vrcp.pop %v3749
      %v3774 = vrcp.pop %v3753
      %v3775 = vrcp.pop %v3758
      %v3776 = vmul.f32 %v3623, %v3759
      %v3777 = vmul.f32 %v3625, %v3759
      %v3778 = vmul.f32 %v3627, %v3760
      %v3779 = vmul.f32 %v3629, %v3760
      %v3780 = vmul.f32 %v3631, %v3761
      %v3781 = vmul.f32 %v3633, %v3761
      %v3782 = vmul.f32 %v3635, %v3762
      %v3783 = vmul.f32 %v3637, %v3762
      %v3784 = vmul.f32 %v3639, %v3763
      %v3785 = vmul.f32 %v3641, %v3763
      %v3786 = vmul.f32 %v3643, %v3764
      %v3787 = vmul.f32 %v3645, %v3764
      %v3788 = vmul.f32 %v3647, %v3765
      %v3789 = vmul.f32 %v3649, %v3765
      %v3790 = vmul.f32 %v3651, %v3766
      %v3791 = vmul.f32 %v3653, %v3766
      %v3792 = vmul.f32 %v3655, %v3767
      %v3793 = vmul.f32 %v3657, %v3767
      %v3794 = vmul.f32 %v3659, %v3768
      %v3795 = vmul.f32 %v3661, %v3768
      %v3796 = vmul.f32 %v3663, %v3769
      %v3797 = vmul.f32 %v3665, %v3769
      %v3798 = vmul.f32 %v3667, %v3770
      %v3799 = vmul.f32 %v3669, %v3770
      %v3800 = vmul.f32 %v3671, %v3771
      %v3801 = vmul.f32 %v3673, %v3771
      %v3802 = vmul.f32 %v3675, %v3772
      %v3803 = vmul.f32 %v3677, %v3772
      %v3804 = vmul.f32 %v3679, %v3773
      %v3805 = vmul.f32 %v3681, %v3773
      %v3806 = vmul.f32 %v3683, %v3774
      %v3807 = vmul.f32 %v3685, %v3774
      %v3808 = vmul.f32 %v3687, %v3775
      %v3809 = vmul.f32 %v3689, %v3775
      %v3810 = vpack.c.bf16 %v3778, %v3776
      %v3811 = vpack.c.bf16 %v3779, %v3777
      %v3812 = vpack.c.bf16 %v3782, %v3780
      %v3813 = vpack.c.bf16 %v3783, %v3781
      %v3814 = vpack.c.bf16 %v3786, %v3784
      %v3815 = vpack.c.bf16 %v3787, %v3785
      %v3816 = vpack.c.bf16 %v3790, %v3788
      %v3817 = vpack.c.bf16 %v3791, %v3789
      %v3818 = vpack.c.bf16 %v3794, %v3792
      %v3819 = vpack.c.bf16 %v3795, %v3793
      %v3820 = vpack.c.bf16 %v3798, %v3796
      %v3821 = vpack.c.bf16 %v3799, %v3797
      %v3822 = vpack.c.bf16 %v3802, %v3800
      %v3823 = vpack.c.bf16 %v3803, %v3801
      %v3824 = vpack.c.bf16 %v3806, %v3804
      %v3825 = vpack.c.bf16 %v3807, %v3805
      %v3826 = vpack.c.bf16 %v3808, %v3808
      %v3827 = vpack.c.bf16 %v3809, %v3809
      %3828 = vrot.lane.b32.xlu0 %v1254, 80
      %v3829 = vpop.permute.xlu0 %3828
      %3830 = vrot.lane.b32.xlu0 %v1256, 80
      %v3831 = vpop.permute.xlu0 %3830
      %3832 = vrot.lane.b32.xlu0 %v1258, 80
      %v3833 = vpop.permute.xlu0 %3832
      %3834 = vrot.lane.b32.xlu0 %v1260, 80
      %v3835 = vpop.permute.xlu0 %3834
      %3836 = vrot.lane.b32.xlu0 %v1262, 80
      %v3837 = vpop.permute.xlu0 %3836
      %3838 = vrot.lane.b32.xlu0 %v1264, 80
      %v3839 = vpop.permute.xlu0 %3838
      %3840 = vrot.lane.b32.xlu0 %v1266, 80
      %v3841 = vpop.permute.xlu0 %3840
      %3842 = vrot.lane.b32.xlu0 %v1268, 80
      %v3843 = vpop.permute.xlu0 %3842
      %3844 = vrot.lane.b32.xlu0 %v1270, 80
      %v3845 = vpop.permute.xlu0 %3844
      %v3855 = vsel %vm1483, %v3811, 0
      %v3858 = vsel %vm1483, %v3813, 0
      %v3861 = vsel %vm1483, %v3815, 0
      %v3864 = vsel %vm1483, %v3817, 0
      %v3867 = vsel %vm1483, %v3819, 0
      %v3870 = vsel %vm1483, %v3821, 0
      %v3873 = vsel %vm1483, %v3823, 0
      %v3876 = vsel %vm1483, %v3825, 0
      %v3879 = vsel %vm1483, %v3827, 0
      %v3882 = vsel %vm1822, %v3845, 0
      %3884 = vmatprep.subr.bf16.mxu0 0
      %3885 = vmatpush1.bf16.msra.mxu0 %v3843
      %3886 = vmatprep.subr.bf16.mxu0 0
      %3887 = vmatpush1.bf16.msra.mxu0 %v3841
      %3888 = vmatprep.subr.bf16.mxu0 0
      %3889 = vmatpush1.bf16.msra.mxu0 %v3839
      %3890 = vmatprep.subr.bf16.mxu0 0
      %3891 = vmatpush1.bf16.msra.mxu0 %v3837
      %3892 = vmatprep.subr.bf16.mxu0 0
      %3893 = vmatpush1.bf16.msra.mxu0 %v3835
      %3894 = vmatprep.subr.bf16.mxu0 0
      %3895 = vmatpush1.bf16.msra.mxu0 %v3833
      %3896 = vmatprep.subr.bf16.mxu0 0
      %3897 = vmatpush1.bf16.msra.mxu0 %v3831
      %3898 = vmatprep.subr.bf16.mxu0 0
      %3899 = vmatpush1.bf16.msra.mxu0 %v3829
      %3900 = vmatprep.subr.bf16.mxu0 0
      %3901 = vmatpush2.bf16.msra.mxu0 0
      %3902 = vmatprep.subr.bf16.mxu0 0
      %3903 = vmatpush2.bf16.msra.mxu0 0
      %3904 = vmatprep.subr.bf16.mxu0 0
      %3905 = vmatpush2.bf16.msra.mxu0 0
      %3906 = vmatprep.subr.bf16.mxu0 0
      %3907 = vmatpush2.bf16.msra.mxu0 0
      %3908 = vmatprep.subr.bf16.mxu0 0
      %3909 = vmatpush2.bf16.msra.mxu0 0
      %3910 = vmatprep.subr.bf16.mxu0 0
      %3911 = vmatpush2.bf16.msra.mxu0 0
      %3912 = vmatprep.subr.bf16.mxu0 0
      %3913 = vmatpush2.bf16.msra.mxu0 0
      %3914 = vmatprep.subr.bf16.mxu0 0
      %3915 = vmatpush2.bf16.msra.mxu0 %v3882
      %3916 = vmatprep.mubr.bf16.mxu0 %v3855
      %3917 = vmatmul.mubr.bf16.gmra.mxu0 %v3810
      %v3918 = vpop.f32.mrf.mxu0
      %v3919 = vadd.f32 0.0, %v3918
      %v3920 = vpop.f32.mrf.mxu0
      %v3921 = vpop.f32.mrf.mxu0
      %v3922 = vadd.f32 0.0, %v3921
      %v3923 = vpop.f32.mrf.mxu0
      %3924 = vmatprep.mubr.bf16.mxu0 %v3858
      %3925 = vmatmul.mubr.bf16.gmra.mxu0 %v3812
      %v3926 = vpop.f32.mrf.mxu0
      %v3927 = vadd.f32 0.0, %v3926
      %v3928 = vpop.f32.mrf.mxu0
      %v3929 = vpop.f32.mrf.mxu0
      %v3930 = vadd.f32 0.0, %v3929
      %v3931 = vpop.f32.mrf.mxu0
      %3932 = vmatprep.mubr.bf16.mxu0 %v3861
      %3933 = vmatmul.mubr.bf16.gmra.mxu0 %v3814
      %v3934 = vpop.f32.mrf.mxu0
      %v3935 = vadd.f32 0.0, %v3934
      %v3936 = vpop.f32.mrf.mxu0
      %v3937 = vpop.f32.mrf.mxu0
      %v3938 = vadd.f32 0.0, %v3937
      %v3939 = vpop.f32.mrf.mxu0
      %3940 = vmatprep.mubr.bf16.mxu0 %v3864
      %3941 = vmatmul.mubr.bf16.gmra.mxu0 %v3816
      %v3942 = vpop.f32.mrf.mxu0
      %v3943 = vadd.f32 0.0, %v3942
      %v3944 = vpop.f32.mrf.mxu0
      %v3945 = vpop.f32.mrf.mxu0
      %v3946 = vadd.f32 0.0, %v3945
      %v3947 = vpop.f32.mrf.mxu0
      %3948 = vmatprep.mubr.bf16.mxu0 %v3867
      %3949 = vmatmul.mubr.bf16.gmra.mxu0 %v3818
      %v3950 = vpop.f32.mrf.mxu0
      %v3951 = vadd.f32 0.0, %v3950
      %v3952 = vpop.f32.mrf.mxu0
      %v3953 = vpop.f32.mrf.mxu0
      %v3954 = vadd.f32 0.0, %v3953
      %v3955 = vpop.f32.mrf.mxu0
      %3956 = vmatprep.mubr.bf16.mxu0 %v3870
      %3957 = vmatmul.mubr.bf16.gmra.mxu0 %v3820
      %v3958 = vpop.f32.mrf.mxu0
      %v3959 = vadd.f32 0.0, %v3958
      %v3960 = vpop.f32.mrf.mxu0
      %v3961 = vpop.f32.mrf.mxu0
      %v3962 = vadd.f32 0.0, %v3961
      %v3963 = vpop.f32.mrf.mxu0
      %3964 = vmatprep.mubr.bf16.mxu0 %v3873
      %3965 = vmatmul.mubr.bf16.gmra.mxu0 %v3822
      %v3966 = vpop.f32.mrf.mxu0
      %v3967 = vadd.f32 0.0, %v3966
      %v3968 = vpop.f32.mrf.mxu0
      %v3969 = vpop.f32.mrf.mxu0
      %v3970 = vadd.f32 0.0, %v3969
      %v3971 = vpop.f32.mrf.mxu0
      %3972 = vmatprep.mubr.bf16.mxu0 %v3876
      %3973 = vmatmul.mubr.bf16.gmra.mxu0 %v3824
      %v3974 = vpop.f32.mrf.mxu0
      %v3975 = vadd.f32 0.0, %v3974
      %v3976 = vpop.f32.mrf.mxu0
      %v3977 = vpop.f32.mrf.mxu0
      %v3978 = vadd.f32 0.0, %v3977
      %v3979 = vpop.f32.mrf.mxu0
      %3980 = vmatprep.mubr.bf16.mxu0 %v3879
      %3981 = vmatmul.mubr.bf16.gmra.mxu0 %v3826
      %v3982 = vpop.f32.mrf.mxu0
      %v3983 = vadd.f32 0.0, %v3982
      %v3984 = vpop.f32.mrf.mxu0
      %v3985 = vpop.f32.mrf.mxu0
      %v3986 = vpop.f32.mrf.mxu0
      %3987 = vdwg.mxu0
      %4005 = vrot.lane.b32.xlu0 %v2559, 16
      %v4006 = vpop.permute.xlu0 %4005
      %4007 = vrot.lane.b32.xlu0 %v2562, 16
      %v4008 = vpop.permute.xlu0 %4007
      %4009 = vrot.lane.b32.xlu0 %v2567, 16
      %v4010 = vpop.permute.xlu0 %4009
      %4011 = vrot.lane.b32.xlu0 %v2570, 16
      %v4012 = vpop.permute.xlu0 %4011
      %4013 = vrot.lane.b32.xlu0 %v2575, 16
      %v4014 = vpop.permute.xlu0 %4013
      %4015 = vrot.lane.b32.xlu0 %v2578, 16
      %v4016 = vpop.permute.xlu0 %4015
      %4017 = vrot.lane.b32.xlu0 %v2583, 16
      %v4018 = vpop.permute.xlu0 %4017
      %4019 = vrot.lane.b32.xlu0 %v2586, 16
      %v4020 = vpop.permute.xlu0 %4019
      %4021 = vrot.lane.b32.xlu0 %v2591, 16
      %v4022 = vpop.permute.xlu0 %4021
      %4023 = vrot.lane.b32.xlu0 %v2594, 16
      %v4024 = vpop.permute.xlu0 %4023
      %4025 = vrot.lane.b32.xlu0 %v2599, 16
      %v4026 = vpop.permute.xlu0 %4025
      %4027 = vrot.lane.b32.xlu0 %v2602, 16
      %v4028 = vpop.permute.xlu0 %4027
      %4029 = vrot.lane.b32.xlu0 %v2607, 16
      %v4030 = vpop.permute.xlu0 %4029
      %4031 = vrot.lane.b32.xlu0 %v2610, 16
      %v4032 = vpop.permute.xlu0 %4031
      %4033 = vrot.lane.b32.xlu0 %v2615, 16
      %v4034 = vpop.permute.xlu0 %4033
      %4035 = vrot.lane.b32.xlu0 %v2618, 16
      %v4036 = vpop.permute.xlu0 %4035
      %4037 = vrot.lane.b32.xlu0 %v2623, 16
      %v4038 = vpop.permute.xlu0 %4037
      %4073 = vrot.lane.b32.xlu0 %v3239, 32
      %v4074 = vpop.permute.xlu0 %4073
      %4075 = vrot.lane.b32.xlu0 %v3242, 32
      %v4076 = vpop.permute.xlu0 %4075
      %4077 = vrot.lane.b32.xlu0 %v3247, 32
      %v4078 = vpop.permute.xlu0 %4077
      %4079 = vrot.lane.b32.xlu0 %v3250, 32
      %v4080 = vpop.permute.xlu0 %4079
      %4081 = vrot.lane.b32.xlu0 %v3255, 32
      %v4082 = vpop.permute.xlu0 %4081
      %4083 = vrot.lane.b32.xlu0 %v3258, 32
      %v4084 = vpop.permute.xlu0 %4083
      %4085 = vrot.lane.b32.xlu0 %v3263, 32
      %v4086 = vpop.permute.xlu0 %4085
      %4087 = vrot.lane.b32.xlu0 %v3266, 32
      %v4088 = vpop.permute.xlu0 %4087
      %4089 = vrot.lane.b32.xlu0 %v3271, 32
      %v4090 = vpop.permute.xlu0 %4089
      %4091 = vrot.lane.b32.xlu0 %v3274, 32
      %v4092 = vpop.permute.xlu0 %4091
      %4093 = vrot.lane.b32.xlu0 %v3279, 32
      %v4094 = vpop.permute.xlu0 %4093
      %4095 = vrot.lane.b32.xlu0 %v3282, 32
      %v4096 = vpop.permute.xlu0 %4095
      %4097 = vrot.lane.b32.xlu0 %v3287, 32
      %v4098 = vpop.permute.xlu0 %4097
      %4099 = vrot.lane.b32.xlu0 %v3290, 32
      %v4100 = vpop.permute.xlu0 %4099
      %4101 = vrot.lane.b32.xlu0 %v3295, 32
      %v4102 = vpop.permute.xlu0 %4101
      %4103 = vrot.lane.b32.xlu0 %v3298, 32
      %v4104 = vpop.permute.xlu0 %4103
      %4105 = vrot.lane.b32.xlu0 %v3303, 32
      %v4106 = vpop.permute.xlu0 %4105
      %4141 = vrot.lane.b32.xlu0 %v3919, 48
      %v4142 = vpop.permute.xlu0 %4141
      %4143 = vrot.lane.b32.xlu0 %v3922, 48
      %v4144 = vpop.permute.xlu0 %4143
      %4145 = vrot.lane.b32.xlu0 %v3927, 48
      %v4146 = vpop.permute.xlu0 %4145
      %4147 = vrot.lane.b32.xlu0 %v3930, 48
      %v4148 = vpop.permute.xlu0 %4147
      %4149 = vrot.lane.b32.xlu0 %v3935, 48
      %v4150 = vpop.permute.xlu0 %4149
      %4151 = vrot.lane.b32.xlu0 %v3938, 48
      %v4152 = vpop.permute.xlu0 %4151
      %4153 = vrot.lane.b32.xlu0 %v3943, 48
      %v4154 = vpop.permute.xlu0 %4153
      %4155 = vrot.lane.b32.xlu0 %v3946, 48
      %v4156 = vpop.permute.xlu0 %4155
      %4157 = vrot.lane.b32.xlu0 %v3951, 48
      %v4158 = vpop.permute.xlu0 %4157
      %4159 = vrot.lane.b32.xlu0 %v3954, 48
      %v4160 = vpop.permute.xlu0 %4159
      %4161 = vrot.lane.b32.xlu0 %v3959, 48
      %v4162 = vpop.permute.xlu0 %4161
      %4163 = vrot.lane.b32.xlu0 %v3962, 48
      %v4164 = vpop.permute.xlu0 %4163
      %4165 = vrot.lane.b32.xlu0 %v3967, 48
      %v4166 = vpop.permute.xlu0 %4165
      %4167 = vrot.lane.b32.xlu0 %v3970, 48
      %v4168 = vpop.permute.xlu0 %4167
      %4169 = vrot.lane.b32.xlu0 %v3975, 48
      %v4170 = vpop.permute.xlu0 %4169
      %4171 = vrot.lane.b32.xlu0 %v3978, 48
      %v4172 = vpop.permute.xlu0 %4171
      %4173 = vrot.lane.b32.xlu0 %v3983, 48
      %v4174 = vpop.permute.xlu0 %4173
      %v4192 = vsel %vm1307, %v1861, %v4006
      %v4193 = vsel %vm1307, %v1864, %v4008
      %v4194 = vsel %vm1307, %v1869, %v4010
      %v4195 = vsel %vm1307, %v1872, %v4012
      %v4196 = vsel %vm1307, %v1877, %v4014
      %v4197 = vsel %vm1307, %v1880, %v4016
      %v4198 = vsel %vm1307, %v1885, %v4018
      %v4199 = vsel %vm1307, %v1888, %v4020
      %v4200 = vsel %vm1307, %v1893, %v4022
      %v4201 = vsel %vm1307, %v1896, %v4024
      %v4202 = vsel %vm1307, %v1901, %v4026
      %v4203 = vsel %vm1307, %v1904, %v4028
      %v4204 = vsel %vm1307, %v1909, %v4030
      %v4205 = vsel %vm1307, %v1912, %v4032
      %v4206 = vsel %vm1307, %v1917, %v4034
      %v4207 = vsel %vm1307, %v1920, %v4036
      %v4208 = vsel %vm1307, %v1925, %v4038
      %vm4209 = vcmask 261120
      %v4210 = vsel %vm4209, %v4192, %v4074
      %v4211 = vsel %vm4209, %v4193, %v4076
      %v4212 = vsel %vm4209, %v4194, %v4078
      %v4213 = vsel %vm4209, %v4195, %v4080
      %v4214 = vsel %vm4209, %v4196, %v4082
      %v4215 = vsel %vm4209, %v4197, %v4084
      %v4216 = vsel %vm4209, %v4198, %v4086
      %v4217 = vsel %vm4209, %v4199, %v4088
      %v4218 = vsel %vm4209, %v4200, %v4090
      %v4219 = vsel %vm4209, %v4201, %v4092
      %v4220 = vsel %vm4209, %v4202, %v4094
      %v4221 = vsel %vm4209, %v4203, %v4096
      %v4222 = vsel %vm4209, %v4204, %v4098
      %v4223 = vsel %vm4209, %v4205, %v4100
      %v4224 = vsel %vm4209, %v4206, %v4102
      %v4225 = vsel %vm4209, %v4207, %v4104
      %v4226 = vsel %vm4209, %v4208, %v4106
      %vm4227 = vcmask 392192
      %v4228 = vsel %vm4227, %v4210, %v4142
      %v4229 = vsel %vm4227, %v4211, %v4144
      %v4230 = vsel %vm4227, %v4212, %v4146
      %v4231 = vsel %vm4227, %v4213, %v4148
      %v4232 = vsel %vm4227, %v4214, %v4150
      %v4233 = vsel %vm4227, %v4215, %v4152
      %v4234 = vsel %vm4227, %v4216, %v4154
      %v4235 = vsel %vm4227, %v4217, %v4156
      %v4236 = vsel %vm4227, %v4218, %v4158
      %v4237 = vsel %vm4227, %v4219, %v4160
      %v4238 = vsel %vm4227, %v4220, %v4162
      %v4239 = vsel %vm4227, %v4221, %v4164
      %v4240 = vsel %vm4227, %v4222, %v4166
      %v4241 = vsel %vm4227, %v4223, %v4168
      %v4242 = vsel %vm4227, %v4224, %v4170
      %v4243 = vsel %vm4227, %v4225, %v4172
      %v4244 = vsel %vm4227, %v4226, %v4174
      %v4245 = vpack.c.bf16 %v4229, %v4228
      %v4246 = vpack.c.bf16 %v4231, %v4230
      %v4247 = vpack.c.bf16 %v4233, %v4232
      %v4248 = vpack.c.bf16 %v4235, %v4234
      %v4249 = vpack.c.bf16 %v4237, %v4236
      %v4250 = vpack.c.bf16 %v4239, %v4238
      %v4251 = vpack.c.bf16 %v4241, %v4240
      %v4252 = vpack.c.bf16 %v4243, %v4242
      %v4253 = vpack.c.bf16 %v4244, %v4244
      %v4254 = vld [vmem:[%s673] sm:$0xf]
      %v4255 = vld [vmem:[%s673 + $0x4] sm:$0xf]
      %v4256 = vld [vmem:[%s673 + $0x8] sm:$0xf]
      %v4257 = vld [vmem:[%s673 + $0xc] sm:$0xf]
      %v4258 = vld [vmem:[%s673 + $0x10] sm:$0xf]
      %v4259 = vld [vmem:[%s673 + $0x14] sm:$0xf]
      %v4260 = vld [vmem:[%s673 + $0x18] sm:$0xf]
      %v4261 = vld [vmem:[%s673 + $0x1c] sm:$0xf]
      %v4262 = vld [vmem:[%s676] sm:$0x1]
      %v4264 = vlaneseq
      %v4265 = vshrl.u32 %v4264, 7
      %v4266 = vsub.s32 0, %v4265
      %v4267 = vrot.slane %v4262, %v4266
      %v4277 = vunpack.c.l.b16 %v4254
      %v4278 = vunpack.c.l.b16 %v4255
      %v4279 = vunpack.c.l.b16 %v4256
      %v4280 = vunpack.c.l.b16 %v4257
      %v4281 = vunpack.c.l.b16 %v4258
      %v4282 = vunpack.c.l.b16 %v4259
      %v4283 = vunpack.c.l.b16 %v4260
      %v4284 = vunpack.c.l.b16 %v4261
      %v4285 = vpack.c.b16 %v4278, %v4277
      %v4286 = vpack.c.b16 %v4280, %v4279
      %v4287 = vpack.c.b16 %v4282, %v4281
      %v4288 = vpack.c.b16 %v4284, %v4283
      %v4294 = vsel %vm766, %v4245, 0
      %v4297 = vsel %vm766, %v4246, 0
      %v4300 = vsel %vm766, %v4247, 0
      %v4303 = vsel %vm766, %v4248, 0
      %v4306 = vsel %vm766, %v4249, 0
      %v4309 = vsel %vm766, %v4250, 0
      %v4312 = vsel %vm766, %v4251, 0
      %v4315 = vsel %vm766, %v4252, 0
      %v4318 = vsel %vm766, %v4253, 0
      %4320 = vmatprep.subr.bf16.mxu0 0
      %4321 = vmatpush1.bf16.msra.mxu0 0
      %4322 = vmatprep.subr.bf16.mxu0 0
      %4323 = vmatpush1.bf16.msra.mxu0 0
      %4324 = vmatprep.subr.bf16.mxu0 0
      %4325 = vmatpush1.bf16.msra.mxu0 0
      %4326 = vmatprep.subr.bf16.mxu0 0
      %4327 = vmatpush1.bf16.msra.mxu0 0
      %4328 = vmatprep.subr.bf16.mxu0 0
      %4329 = vmatpush1.bf16.msra.mxu0 %v4288
      %4330 = vmatprep.subr.bf16.mxu0 0
      %4331 = vmatpush1.bf16.msra.mxu0 %v4287
      %4332 = vmatprep.subr.bf16.mxu0 0
      %4333 = vmatpush1.bf16.msra.mxu0 %v4286
      %4334 = vmatprep.subr.bf16.mxu0 0
      %4335 = vmatpush1.bf16.msra.mxu0 %v4285
      %4336 = vmatprep.subr.bf16.mxu0 0
      %4337 = vmatpush2.bf16.msra.mxu0 0
      %4338 = vmatprep.subr.bf16.mxu0 0
      %4339 = vmatpush2.bf16.msra.mxu0 0
      %4340 = vmatprep.subr.bf16.mxu0 0
      %4341 = vmatpush2.bf16.msra.mxu0 0
      %4342 = vmatprep.subr.bf16.mxu0 0
      %4343 = vmatpush2.bf16.msra.mxu0 0
      %4344 = vmatprep.subr.bf16.mxu0 0
      %4345 = vmatpush2.bf16.msra.mxu0 0
      %4346 = vmatprep.subr.bf16.mxu0 0
      %4347 = vmatpush2.bf16.msra.mxu0 0
      %4348 = vmatprep.subr.bf16.mxu0 0
      %4349 = vmatpush2.bf16.msra.mxu0 0
      %4350 = vmatprep.subr.bf16.mxu0 0
      %4351 = vmatpush2.bf16.msra.mxu0 0
      %4352 = vmatprep.mubr.bf16.mxu0 0
      %4353 = vmatmul.mubr.bf16.gmra.mxu0 %v4294
      %v4354 = vpop.f32.mrf.mxu0
      %v4355 = vadd.f32 %v4267, %v4354
      %v4356 = vpop.f32.mrf.mxu0
      %v4357 = vpop.f32.mrf.mxu0
      %v4358 = vadd.f32 %v4267, %v4357
      %v4359 = vpop.f32.mrf.mxu0
      %4360 = vmatprep.mubr.bf16.mxu0 0
      %4361 = vmatmul.mubr.bf16.gmra.mxu0 %v4297
      %v4362 = vpop.f32.mrf.mxu0
      %v4363 = vadd.f32 %v4267, %v4362
      %v4364 = vpop.f32.mrf.mxu0
      %v4365 = vpop.f32.mrf.mxu0
      %v4366 = vadd.f32 %v4267, %v4365
      %v4367 = vpop.f32.mrf.mxu0
      %4368 = vmatprep.mubr.bf16.mxu0 0
      %4369 = vmatmul.mubr.bf16.gmra.mxu0 %v4300
      %v4370 = vpop.f32.mrf.mxu0
      %v4371 = vadd.f32 %v4267, %v4370
      %v4372 = vpop.f32.mrf.mxu0
      %v4373 = vpop.f32.mrf.mxu0
      %v4374 = vadd.f32 %v4267, %v4373
      %v4375 = vpop.f32.mrf.mxu0
      %4376 = vmatprep.mubr.bf16.mxu0 0
      %4377 = vmatmul.mubr.bf16.gmra.mxu0 %v4303
      %v4378 = vpop.f32.mrf.mxu0
      %v4379 = vadd.f32 %v4267, %v4378
      %v4380 = vpop.f32.mrf.mxu0
      %v4381 = vpop.f32.mrf.mxu0
      %v4382 = vadd.f32 %v4267, %v4381
      %v4383 = vpop.f32.mrf.mxu0
      %4384 = vmatprep.mubr.bf16.mxu0 0
      %4385 = vmatmul.mubr.bf16.gmra.mxu0 %v4306
      %v4386 = vpop.f32.mrf.mxu0
      %v4387 = vadd.f32 %v4267, %v4386
      %v4388 = vpop.f32.mrf.mxu0
      %v4389 = vpop.f32.mrf.mxu0
      %v4390 = vadd.f32 %v4267, %v4389
      %v4391 = vpop.f32.mrf.mxu0
      %4392 = vmatprep.mubr.bf16.mxu0 0
      %4393 = vmatmul.mubr.bf16.gmra.mxu0 %v4309
      %v4394 = vpop.f32.mrf.mxu0
      %v4395 = vadd.f32 %v4267, %v4394
      %v4396 = vpop.f32.mrf.mxu0
      %v4397 = vpop.f32.mrf.mxu0
      %v4398 = vadd.f32 %v4267, %v4397
      %v4399 = vpop.f32.mrf.mxu0
      %4400 = vmatprep.mubr.bf16.mxu0 0
      %4401 = vmatmul.mubr.bf16.gmra.mxu0 %v4312
      %v4402 = vpop.f32.mrf.mxu0
      %v4403 = vadd.f32 %v4267, %v4402
      %v4404 = vpop.f32.mrf.mxu0
      %v4405 = vpop.f32.mrf.mxu0
      %v4406 = vadd.f32 %v4267, %v4405
      %v4407 = vpop.f32.mrf.mxu0
      %4408 = vmatprep.mubr.bf16.mxu0 0
      %4409 = vmatmul.mubr.bf16.gmra.mxu0 %v4315
      %v4410 = vpop.f32.mrf.mxu0
      %v4411 = vadd.f32 %v4267, %v4410
      %v4412 = vpop.f32.mrf.mxu0
      %v4413 = vpop.f32.mrf.mxu0
      %v4414 = vadd.f32 %v4267, %v4413
      %v4415 = vpop.f32.mrf.mxu0
      %4416 = vmatprep.mubr.bf16.mxu0 0
      %4417 = vmatmul.mubr.bf16.gmra.mxu0 %v4318
      %v4418 = vpop.f32.mrf.mxu0
      %v4419 = vadd.f32 %v4267, %v4418
      %v4420 = vpop.f32.mrf.mxu0
      %v4421 = vpop.f32.mrf.mxu0
      %v4422 = vpop.f32.mrf.mxu0
      %4423 = vdwg.mxu0
      %v4424 = vadd.f32 %v747, %v4355
      %v4425 = vadd.f32 %v748, %v4358
      %v4426 = vadd.f32 %v749, %v4363
      %v4427 = vadd.f32 %v750, %v4366
      %v4428 = vadd.f32 %v751, %v4371
      %v4429 = vadd.f32 %v752, %v4374
      %v4430 = vadd.f32 %v753, %v4379
      %v4431 = vadd.f32 %v754, %v4382
      %v4432 = vadd.f32 %v755, %v4387
      %v4433 = vadd.f32 %v756, %v4390
      %v4434 = vadd.f32 %v757, %v4395
      %v4435 = vadd.f32 %v758, %v4398
      %v4436 = vadd.f32 %v759, %v4403
      %v4437 = vadd.f32 %v760, %v4406
      %v4438 = vadd.f32 %v761, %v4411
      %v4439 = vadd.f32 %v762, %v4414
      %v4440 = vadd.f32 %v763, %v4419
      %v4441 = vld [vmem:[%s679] sm:$0x1]
      %v4442 = vld [vmem:[%s682] sm:$0x1]
      %v4443 = vsel %vm766, %v4424, 0.0
      %4444 = vadd.xlane.f32.xlu0 %v4443
      %v4445 = vpop.xlane.xlu0 %4444
      %v4446 = vsel %vm766, %v4425, 0.0
      %4447 = vadd.xlane.f32.xlu0 %v4446
      %v4448 = vpop.xlane.xlu0 %4447
      %v4449 = vsel %vm766, %v4426, 0.0
      %4450 = vadd.xlane.f32.xlu0 %v4449
      %v4451 = vpop.xlane.xlu0 %4450
      %v4452 = vsel %vm766, %v4427, 0.0
      %4453 = vadd.xlane.f32.xlu0 %v4452
      %v4454 = vpop.xlane.xlu0 %4453
      %v4455 = vsel %vm766, %v4428, 0.0
      %4456 = vadd.xlane.f32.xlu0 %v4455
      %v4457 = vpop.xlane.xlu0 %4456
      %v4458 = vsel %vm766, %v4429, 0.0
      %4459 = vadd.xlane.f32.xlu0 %v4458
      %v4460 = vpop.xlane.xlu0 %4459
      %v4461 = vsel %vm766, %v4430, 0.0
      %4462 = vadd.xlane.f32.xlu0 %v4461
      %v4463 = vpop.xlane.xlu0 %4462
      %v4464 = vsel %vm766, %v4431, 0.0
      %4465 = vadd.xlane.f32.xlu0 %v4464
      %v4466 = vpop.xlane.xlu0 %4465
      %v4467 = vsel %vm766, %v4432, 0.0
      %4468 = vadd.xlane.f32.xlu0 %v4467
      %v4469 = vpop.xlane.xlu0 %4468
      %v4470 = vsel %vm766, %v4433, 0.0
      %4471 = vadd.xlane.f32.xlu0 %v4470
      %v4472 = vpop.xlane.xlu0 %4471
      %v4473 = vsel %vm766, %v4434, 0.0
      %4474 = vadd.xlane.f32.xlu0 %v4473
      %v4475 = vpop.xlane.xlu0 %4474
      %v4476 = vsel %vm766, %v4435, 0.0
      %4477 = vadd.xlane.f32.xlu0 %v4476
      %v4478 = vpop.xlane.xlu0 %4477
      %v4479 = vsel %vm766, %v4436, 0.0
      %4480 = vadd.xlane.f32.xlu0 %v4479
      %v4481 = vpop.xlane.xlu0 %4480
      %v4482 = vsel %vm766, %v4437, 0.0
      %4483 = vadd.xlane.f32.xlu0 %v4482
      %v4484 = vpop.xlane.xlu0 %4483
      %v4485 = vsel %vm766, %v4438, 0.0
      %4486 = vadd.xlane.f32.xlu0 %v4485
      %v4487 = vpop.xlane.xlu0 %4486
      %v4488 = vsel %vm766, %v4439, 0.0
      %4489 = vadd.xlane.f32.xlu0 %v4488
      %v4490 = vpop.xlane.xlu0 %4489
      %v4491 = vsel %vm815, %v4440, 0.0
      %4492 = vadd.xlane.f32.xlu0 %v4491
      %v4493 = vpop.xlane.xlu0 %4492
      %v4494 = vmul.f32 %v4445, %v819
      %v4495 = vmul.f32 %v4448, %v819
      %v4496 = vmul.f32 %v4451, %v819
      %v4497 = vmul.f32 %v4454, %v819
      %v4498 = vmul.f32 %v4457, %v819
      %v4499 = vmul.f32 %v4460, %v819
      %v4500 = vmul.f32 %v4463, %v819
      %v4501 = vmul.f32 %v4466, %v819
      %v4502 = vmul.f32 %v4469, %v819
      %v4503 = vmul.f32 %v4472, %v819
      %v4504 = vmul.f32 %v4475, %v819
      %v4505 = vmul.f32 %v4478, %v819
      %v4506 = vmul.f32 %v4481, %v819
      %v4507 = vmul.f32 %v4484, %v819
      %v4508 = vmul.f32 %v4487, %v819
      %v4509 = vmul.f32 %v4490, %v819
      %v4510 = vmul.f32 %v4493, %v819
      %v4511 = vsub.f32 %v4424, %v4494
      %v4512 = vsub.f32 %v4425, %v4495
      %v4513 = vsub.f32 %v4426, %v4496
      %v4514 = vsub.f32 %v4427, %v4497
      %v4515 = vsub.f32 %v4428, %v4498
      %v4516 = vsub.f32 %v4429, %v4499
      %v4517 = vsub.f32 %v4430, %v4500
      %v4518 = vsub.f32 %v4431, %v4501
      %v4519 = vsub.f32 %v4432, %v4502
      %v4520 = vsub.f32 %v4433, %v4503
      %v4521 = vsub.f32 %v4434, %v4504
      %v4522 = vsub.f32 %v4435, %v4505
      %v4523 = vsub.f32 %v4436, %v4506
      %v4524 = vsub.f32 %v4437, %v4507
      %v4525 = vsub.f32 %v4438, %v4508
      %v4526 = vsub.f32 %v4439, %v4509
      %v4527 = vsub.f32 %v4440, %v4510
      %v4528 = vmul.f32 %v4511, %v4511
      %v4529 = vmul.f32 %v4512, %v4512
      %v4530 = vmul.f32 %v4513, %v4513
      %v4531 = vmul.f32 %v4514, %v4514
      %v4532 = vmul.f32 %v4515, %v4515
      %v4533 = vmul.f32 %v4516, %v4516
      %v4534 = vmul.f32 %v4517, %v4517
      %v4535 = vmul.f32 %v4518, %v4518
      %v4536 = vmul.f32 %v4519, %v4519
      %v4537 = vmul.f32 %v4520, %v4520
      %v4538 = vmul.f32 %v4521, %v4521
      %v4539 = vmul.f32 %v4522, %v4522
      %v4540 = vmul.f32 %v4523, %v4523
      %v4541 = vmul.f32 %v4524, %v4524
      %v4542 = vmul.f32 %v4525, %v4525
      %v4543 = vmul.f32 %v4526, %v4526
      %v4544 = vmul.f32 %v4527, %v4527
      %v4545 = vsel %vm766, %v4528, 0.0
      %4546 = vadd.xlane.f32.xlu0 %v4545
      %v4547 = vpop.xlane.xlu0 %4546
      %v4548 = vsel %vm766, %v4529, 0.0
      %4549 = vadd.xlane.f32.xlu0 %v4548
      %v4550 = vpop.xlane.xlu0 %4549
      %v4551 = vsel %vm766, %v4530, 0.0
      %4552 = vadd.xlane.f32.xlu0 %v4551
      %v4553 = vpop.xlane.xlu0 %4552
      %v4554 = vsel %vm766, %v4531, 0.0
      %4555 = vadd.xlane.f32.xlu0 %v4554
      %v4556 = vpop.xlane.xlu0 %4555
      %v4557 = vsel %vm766, %v4532, 0.0
      %4558 = vadd.xlane.f32.xlu0 %v4557
      %v4559 = vpop.xlane.xlu0 %4558
      %v4560 = vsel %vm766, %v4533, 0.0
      %4561 = vadd.xlane.f32.xlu0 %v4560
      %v4562 = vpop.xlane.xlu0 %4561
      %v4563 = vsel %vm766, %v4534, 0.0
      %4564 = vadd.xlane.f32.xlu0 %v4563
      %v4565 = vpop.xlane.xlu0 %4564
      %v4566 = vsel %vm766, %v4535, 0.0
      %4567 = vadd.xlane.f32.xlu0 %v4566
      %v4568 = vpop.xlane.xlu0 %4567
      %v4569 = vsel %vm766, %v4536, 0.0
      %4570 = vadd.xlane.f32.xlu0 %v4569
      %v4571 = vpop.xlane.xlu0 %4570
      %v4572 = vsel %vm766, %v4537, 0.0
      %4573 = vadd.xlane.f32.xlu0 %v4572
      %v4574 = vpop.xlane.xlu0 %4573
      %v4575 = vsel %vm766, %v4538, 0.0
      %4576 = vadd.xlane.f32.xlu0 %v4575
      %v4577 = vpop.xlane.xlu0 %4576
      %v4578 = vsel %vm766, %v4539, 0.0
      %4579 = vadd.xlane.f32.xlu0 %v4578
      %v4580 = vpop.xlane.xlu0 %4579
      %v4581 = vsel %vm766, %v4540, 0.0
      %4582 = vadd.xlane.f32.xlu0 %v4581
      %v4583 = vpop.xlane.xlu0 %4582
      %v4584 = vsel %vm766, %v4541, 0.0
      %4585 = vadd.xlane.f32.xlu0 %v4584
      %v4586 = vpop.xlane.xlu0 %4585
      %v4587 = vsel %vm766, %v4542, 0.0
      %4588 = vadd.xlane.f32.xlu0 %v4587
      %v4589 = vpop.xlane.xlu0 %4588
      %v4590 = vsel %vm766, %v4543, 0.0
      %4591 = vadd.xlane.f32.xlu0 %v4590
      %v4592 = vpop.xlane.xlu0 %4591
      %v4593 = vsel %vm815, %v4544, 0.0
      %4594 = vadd.xlane.f32.xlu0 %v4593
      %v4595 = vpop.xlane.xlu0 %4594
      %v4596 = vmul.f32 %v4547, %v819
      %v4597 = vmul.f32 %v4550, %v819
      %v4598 = vmul.f32 %v4553, %v819
      %v4599 = vmul.f32 %v4556, %v819
      %v4600 = vmul.f32 %v4559, %v819
      %v4601 = vmul.f32 %v4562, %v819
      %v4602 = vmul.f32 %v4565, %v819
      %v4603 = vmul.f32 %v4568, %v819
      %v4604 = vmul.f32 %v4571, %v819
      %v4605 = vmul.f32 %v4574, %v819
      %v4606 = vmul.f32 %v4577, %v819
      %v4607 = vmul.f32 %v4580, %v819
      %v4608 = vmul.f32 %v4583, %v819
      %v4609 = vmul.f32 %v4586, %v819
      %v4610 = vmul.f32 %v4589, %v819
      %v4611 = vmul.f32 %v4592, %v819
      %v4612 = vmul.f32 %v4595, %v819
      %v4613 = vadd.f32 %v4596, 1e-05
      %v4614 = vadd.f32 %v4597, 1e-05
      %v4615 = vadd.f32 %v4598, 1e-05
      %v4616 = vadd.f32 %v4599, 1e-05
      %v4617 = vadd.f32 %v4600, 1e-05
      %v4618 = vadd.f32 %v4601, 1e-05
      %v4619 = vadd.f32 %v4602, 1e-05
      %v4620 = vadd.f32 %v4603, 1e-05
      %v4621 = vadd.f32 %v4604, 1e-05
      %v4622 = vadd.f32 %v4605, 1e-05
      %v4623 = vadd.f32 %v4606, 1e-05
      %v4624 = vadd.f32 %v4607, 1e-05
      %v4625 = vadd.f32 %v4608, 1e-05
      %v4626 = vadd.f32 %v4609, 1e-05
      %v4627 = vadd.f32 %v4610, 1e-05
      %v4628 = vadd.f32 %v4611, 1e-05
      %v4629 = vadd.f32 %v4612, 1e-05
      %v4630 = vrsqrt.pop %v4613
      %v4631 = vrsqrt.pop %v4614
      %v4632 = vrsqrt.pop %v4615
      %v4633 = vrsqrt.pop %v4616
      %v4634 = vrsqrt.pop %v4617
      %v4635 = vrsqrt.pop %v4618
      %v4636 = vrsqrt.pop %v4619
      %v4637 = vrsqrt.pop %v4620
      %v4638 = vrsqrt.pop %v4621
      %v4639 = vrsqrt.pop %v4622
      %v4640 = vrsqrt.pop %v4623
      %v4641 = vrsqrt.pop %v4624
      %v4642 = vrsqrt.pop %v4625
      %v4643 = vrsqrt.pop %v4626
      %v4644 = vrsqrt.pop %v4627
      %v4645 = vrsqrt.pop %v4628
      %v4646 = vrsqrt.pop %v4629
      %v4647 = vmul.f32 %v4511, %v4630
      %v4648 = vmul.f32 %v4512, %v4631
      %v4649 = vmul.f32 %v4513, %v4632
      %v4650 = vmul.f32 %v4514, %v4633
      %v4651 = vmul.f32 %v4515, %v4634
      %v4652 = vmul.f32 %v4516, %v4635
      %v4653 = vmul.f32 %v4517, %v4636
      %v4654 = vmul.f32 %v4518, %v4637
      %v4655 = vmul.f32 %v4519, %v4638
      %v4656 = vmul.f32 %v4520, %v4639
      %v4657 = vmul.f32 %v4521, %v4640
      %v4658 = vmul.f32 %v4522, %v4641
      %v4659 = vmul.f32 %v4523, %v4642
      %v4660 = vmul.f32 %v4524, %v4643
      %v4661 = vmul.f32 %v4525, %v4644
      %v4662 = vmul.f32 %v4526, %v4645
      %v4663 = vmul.f32 %v4527, %v4646
      %v4665 = vlaneseq
      %v4666 = vshrl.u32 %v4665, 7
      %v4667 = vsub.s32 0, %v4666
      %v4668 = vrot.slane %v4441, %v4667
      %v4670 = vmul.f32 %v4647, %v4668
      %v4671 = vmul.f32 %v4648, %v4668
      %v4672 = vmul.f32 %v4649, %v4668
      %v4673 = vmul.f32 %v4650, %v4668
      %v4674 = vmul.f32 %v4651, %v4668
      %v4675 = vmul.f32 %v4652, %v4668
      %v4676 = vmul.f32 %v4653, %v4668
      %v4677 = vmul.f32 %v4654, %v4668
      %v4678 = vmul.f32 %v4655, %v4668
      %v4679 = vmul.f32 %v4656, %v4668
      %v4680 = vmul.f32 %v4657, %v4668
      %v4681 = vmul.f32 %v4658, %v4668
      %v4682 = vmul.f32 %v4659, %v4668
      %v4683 = vmul.f32 %v4660, %v4668
      %v4684 = vmul.f32 %v4661, %v4668
      %v4685 = vmul.f32 %v4662, %v4668
      %v4686 = vmul.f32 %v4663, %v4668
      %v4688 = vlaneseq
      %v4689 = vshrl.u32 %v4688, 7
      %v4690 = vsub.s32 0, %v4689
      %v4691 = vrot.slane %v4442, %v4690
      %v4693 = vadd.f32 %v4670, %v4691
      %v4694 = vadd.f32 %v4671, %v4691
      %v4695 = vadd.f32 %v4672, %v4691
      %v4696 = vadd.f32 %v4673, %v4691
      %v4697 = vadd.f32 %v4674, %v4691
      %v4698 = vadd.f32 %v4675, %v4691
      %v4699 = vadd.f32 %v4676, %v4691
      %v4700 = vadd.f32 %v4677, %v4691
      %v4701 = vadd.f32 %v4678, %v4691
      %v4702 = vadd.f32 %v4679, %v4691
      %v4703 = vadd.f32 %v4680, %v4691
      %v4704 = vadd.f32 %v4681, %v4691
      %v4705 = vadd.f32 %v4682, %v4691
      %v4706 = vadd.f32 %v4683, %v4691
      %v4707 = vadd.f32 %v4684, %v4691
      %v4708 = vadd.f32 %v4685, %v4691
      %v4709 = vadd.f32 %v4686, %v4691
      %v4710 = vpack.c.bf16 %v4694, %v4693
      %v4711 = vpack.c.bf16 %v4696, %v4695
      %v4712 = vpack.c.bf16 %v4698, %v4697
      %v4713 = vpack.c.bf16 %v4700, %v4699
      %v4714 = vpack.c.bf16 %v4702, %v4701
      %v4715 = vpack.c.bf16 %v4704, %v4703
      %v4716 = vpack.c.bf16 %v4706, %v4705
      %v4717 = vpack.c.bf16 %v4708, %v4707
      %v4718 = vpack.c.bf16 %v4709, %v4709
      %v4719 = vld [vmem:[%s687] sm:$0xff]
      %v4720 = vld [vmem:[%s687 + $0x8] sm:$0xff]
      %v4721 = vld [vmem:[%s687 + $0x10] sm:$0xff]
      %v4722 = vld [vmem:[%s687 + $0x18] sm:$0xff]
      %v4723 = vld [vmem:[%s687 + $0x20] sm:$0xff]
      %v4724 = vld [vmem:[%s687 + $0x28] sm:$0xff]
      %v4725 = vld [vmem:[%s687 + $0x30] sm:$0xff]
      %v4726 = vld [vmem:[%s687 + $0x38] sm:$0xff]
      %v4727 = vld [vmem:[%s691] sm:$0x3]
      %v4729 = vlaneseq
      %v4730 = vshrl.u32 %v4729, 7
      %v4731 = vsub.s32 0, %v4730
      %v4732 = vrot.slane %v4727, %v4731
      %v4733 = vlaneseq
      %v4734 = vshrl.u32 %v4733, 7
      %v4735 = vsub.s32 1, %v4734
      %v4736 = vrot.slane %v4727, %v4735
      %v4747 = vunpack.c.l.b16 %v4719
      %v4748 = vunpack.c.h.b16 %v4719
      %v4749 = vunpack.c.l.b16 %v4720
      %v4750 = vunpack.c.h.b16 %v4720
      %v4751 = vunpack.c.l.b16 %v4721
      %v4752 = vunpack.c.h.b16 %v4721
      %v4753 = vunpack.c.l.b16 %v4722
      %v4754 = vunpack.c.h.b16 %v4722
      %v4755 = vunpack.c.l.b16 %v4723
      %v4756 = vunpack.c.h.b16 %v4723
      %v4757 = vunpack.c.l.b16 %v4724
      %v4758 = vunpack.c.h.b16 %v4724
      %v4759 = vunpack.c.l.b16 %v4725
      %v4760 = vunpack.c.h.b16 %v4725
      %v4761 = vunpack.c.l.b16 %v4726
      %v4762 = vunpack.c.h.b16 %v4726
      %v4763 = vpack.c.b16 %v4749, %v4747
      %v4764 = vpack.c.b16 %v4750, %v4748
      %v4765 = vpack.c.b16 %v4753, %v4751
      %v4766 = vpack.c.b16 %v4754, %v4752
      %v4767 = vpack.c.b16 %v4757, %v4755
      %v4768 = vpack.c.b16 %v4758, %v4756
      %v4769 = vpack.c.b16 %v4761, %v4759
      %v4770 = vpack.c.b16 %v4762, %v4760
      %v4780 = vsel %vm766, %v4710, 0
      %v4783 = vsel %vm766, %v4711, 0
      %v4786 = vsel %vm766, %v4712, 0
      %v4789 = vsel %vm766, %v4713, 0
      %v4792 = vsel %vm766, %v4714, 0
      %v4795 = vsel %vm766, %v4715, 0
      %v4798 = vsel %vm766, %v4716, 0
      %v4801 = vsel %vm766, %v4717, 0
      %v4804 = vsel %vm766, %v4718, 0
      %4806 = vmatprep.subr.bf16.mxu0 0
      %4807 = vmatpush1.bf16.msra.mxu0 0
      %4808 = vmatprep.subr.bf16.mxu0 0
      %4809 = vmatpush1.bf16.msra.mxu0 0
      %4810 = vmatprep.subr.bf16.mxu0 0
      %4811 = vmatpush1.bf16.msra.mxu0 0
      %4812 = vmatprep.subr.bf16.mxu0 0
      %4813 = vmatpush1.bf16.msra.mxu0 0
      %4814 = vmatprep.subr.bf16.mxu0 %v4770
      %4815 = vmatpush1.bf16.msra.mxu0 %v4769
      %4816 = vmatprep.subr.bf16.mxu0 %v4768
      %4817 = vmatpush1.bf16.msra.mxu0 %v4767
      %4818 = vmatprep.subr.bf16.mxu0 %v4766
      %4819 = vmatpush1.bf16.msra.mxu0 %v4765
      %4820 = vmatprep.subr.bf16.mxu0 %v4764
      %4821 = vmatpush1.bf16.msra.mxu0 %v4763
      %4822 = vmatprep.subr.bf16.mxu0 0
      %4823 = vmatpush2.bf16.msra.mxu0 0
      %4824 = vmatprep.subr.bf16.mxu0 0
      %4825 = vmatpush2.bf16.msra.mxu0 0
      %4826 = vmatprep.subr.bf16.mxu0 0
      %4827 = vmatpush2.bf16.msra.mxu0 0
      %4828 = vmatprep.subr.bf16.mxu0 0
      %4829 = vmatpush2.bf16.msra.mxu0 0
      %4830 = vmatprep.subr.bf16.mxu0 0
      %4831 = vmatpush2.bf16.msra.mxu0 0
      %4832 = vmatprep.subr.bf16.mxu0 0
      %4833 = vmatpush2.bf16.msra.mxu0 0
      %4834 = vmatprep.subr.bf16.mxu0 0
      %4835 = vmatpush2.bf16.msra.mxu0 0
      %4836 = vmatprep.subr.bf16.mxu0 0
      %4837 = vmatpush2.bf16.msra.mxu0 0
      %4838 = vmatprep.mubr.bf16.mxu0 0
      %4839 = vmatmul.mubr.bf16.gmra.mxu0 %v4780
      %v4840 = vpop.f32.mrf.mxu0
      %v4841 = vadd.f32 %v4732, %v4840
      %v4842 = vpop.f32.mrf.mxu0
      %v4843 = vadd.f32 %v4736, %v4842
      %v4844 = vpop.f32.mrf.mxu0
      %v4845 = vadd.f32 %v4732, %v4844
      %v4846 = vpop.f32.mrf.mxu0
      %v4847 = vadd.f32 %v4736, %v4846
      %4848 = vmatprep.mubr.bf16.mxu0 0
      %4849 = vmatmul.mubr.bf16.gmra.mxu0 %v4783
      %v4850 = vpop.f32.mrf.mxu0
      %v4851 = vadd.f32 %v4732, %v4850
      %v4852 = vpop.f32.mrf.mxu0
      %v4853 = vadd.f32 %v4736, %v4852
      %v4854 = vpop.f32.mrf.mxu0
      %v4855 = vadd.f32 %v4732, %v4854
      %v4856 = vpop.f32.mrf.mxu0
      %v4857 = vadd.f32 %v4736, %v4856
      %4858 = vmatprep.mubr.bf16.mxu0 0
      %4859 = vmatmul.mubr.bf16.gmra.mxu0 %v4786
      %v4860 = vpop.f32.mrf.mxu0
      %v4861 = vadd.f32 %v4732, %v4860
      %v4862 = vpop.f32.mrf.mxu0
      %v4863 = vadd.f32 %v4736, %v4862
      %v4864 = vpop.f32.mrf.mxu0
      %v4865 = vadd.f32 %v4732, %v4864
      %v4866 = vpop.f32.mrf.mxu0
      %v4867 = vadd.f32 %v4736, %v4866
      %4868 = vmatprep.mubr.bf16.mxu0 0
      %4869 = vmatmul.mubr.bf16.gmra.mxu0 %v4789
      %v4870 = vpop.f32.mrf.mxu0
      %v4871 = vadd.f32 %v4732, %v4870
      %v4872 = vpop.f32.mrf.mxu0
      %v4873 = vadd.f32 %v4736, %v4872
      %v4874 = vpop.f32.mrf.mxu0
      %v4875 = vadd.f32 %v4732, %v4874
      %v4876 = vpop.f32.mrf.mxu0
      %v4877 = vadd.f32 %v4736, %v4876
      %4878 = vmatprep.mubr.bf16.mxu0 0
      %4879 = vmatmul.mubr.bf16.gmra.mxu0 %v4792
      %v4880 = vpop.f32.mrf.mxu0
      %v4881 = vadd.f32 %v4732, %v4880
      %v4882 = vpop.f32.mrf.mxu0
      %v4883 = vadd.f32 %v4736, %v4882
      %v4884 = vpop.f32.mrf.mxu0
      %v4885 = vadd.f32 %v4732, %v4884
      %v4886 = vpop.f32.mrf.mxu0
      %v4887 = vadd.f32 %v4736, %v4886
      %4888 = vmatprep.mubr.bf16.mxu0 0
      %4889 = vmatmul.mubr.bf16.gmra.mxu0 %v4795
      %v4890 = vpop.f32.mrf.mxu0
      %v4891 = vadd.f32 %v4732, %v4890
      %v4892 = vpop.f32.mrf.mxu0
      %v4893 = vadd.f32 %v4736, %v4892
      %v4894 = vpop.f32.mrf.mxu0
      %v4895 = vadd.f32 %v4732, %v4894
      %v4896 = vpop.f32.mrf.mxu0
      %v4897 = vadd.f32 %v4736, %v4896
      %4898 = vmatprep.mubr.bf16.mxu0 0
      %4899 = vmatmul.mubr.bf16.gmra.mxu0 %v4798
      %v4900 = vpop.f32.mrf.mxu0
      %v4901 = vadd.f32 %v4732, %v4900
      %v4902 = vpop.f32.mrf.mxu0
      %v4903 = vadd.f32 %v4736, %v4902
      %v4904 = vpop.f32.mrf.mxu0
      %v4905 = vadd.f32 %v4732, %v4904
      %v4906 = vpop.f32.mrf.mxu0
      %v4907 = vadd.f32 %v4736, %v4906
      %4908 = vmatprep.mubr.bf16.mxu0 0
      %4909 = vmatmul.mubr.bf16.gmra.mxu0 %v4801
      %v4910 = vpop.f32.mrf.mxu0
      %v4911 = vadd.f32 %v4732, %v4910
      %v4912 = vpop.f32.mrf.mxu0
      %v4913 = vadd.f32 %v4736, %v4912
      %v4914 = vpop.f32.mrf.mxu0
      %v4915 = vadd.f32 %v4732, %v4914
      %v4916 = vpop.f32.mrf.mxu0
      %v4917 = vadd.f32 %v4736, %v4916
      %4918 = vmatprep.mubr.bf16.mxu0 0
      %4919 = vmatmul.mubr.bf16.gmra.mxu0 %v4804
      %v4920 = vpop.f32.mrf.mxu0
      %v4921 = vadd.f32 %v4732, %v4920
      %v4922 = vpop.f32.mrf.mxu0
      %v4923 = vadd.f32 %v4736, %v4922
      %v4924 = vpop.f32.mrf.mxu0
      %v4925 = vpop.f32.mrf.mxu0
      %4926 = vdwg.mxu0
      %v4927 = vmul.f32 %v4841, 1.702
      %v4928 = vmul.f32 %v4843, 1.702
      %v4929 = vmul.f32 %v4845, 1.702
      %v4930 = vmul.f32 %v4847, 1.702
      %v4931 = vmul.f32 %v4851, 1.702
      %v4932 = vmul.f32 %v4853, 1.702
      %v4933 = vmul.f32 %v4855, 1.702
      %v4934 = vmul.f32 %v4857, 1.702
      %v4935 = vmul.f32 %v4861, 1.702
      %v4936 = vmul.f32 %v4863, 1.702
      %v4937 = vmul.f32 %v4865, 1.702
      %v4938 = vmul.f32 %v4867, 1.702
      %v4939 = vmul.f32 %v4871, 1.702
      %v4940 = vmul.f32 %v4873, 1.702
      %v4941 = vmul.f32 %v4875, 1.702
      %v4942 = vmul.f32 %v4877, 1.702
      %v4943 = vmul.f32 %v4881, 1.702
      %v4944 = vmul.f32 %v4883, 1.702
      %v4945 = vmul.f32 %v4885, 1.702
      %v4946 = vmul.f32 %v4887, 1.702
      %v4947 = vmul.f32 %v4891, 1.702
      %v4948 = vmul.f32 %v4893, 1.702
      %v4949 = vmul.f32 %v4895, 1.702
      %v4950 = vmul.f32 %v4897, 1.702
      %v4951 = vmul.f32 %v4901, 1.702
      %v4952 = vmul.f32 %v4903, 1.702
      %v4953 = vmul.f32 %v4905, 1.702
      %v4954 = vmul.f32 %v4907, 1.702
      %v4955 = vmul.f32 %v4911, 1.702
      %v4956 = vmul.f32 %v4913, 1.702
      %v4957 = vmul.f32 %v4915, 1.702
      %v4958 = vmul.f32 %v4917, 1.702
      %v4959 = vmul.f32 %v4921, 1.702
      %v4960 = vmul.f32 %v4923, 1.702
      %v4961 = vxor.u32 %v4927, 2147483648
      %v4962 = vxor.u32 %v4928, 2147483648
      %v4963 = vxor.u32 %v4929, 2147483648
      %v4964 = vxor.u32 %v4930, 2147483648
      %v4965 = vxor.u32 %v4931, 2147483648
      %v4966 = vxor.u32 %v4932, 2147483648
      %v4967 = vxor.u32 %v4933, 2147483648
      %v4968 = vxor.u32 %v4934, 2147483648
      %v4969 = vxor.u32 %v4935, 2147483648
      %v4970 = vxor.u32 %v4936, 2147483648
      %v4971 = vxor.u32 %v4937, 2147483648
      %v4972 = vxor.u32 %v4938, 2147483648
      %v4973 = vxor.u32 %v4939, 2147483648
      %v4974 = vxor.u32 %v4940, 2147483648
      %v4975 = vxor.u32 %v4941, 2147483648
      %v4976 = vxor.u32 %v4942, 2147483648
      %v4977 = vxor.u32 %v4943, 2147483648
      %v4978 = vxor.u32 %v4944, 2147483648
      %v4979 = vxor.u32 %v4945, 2147483648
      %v4980 = vxor.u32 %v4946, 2147483648
      %v4981 = vxor.u32 %v4947, 2147483648
      %v4982 = vxor.u32 %v4948, 2147483648
      %v4983 = vxor.u32 %v4949, 2147483648
      %v4984 = vxor.u32 %v4950, 2147483648
      %v4985 = vxor.u32 %v4951, 2147483648
      %v4986 = vxor.u32 %v4952, 2147483648
      %v4987 = vxor.u32 %v4953, 2147483648
      %v4988 = vxor.u32 %v4954, 2147483648
      %v4989 = vxor.u32 %v4955, 2147483648
      %v4990 = vxor.u32 %v4956, 2147483648
      %v4991 = vxor.u32 %v4957, 2147483648
      %v4992 = vxor.u32 %v4958, 2147483648
      %v4993 = vxor.u32 %v4959, 2147483648
      %v4994 = vxor.u32 %v4960, 2147483648
      %v4995 = vmul.f32 %v4961, 1.442695
      %v4996 = vpow.pop %v4995
      %v4997 = vmul.f32 %v4962, 1.442695
      %v4998 = vpow.pop %v4997
      %v4999 = vmul.f32 %v4963, 1.442695
      %v5000 = vpow.pop %v4999
      %v5001 = vmul.f32 %v4964, 1.442695
      %v5002 = vpow.pop %v5001
      %v5003 = vmul.f32 %v4965, 1.442695
      %v5004 = vpow.pop %v5003
      %v5005 = vmul.f32 %v4966, 1.442695
      %v5006 = vpow.pop %v5005
      %v5007 = vmul.f32 %v4967, 1.442695
      %v5008 = vpow.pop %v5007
      %v5009 = vmul.f32 %v4968, 1.442695
      %v5010 = vpow.pop %v5009
      %v5011 = vmul.f32 %v4969, 1.442695
      %v5012 = vpow.pop %v5011
      %v5013 = vmul.f32 %v4970, 1.442695
      %v5014 = vpow.pop %v5013
      %v5015 = vmul.f32 %v4971, 1.442695
      %v5016 = vpow.pop %v5015
      %v5017 = vmul.f32 %v4972, 1.442695
      %v5018 = vpow.pop %v5017
      %v5019 = vmul.f32 %v4973, 1.442695
      %v5020 = vpow.pop %v5019
      %v5021 = vmul.f32 %v4974, 1.442695
      %v5022 = vpow.pop %v5021
      %v5023 = vmul.f32 %v4975, 1.442695
      %v5024 = vpow.pop %v5023
      %v5025 = vmul.f32 %v4976, 1.442695
      %v5026 = vpow.pop %v5025
      %v5027 = vmul.f32 %v4977, 1.442695
      %v5028 = vpow.pop %v5027
      %v5029 = vmul.f32 %v4978, 1.442695
      %v5030 = vpow.pop %v5029
      %v5031 = vmul.f32 %v4979, 1.442695
      %v5032 = vpow.pop %v5031
      %v5033 = vmul.f32 %v4980, 1.442695
      %v5034 = vpow.pop %v5033
      %v5035 = vmul.f32 %v4981, 1.442695
      %v5036 = vpow.pop %v5035
      %v5037 = vmul.f32 %v4982, 1.442695
      %v5038 = vpow.pop %v5037
      %v5039 = vmul.f32 %v4983, 1.442695
      %v5040 = vpow.pop %v5039
      %v5041 = vmul.f32 %v4984, 1.442695
      %v5042 = vpow.pop %v5041
      %v5043 = vmul.f32 %v4985, 1.442695
      %v5044 = vpow.pop %v5043
      %v5045 = vmul.f32 %v4986, 1.442695
      %v5046 = vpow.pop %v5045
      %v5047 = vmul.f32 %v4987, 1.442695
      %v5048 = vpow.pop %v5047
      %v5049 = vmul.f32 %v4988, 1.442695
      %v5050 = vpow.pop %v5049
      %v5051 = vmul.f32 %v4989, 1.442695
      %v5052 = vpow.pop %v5051
      %v5053 = vmul.f32 %v4990, 1.442695
      %v5054 = vpow.pop %v5053
      %v5055 = vmul.f32 %v4991, 1.442695
      %v5056 = vpow.pop %v5055
      %v5057 = vmul.f32 %v4992, 1.442695
      %v5058 = vpow.pop %v5057
      %v5059 = vmul.f32 %v4993, 1.442695
      %v5060 = vpow.pop %v5059
      %v5061 = vmul.f32 %v4994, 1.442695
      %v5062 = vpow.pop %v5061
      %v5063 = vadd.f32 %v4996, 1.0
      %v5064 = vadd.f32 %v4998, 1.0
      %v5065 = vadd.f32 %v5000, 1.0
      %v5066 = vadd.f32 %v5002, 1.0
      %v5067 = vadd.f32 %v5004, 1.0
      %v5068 = vadd.f32 %v5006, 1.0
      %v5069 = vadd.f32 %v5008, 1.0
      %v5070 = vadd.f32 %v5010, 1.0
      %v5071 = vadd.f32 %v5012, 1.0
      %v5072 = vadd.f32 %v5014, 1.0
      %v5073 = vadd.f32 %v5016, 1.0
      %v5074 = vadd.f32 %v5018, 1.0
      %v5075 = vadd.f32 %v5020, 1.0
      %v5076 = vadd.f32 %v5022, 1.0
      %v5077 = vadd.f32 %v5024, 1.0
      %v5078 = vadd.f32 %v5026, 1.0
      %v5079 = vadd.f32 %v5028, 1.0
      %v5080 = vadd.f32 %v5030, 1.0
      %v5081 = vadd.f32 %v5032, 1.0
      %v5082 = vadd.f32 %v5034, 1.0
      %v5083 = vadd.f32 %v5036, 1.0
      %v5084 = vadd.f32 %v5038, 1.0
      %v5085 = vadd.f32 %v5040, 1.0
      %v5086 = vadd.f32 %v5042, 1.0
      %v5087 = vadd.f32 %v5044, 1.0
      %v5088 = vadd.f32 %v5046, 1.0
      %v5089 = vadd.f32 %v5048, 1.0
      %v5090 = vadd.f32 %v5050, 1.0
      %v5091 = vadd.f32 %v5052, 1.0
      %v5092 = vadd.f32 %v5054, 1.0
      %v5093 = vadd.f32 %v5056, 1.0
      %v5094 = vadd.f32 %v5058, 1.0
      %v5095 = vadd.f32 %v5060, 1.0
      %v5096 = vadd.f32 %v5062, 1.0
      %v5097 = vrcp.pop %v5063
      %v5098 = vmul.f32 1.0, %v5097
      %v5099 = vrcp.pop %v5064
      %v5100 = vmul.f32 1.0, %v5099
      %v5101 = vrcp.pop %v5065
      %v5102 = vmul.f32 1.0, %v5101
      %v5103 = vrcp.pop %v5066
      %v5104 = vmul.f32 1.0, %v5103
      %v5105 = vrcp.pop %v5067
      %v5106 = vmul.f32 1.0, %v5105
      %v5107 = vrcp.pop %v5068
      %v5108 = vmul.f32 1.0, %v5107
      %v5109 = vrcp.pop %v5069
      %v5110 = vmul.f32 1.0, %v5109
      %v5111 = vrcp.pop %v5070
      %v5112 = vmul.f32 1.0, %v5111
      %v5113 = vrcp.pop %v5071
      %v5114 = vmul.f32 1.0, %v5113
      %v5115 = vrcp.pop %v5072
      %v5116 = vmul.f32 1.0, %v5115
      %v5117 = vrcp.pop %v5073
      %v5118 = vmul.f32 1.0, %v5117
      %v5119 = vrcp.pop %v5074
      %v5120 = vmul.f32 1.0, %v5119
      %v5121 = vrcp.pop %v5075
      %v5122 = vmul.f32 1.0, %v5121
      %v5123 = vrcp.pop %v5076
      %v5124 = vmul.f32 1.0, %v5123
      %v5125 = vrcp.pop %v5077
      %v5126 = vmul.f32 1.0, %v5125
      %v5127 = vrcp.pop %v5078
      %v5128 = vmul.f32 1.0, %v5127
      %v5129 = vrcp.pop %v5079
      %v5130 = vmul.f32 1.0, %v5129
      %v5131 = vrcp.pop %v5080
      %v5132 = vmul.f32 1.0, %v5131
      %v5133 = vrcp.pop %v5081
      %v5134 = vmul.f32 1.0, %v5133
      %v5135 = vrcp.pop %v5082
      %v5136 = vmul.f32 1.0, %v5135
      %v5137 = vrcp.pop %v5083
      %v5138 = vmul.f32 1.0, %v5137
      %v5139 = vrcp.pop %v5084
      %v5140 = vmul.f32 1.0, %v5139
      %v5141 = vrcp.pop %v5085
      %v5142 = vmul.f32 1.0, %v5141
      %v5143 = vrcp.pop %v5086
      %v5144 = vmul.f32 1.0, %v5143
      %v5145 = vrcp.pop %v5087
      %v5146 = vmul.f32 1.0, %v5145
      %v5147 = vrcp.pop %v5088
      %v5148 = vmul.f32 1.0, %v5147
      %v5149 = vrcp.pop %v5089
      %v5150 = vmul.f32 1.0, %v5149
      %v5151 = vrcp.pop %v5090
      %v5152 = vmul.f32 1.0, %v5151
      %v5153 = vrcp.pop %v5091
      %v5154 = vmul.f32 1.0, %v5153
      %v5155 = vrcp.pop %v5092
      %v5156 = vmul.f32 1.0, %v5155
      %v5157 = vrcp.pop %v5093
      %v5158 = vmul.f32 1.0, %v5157
      %v5159 = vrcp.pop %v5094
      %v5160 = vmul.f32 1.0, %v5159
      %v5161 = vrcp.pop %v5095
      %v5162 = vmul.f32 1.0, %v5161
      %v5163 = vrcp.pop %v5096
      %v5164 = vmul.f32 1.0, %v5163
      %v5165 = vmul.f32 %v4841, %v5098
      %v5166 = vmul.f32 %v4843, %v5100
      %v5167 = vmul.f32 %v4845, %v5102
      %v5168 = vmul.f32 %v4847, %v5104
      %v5169 = vmul.f32 %v4851, %v5106
      %v5170 = vmul.f32 %v4853, %v5108
      %v5171 = vmul.f32 %v4855, %v5110
      %v5172 = vmul.f32 %v4857, %v5112
      %v5173 = vmul.f32 %v4861, %v5114
      %v5174 = vmul.f32 %v4863, %v5116
      %v5175 = vmul.f32 %v4865, %v5118
      %v5176 = vmul.f32 %v4867, %v5120
      %v5177 = vmul.f32 %v4871, %v5122
      %v5178 = vmul.f32 %v4873, %v5124
      %v5179 = vmul.f32 %v4875, %v5126
      %v5180 = vmul.f32 %v4877, %v5128
      %v5181 = vmul.f32 %v4881, %v5130
      %v5182 = vmul.f32 %v4883, %v5132
      %v5183 = vmul.f32 %v4885, %v5134
      %v5184 = vmul.f32 %v4887, %v5136
      %v5185 = vmul.f32 %v4891, %v5138
      %v5186 = vmul.f32 %v4893, %v5140
      %v5187 = vmul.f32 %v4895, %v5142
      %v5188 = vmul.f32 %v4897, %v5144
      %v5189 = vmul.f32 %v4901, %v5146
      %v5190 = vmul.f32 %v4903, %v5148
      %v5191 = vmul.f32 %v4905, %v5150
      %v5192 = vmul.f32 %v4907, %v5152
      %v5193 = vmul.f32 %v4911, %v5154
      %v5194 = vmul.f32 %v4913, %v5156
      %v5195 = vmul.f32 %v4915, %v5158
      %v5196 = vmul.f32 %v4917, %v5160
      %v5197 = vmul.f32 %v4921, %v5162
      %v5198 = vmul.f32 %v4923, %v5164
      %v5199 = vpack.c.bf16 %v5167, %v5165
      %v5200 = vpack.c.bf16 %v5168, %v5166
      %v5201 = vpack.c.bf16 %v5171, %v5169
      %v5202 = vpack.c.bf16 %v5172, %v5170
      %v5203 = vpack.c.bf16 %v5175, %v5173
      %v5204 = vpack.c.bf16 %v5176, %v5174
      %v5205 = vpack.c.bf16 %v5179, %v5177
      %v5206 = vpack.c.bf16 %v5180, %v5178
      %v5207 = vpack.c.bf16 %v5183, %v5181
      %v5208 = vpack.c.bf16 %v5184, %v5182
      %v5209 = vpack.c.bf16 %v5187, %v5185
      %v5210 = vpack.c.bf16 %v5188, %v5186
      %v5211 = vpack.c.bf16 %v5191, %v5189
      %v5212 = vpack.c.bf16 %v5192, %v5190
      %v5213 = vpack.c.bf16 %v5195, %v5193
      %v5214 = vpack.c.bf16 %v5196, %v5194
      %v5215 = vpack.c.bf16 %v5197, %v5197
      %v5216 = vpack.c.bf16 %v5198, %v5198
      %v5217 = vld [vmem:[%s696] sm:$0xf]
      %v5218 = vld [vmem:[%s696 + $0x4] sm:$0xf]
      %v5219 = vld [vmem:[%s696 + $0x8] sm:$0xf]
      %v5220 = vld [vmem:[%s696 + $0xc] sm:$0xf]
      %v5221 = vld [vmem:[%s696 + $0x10] sm:$0xf]
      %v5222 = vld [vmem:[%s696 + $0x14] sm:$0xf]
      %v5223 = vld [vmem:[%s696 + $0x18] sm:$0xf]
      %v5224 = vld [vmem:[%s696 + $0x1c] sm:$0xf]
      %v5225 = vld [vmem:[%s696 + $0x20] sm:$0xf]
      %v5226 = vld [vmem:[%s696 + $0x24] sm:$0xf]
      %v5227 = vld [vmem:[%s696 + $0x28] sm:$0xf]
      %v5228 = vld [vmem:[%s696 + $0x2c] sm:$0xf]
      %v5229 = vld [vmem:[%s696 + $0x30] sm:$0xf]
      %v5230 = vld [vmem:[%s696 + $0x34] sm:$0xf]
      %v5231 = vld [vmem:[%s696 + $0x38] sm:$0xf]
      %v5232 = vld [vmem:[%s696 + $0x3c] sm:$0xf]
      %v5233 = vld [vmem:[%s696 + $0x40] sm:$0xf]
      %v5234 = vld [vmem:[%s696 + $0x44] sm:$0xf]
      %v5235 = vld [vmem:[%s696 + $0x48] sm:$0xf]
      %v5236 = vld [vmem:[%s696 + $0x4c] sm:$0xf]
      %v5237 = vld [vmem:[%s696 + $0x50] sm:$0xf]
      %v5238 = vld [vmem:[%s696 + $0x54] sm:$0xf]
      %v5239 = vld [vmem:[%s696 + $0x58] sm:$0xf]
      %v5240 = vld [vmem:[%s696 + $0x5c] sm:$0xf]
      %v5241 = vld [vmem:[%s696 + $0x60] sm:$0xf]
      %v5242 = vld [vmem:[%s696 + $0x64] sm:$0xf]
      %v5243 = vld [vmem:[%s696 + $0x68] sm:$0xf]
      %v5244 = vld [vmem:[%s696 + $0x6c] sm:$0xf]
      %v5245 = vld [vmem:[%s696 + $0x70] sm:$0xf]
      %v5246 = vld [vmem:[%s696 + $0x74] sm:$0xf]
      %v5247 = vld [vmem:[%s696 + $0x78] sm:$0xf]
      %v5248 = vld [vmem:[%s696 + $0x7c] sm:$0xf]
      %v5249 = vld [vmem:[%s699] sm:$0x1]
      %v5251 = vlaneseq
      %v5252 = vshrl.u32 %v5251, 7
      %v5253 = vsub.s32 0, %v5252
      %v5254 = vrot.slane %v5249, %v5253
      %v5288 = vunpack.c.l.b16 %v5217
      %v5289 = vunpack.c.l.b16 %v5218
      %v5290 = vunpack.c.l.b16 %v5219
      %v5291 = vunpack.c.l.b16 %v5220
      %v5292 = vunpack.c.l.b16 %v5221
      %v5293 = vunpack.c.l.b16 %v5222
      %v5294 = vunpack.c.l.b16 %v5223
      %v5295 = vunpack.c.l.b16 %v5224
      %v5296 = vunpack.c.l.b16 %v5225
      %v5297 = vunpack.c.l.b16 %v5226
      %v5298 = vunpack.c.l.b16 %v5227
      %v5299 = vunpack.c.l.b16 %v5228
      %v5300 = vunpack.c.l.b16 %v5229
      %v5301 = vunpack.c.l.b16 %v5230
      %v5302 = vunpack.c.l.b16 %v5231
      %v5303 = vunpack.c.l.b16 %v5232
      %v5304 = vunpack.c.l.b16 %v5233
      %v5305 = vunpack.c.l.b16 %v5234
      %v5306 = vunpack.c.l.b16 %v5235
      %v5307 = vunpack.c.l.b16 %v5236
      %v5308 = vunpack.c.l.b16 %v5237
      %v5309 = vunpack.c.l.b16 %v5238
      %v5310 = vunpack.c.l.b16 %v5239
      %v5311 = vunpack.c.l.b16 %v5240
      %v5312 = vunpack.c.l.b16 %v5241
      %v5313 = vunpack.c.l.b16 %v5242
      %v5314 = vunpack.c.l.b16 %v5243
      %v5315 = vunpack.c.l.b16 %v5244
      %v5316 = vunpack.c.l.b16 %v5245
      %v5317 = vunpack.c.l.b16 %v5246
      %v5318 = vunpack.c.l.b16 %v5247
      %v5319 = vunpack.c.l.b16 %v5248
      %v5320 = vpack.c.b16 %v5289, %v5288
      %v5321 = vpack.c.b16 %v5291, %v5290
      %v5322 = vpack.c.b16 %v5293, %v5292
      %v5323 = vpack.c.b16 %v5295, %v5294
      %v5324 = vpack.c.b16 %v5297, %v5296
      %v5325 = vpack.c.b16 %v5299, %v5298
      %v5326 = vpack.c.b16 %v5301, %v5300
      %v5327 = vpack.c.b16 %v5303, %v5302
      %v5328 = vpack.c.b16 %v5305, %v5304
      %v5329 = vpack.c.b16 %v5307, %v5306
      %v5330 = vpack.c.b16 %v5309, %v5308
      %v5331 = vpack.c.b16 %v5311, %v5310
      %v5332 = vpack.c.b16 %v5313, %v5312
      %v5333 = vpack.c.b16 %v5315, %v5314
      %v5334 = vpack.c.b16 %v5317, %v5316
      %v5335 = vpack.c.b16 %v5319, %v5318
      %5352 = vmatprep.subr.bf16.mxu0 0
      %5353 = vmatpush1.bf16.msra.mxu0 %v5327
      %5354 = vmatprep.subr.bf16.mxu0 0
      %5355 = vmatpush1.bf16.msra.mxu0 %v5326
      %5356 = vmatprep.subr.bf16.mxu0 0
      %5357 = vmatpush1.bf16.msra.mxu0 %v5325
      %5358 = vmatprep.subr.bf16.mxu0 0
      %5359 = vmatpush1.bf16.msra.mxu0 %v5324
      %5360 = vmatprep.subr.bf16.mxu0 0
      %5361 = vmatpush1.bf16.msra.mxu0 %v5323
      %5362 = vmatprep.subr.bf16.mxu0 0
      %5363 = vmatpush1.bf16.msra.mxu0 %v5322
      %5364 = vmatprep.subr.bf16.mxu0 0
      %5365 = vmatpush1.bf16.msra.mxu0 %v5321
      %5366 = vmatprep.subr.bf16.mxu0 0
      %5367 = vmatpush1.bf16.msra.mxu0 %v5320
      %5368 = vmatprep.subr.bf16.mxu0 0
      %5369 = vmatpush2.bf16.msra.mxu0 %v5335
      %5370 = vmatprep.subr.bf16.mxu0 0
      %5371 = vmatpush2.bf16.msra.mxu0 %v5334
      %5372 = vmatprep.subr.bf16.mxu0 0
      %5373 = vmatpush2.bf16.msra.mxu0 %v5333
      %5374 = vmatprep.subr.bf16.mxu0 0
      %5375 = vmatpush2.bf16.msra.mxu0 %v5332
      %5376 = vmatprep.subr.bf16.mxu0 0
      %5377 = vmatpush2.bf16.msra.mxu0 %v5331
      %5378 = vmatprep.subr.bf16.mxu0 0
      %5379 = vmatpush2.bf16.msra.mxu0 %v5330
      %5380 = vmatprep.subr.bf16.mxu0 0
      %5381 = vmatpush2.bf16.msra.mxu0 %v5329
      %5382 = vmatprep.subr.bf16.mxu0 0
      %5383 = vmatpush2.bf16.msra.mxu0 %v5328
      %5384 = vmatprep.mubr.bf16.mxu0 %v5200
      %5385 = vmatmul.mubr.bf16.gmra.mxu0 %v5199
      %v5386 = vpop.f32.mrf.mxu0
      %v5387 = vadd.f32 %v5254, %v5386
      %v5388 = vpop.f32.mrf.mxu0
      %v5389 = vpop.f32.mrf.mxu0
      %v5390 = vadd.f32 %v5254, %v5389
      %v5391 = vpop.f32.mrf.mxu0
      %5392 = vmatprep.mubr.bf16.mxu0 %v5202
      %5393 = vmatmul.mubr.bf16.gmra.mxu0 %v5201
      %v5394 = vpop.f32.mrf.mxu0
      %v5395 = vadd.f32 %v5254, %v5394
      %v5396 = vpop.f32.mrf.mxu0
      %v5397 = vpop.f32.mrf.mxu0
      %v5398 = vadd.f32 %v5254, %v5397
      %v5399 = vpop.f32.mrf.mxu0
      %5400 = vmatprep.mubr.bf16.mxu0 %v5204
      %5401 = vmatmul.mubr.bf16.gmra.mxu0 %v5203
      %v5402 = vpop.f32.mrf.mxu0
      %v5403 = vadd.f32 %v5254, %v5402
      %v5404 = vpop.f32.mrf.mxu0
      %v5405 = vpop.f32.mrf.mxu0
      %v5406 = vadd.f32 %v5254, %v5405
      %v5407 = vpop.f32.mrf.mxu0
      %5408 = vmatprep.mubr.bf16.mxu0 %v5206
      %5409 = vmatmul.mubr.bf16.gmra.mxu0 %v5205
      %v5410 = vpop.f32.mrf.mxu0
      %v5411 = vadd.f32 %v5254, %v5410
      %v5412 = vpop.f32.mrf.mxu0
      %v5413 = vpop.f32.mrf.mxu0
      %v5414 = vadd.f32 %v5254, %v5413
      %v5415 = vpop.f32.mrf.mxu0
      %5416 = vmatprep.mubr.bf16.mxu0 %v5208
      %5417 = vmatmul.mubr.bf16.gmra.mxu0 %v5207
      %v5418 = vpop.f32.mrf.mxu0
      %v5419 = vadd.f32 %v5254, %v5418
      %v5420 = vpop.f32.mrf.mxu0
      %v5421 = vpop.f32.mrf.mxu0
      %v5422 = vadd.f32 %v5254, %v5421
      %v5423 = vpop.f32.mrf.mxu0
      %5424 = vmatprep.mubr.bf16.mxu0 %v5210
      %5425 = vmatmul.mubr.bf16.gmra.mxu0 %v5209
      %v5426 = vpop.f32.mrf.mxu0
      %v5427 = vadd.f32 %v5254, %v5426
      %v5428 = vpop.f32.mrf.mxu0
      %v5429 = vpop.f32.mrf.mxu0
      %v5430 = vadd.f32 %v5254, %v5429
      %v5431 = vpop.f32.mrf.mxu0
      %5432 = vmatprep.mubr.bf16.mxu0 %v5212
      %5433 = vmatmul.mubr.bf16.gmra.mxu0 %v5211
      %v5434 = vpop.f32.mrf.mxu0
      %v5435 = vadd.f32 %v5254, %v5434
      %v5436 = vpop.f32.mrf.mxu0
      %v5437 = vpop.f32.mrf.mxu0
      %v5438 = vadd.f32 %v5254, %v5437
      %v5439 = vpop.f32.mrf.mxu0
      %5440 = vmatprep.mubr.bf16.mxu0 %v5214
      %5441 = vmatmul.mubr.bf16.gmra.mxu0 %v5213
      %v5442 = vpop.f32.mrf.mxu0
      %v5443 = vadd.f32 %v5254, %v5442
      %v5444 = vpop.f32.mrf.mxu0
      %v5445 = vpop.f32.mrf.mxu0
      %v5446 = vadd.f32 %v5254, %v5445
      %v5447 = vpop.f32.mrf.mxu0
      %5448 = vmatprep.mubr.bf16.mxu0 %v5216
      %5449 = vmatmul.mubr.bf16.gmra.mxu0 %v5215
      %v5450 = vpop.f32.mrf.mxu0
      %v5451 = vadd.f32 %v5254, %v5450
      %v5452 = vpop.f32.mrf.mxu0
      %v5453 = vpop.f32.mrf.mxu0
      %v5454 = vpop.f32.mrf.mxu0
      %5455 = vdwg.mxu0
      %v5456 = vadd.f32 %v4424, %v5387
      %v5457 = vadd.f32 %v4425, %v5390
      %v5458 = vadd.f32 %v4426, %v5395
      %v5459 = vadd.f32 %v4427, %v5398
      %v5460 = vadd.f32 %v4428, %v5403
      %v5461 = vadd.f32 %v4429, %v5406
      %v5462 = vadd.f32 %v4430, %v5411
      %v5463 = vadd.f32 %v4431, %v5414
      %v5464 = vadd.f32 %v4432, %v5419
      %v5465 = vadd.f32 %v4433, %v5422
      %v5466 = vadd.f32 %v4434, %v5427
      %v5467 = vadd.f32 %v4435, %v5430
      %v5468 = vadd.f32 %v4436, %v5435
      %v5469 = vadd.f32 %v4437, %v5438
      %v5470 = vadd.f32 %v4438, %v5443
      %v5471 = vadd.f32 %v4439, %v5446
      %v5472 = vadd.f32 %v4440, %v5451
      %5473 = vst.msk [vmem:[#allocation2] sm:$0xff] %vm766, %v5456
      %5474 = vst.msk [vmem:[#allocation2 + $0x8] sm:$0xff] %vm766, %v5457
      %5475 = vst.msk [vmem:[#allocation2 + $0x10] sm:$0xff] %vm766, %v5458
      %5476 = vst.msk [vmem:[#allocation2 + $0x18] sm:$0xff] %vm766, %v5459
      %5477 = vst.msk [vmem:[#allocation2 + $0x20] sm:$0xff] %vm766, %v5460
      %5478 = vst.msk [vmem:[#allocation2 + $0x28] sm:$0xff] %vm766, %v5461
      %5479 = vst.msk [vmem:[#allocation2 + $0x30] sm:$0xff] %vm766, %v5462
      %5480 = vst.msk [vmem:[#allocation2 + $0x38] sm:$0xff] %vm766, %v5463
      %5481 = vst.msk [vmem:[#allocation2 + $0x40] sm:$0xff] %vm766, %v5464
      %5482 = vst.msk [vmem:[#allocation2 + $0x48] sm:$0xff] %vm766, %v5465
      %5483 = vst.msk [vmem:[#allocation2 + $0x50] sm:$0xff] %vm766, %v5466
      %5484 = vst.msk [vmem:[#allocation2 + $0x58] sm:$0xff] %vm766, %v5467
      %5485 = vst.msk [vmem:[#allocation2 + $0x60] sm:$0xff] %vm766, %v5468
      %5486 = vst.msk [vmem:[#allocation2 + $0x68] sm:$0xff] %vm766, %v5469
      %5487 = vst.msk [vmem:[#allocation2 + $0x70] sm:$0xff] %vm766, %v5470
      %5488 = vst.msk [vmem:[#allocation2 + $0x78] sm:$0xff] %vm766, %v5471
      %5489 = vst.msk [vmem:[#allocation2 + $0x80] sm:$0xf] %vm815, %v5472
      %p5490 = scmp.eq.s32.totalorder %s31, 3
      // Predicated region
      $region85: #{local_feature_forward.1} parent=79 // pred_check
        %p5491 = pneg %p5490
      $region86: #{local_feature_forward.1} parent=79 // pred_check_branch
        %5493 = sbr.rel (%p5491) target = $region88
      $region87: #{local_feature_forward.1} parent=79 // pred_region
        %v5494 = vld [vmem:[%s13] sm:$0x1]
        %v5495 = vld [vmem:[%s14] sm:$0x1]
        %v5496 = vsel %vm766, %v5456, 0.0
        %5497 = vadd.xlane.f32.xlu0 %v5496
        %v5498 = vpop.xlane.xlu0 %5497
        %v5499 = vsel %vm766, %v5457, 0.0
        %5500 = vadd.xlane.f32.xlu0 %v5499
        %v5501 = vpop.xlane.xlu0 %5500
        %v5502 = vsel %vm766, %v5458, 0.0
        %5503 = vadd.xlane.f32.xlu0 %v5502
        %v5504 = vpop.xlane.xlu0 %5503
        %v5505 = vsel %vm766, %v5459, 0.0
        %5506 = vadd.xlane.f32.xlu0 %v5505
        %v5507 = vpop.xlane.xlu0 %5506
        %v5508 = vsel %vm766, %v5460, 0.0
        %5509 = vadd.xlane.f32.xlu0 %v5508
        %v5510 = vpop.xlane.xlu0 %5509
        %v5511 = vsel %vm766, %v5461, 0.0
        %5512 = vadd.xlane.f32.xlu0 %v5511
        %v5513 = vpop.xlane.xlu0 %5512
        %v5514 = vsel %vm766, %v5462, 0.0
        %5515 = vadd.xlane.f32.xlu0 %v5514
        %v5516 = vpop.xlane.xlu0 %5515
        %v5517 = vsel %vm766, %v5463, 0.0
        %5518 = vadd.xlane.f32.xlu0 %v5517
        %v5519 = vpop.xlane.xlu0 %5518
        %v5520 = vsel %vm766, %v5464, 0.0
        %5521 = vadd.xlane.f32.xlu0 %v5520
        %v5522 = vpop.xlane.xlu0 %5521
        %v5523 = vsel %vm766, %v5465, 0.0
        %5524 = vadd.xlane.f32.xlu0 %v5523
        %v5525 = vpop.xlane.xlu0 %5524
        %v5526 = vsel %vm766, %v5466, 0.0
        %5527 = vadd.xlane.f32.xlu0 %v5526
        %v5528 = vpop.xlane.xlu0 %5527
        %v5529 = vsel %vm766, %v5467, 0.0
        %5530 = vadd.xlane.f32.xlu0 %v5529
        %v5531 = vpop.xlane.xlu0 %5530
        %v5532 = vsel %vm766, %v5468, 0.0
        %5533 = vadd.xlane.f32.xlu0 %v5532
        %v5534 = vpop.xlane.xlu0 %5533
        %v5535 = vsel %vm766, %v5469, 0.0
        %5536 = vadd.xlane.f32.xlu0 %v5535
        %v5537 = vpop.xlane.xlu0 %5536
        %v5538 = vsel %vm766, %v5470, 0.0
        %5539 = vadd.xlane.f32.xlu0 %v5538
        %v5540 = vpop.xlane.xlu0 %5539
        %v5541 = vsel %vm766, %v5471, 0.0
        %5542 = vadd.xlane.f32.xlu0 %v5541
        %v5543 = vpop.xlane.xlu0 %5542
        %v5544 = vsel %vm815, %v5472, 0.0
        %5545 = vadd.xlane.f32.xlu0 %v5544
        %v5546 = vpop.xlane.xlu0 %5545
        %v5547 = vmul.f32 %v5498, %v819
        %v5548 = vmul.f32 %v5501, %v819
        %v5549 = vmul.f32 %v5504, %v819
        %v5550 = vmul.f32 %v5507, %v819
        %v5551 = vmul.f32 %v5510, %v819
        %v5552 = vmul.f32 %v5513, %v819
        %v5553 = vmul.f32 %v5516, %v819
        %v5554 = vmul.f32 %v5519, %v819
        %v5555 = vmul.f32 %v5522, %v819
        %v5556 = vmul.f32 %v5525, %v819
        %v5557 = vmul.f32 %v5528, %v819
        %v5558 = vmul.f32 %v5531, %v819
        %v5559 = vmul.f32 %v5534, %v819
        %v5560 = vmul.f32 %v5537, %v819
        %v5561 = vmul.f32 %v5540, %v819
        %v5562 = vmul.f32 %v5543, %v819
        %v5563 = vmul.f32 %v5546, %v819
        %v5564 = vsub.f32 %v5456, %v5547
        %v5565 = vsub.f32 %v5457, %v5548
        %v5566 = vsub.f32 %v5458, %v5549
        %v5567 = vsub.f32 %v5459, %v5550
        %v5568 = vsub.f32 %v5460, %v5551
        %v5569 = vsub.f32 %v5461, %v5552
        %v5570 = vsub.f32 %v5462, %v5553
        %v5571 = vsub.f32 %v5463, %v5554
        %v5572 = vsub.f32 %v5464, %v5555
        %v5573 = vsub.f32 %v5465, %v5556
        %v5574 = vsub.f32 %v5466, %v5557
        %v5575 = vsub.f32 %v5467, %v5558
        %v5576 = vsub.f32 %v5468, %v5559
        %v5577 = vsub.f32 %v5469, %v5560
        %v5578 = vsub.f32 %v5470, %v5561
        %v5579 = vsub.f32 %v5471, %v5562
        %v5580 = vsub.f32 %v5472, %v5563
        %v5581 = vmul.f32 %v5564, %v5564
        %v5582 = vmul.f32 %v5565, %v5565
        %v5583 = vmul.f32 %v5566, %v5566
        %v5584 = vmul.f32 %v5567, %v5567
        %v5585 = vmul.f32 %v5568, %v5568
        %v5586 = vmul.f32 %v5569, %v5569
        %v5587 = vmul.f32 %v5570, %v5570
        %v5588 = vmul.f32 %v5571, %v5571
        %v5589 = vmul.f32 %v5572, %v5572
        %v5590 = vmul.f32 %v5573, %v5573
        %v5591 = vmul.f32 %v5574, %v5574
        %v5592 = vmul.f32 %v5575, %v5575
        %v5593 = vmul.f32 %v5576, %v5576
        %v5594 = vmul.f32 %v5577, %v5577
        %v5595 = vmul.f32 %v5578, %v5578
        %v5596 = vmul.f32 %v5579, %v5579
        %v5597 = vmul.f32 %v5580, %v5580
        %v5598 = vsel %vm766, %v5581, 0.0
        %5599 = vadd.xlane.f32.xlu0 %v5598
        %v5600 = vpop.xlane.xlu0 %5599
        %v5601 = vsel %vm766, %v5582, 0.0
        %5602 = vadd.xlane.f32.xlu0 %v5601
        %v5603 = vpop.xlane.xlu0 %5602
        %v5604 = vsel %vm766, %v5583, 0.0
        %5605 = vadd.xlane.f32.xlu0 %v5604
        %v5606 = vpop.xlane.xlu0 %5605
        %v5607 = vsel %vm766, %v5584, 0.0
        %5608 = vadd.xlane.f32.xlu0 %v5607
        %v5609 = vpop.xlane.xlu0 %5608
        %v5610 = vsel %vm766, %v5585, 0.0
        %5611 = vadd.xlane.f32.xlu0 %v5610
        %v5612 = vpop.xlane.xlu0 %5611
        %v5613 = vsel %vm766, %v5586, 0.0
        %5614 = vadd.xlane.f32.xlu0 %v5613
        %v5615 = vpop.xlane.xlu0 %5614
        %v5616 = vsel %vm766, %v5587, 0.0
        %5617 = vadd.xlane.f32.xlu0 %v5616
        %v5618 = vpop.xlane.xlu0 %5617
        %v5619 = vsel %vm766, %v5588, 0.0
        %5620 = vadd.xlane.f32.xlu0 %v5619
        %v5621 = vpop.xlane.xlu0 %5620
        %v5622 = vsel %vm766, %v5589, 0.0
        %5623 = vadd.xlane.f32.xlu0 %v5622
        %v5624 = vpop.xlane.xlu0 %5623
        %v5625 = vsel %vm766, %v5590, 0.0
        %5626 = vadd.xlane.f32.xlu0 %v5625
        %v5627 = vpop.xlane.xlu0 %5626
        %v5628 = vsel %vm766, %v5591, 0.0
        %5629 = vadd.xlane.f32.xlu0 %v5628
        %v5630 = vpop.xlane.xlu0 %5629
        %v5631 = vsel %vm766, %v5592, 0.0
        %5632 = vadd.xlane.f32.xlu0 %v5631
        %v5633 = vpop.xlane.xlu0 %5632
        %v5634 = vsel %vm766, %v5593, 0.0
        %5635 = vadd.xlane.f32.xlu0 %v5634
        %v5636 = vpop.xlane.xlu0 %5635
        %v5637 = vsel %vm766, %v5594, 0.0
        %5638 = vadd.xlane.f32.xlu0 %v5637
        %v5639 = vpop.xlane.xlu0 %5638
        %v5640 = vsel %vm766, %v5595, 0.0
        %5641 = vadd.xlane.f32.xlu0 %v5640
        %v5642 = vpop.xlane.xlu0 %5641
        %v5643 = vsel %vm766, %v5596, 0.0
        %5644 = vadd.xlane.f32.xlu0 %v5643
        %v5645 = vpop.xlane.xlu0 %5644
        %v5646 = vsel %vm815, %v5597, 0.0
        %5647 = vadd.xlane.f32.xlu0 %v5646
        %v5648 = vpop.xlane.xlu0 %5647
        %v5649 = vmul.f32 %v5600, %v819
        %v5650 = vmul.f32 %v5603, %v819
        %v5651 = vmul.f32 %v5606, %v819
        %v5652 = vmul.f32 %v5609, %v819
        %v5653 = vmul.f32 %v5612, %v819
        %v5654 = vmul.f32 %v5615, %v819
        %v5655 = vmul.f32 %v5618, %v819
        %v5656 = vmul.f32 %v5621, %v819
        %v5657 = vmul.f32 %v5624, %v819
        %v5658 = vmul.f32 %v5627, %v819
        %v5659 = vmul.f32 %v5630, %v819
        %v5660 = vmul.f32 %v5633, %v819
        %v5661 = vmul.f32 %v5636, %v819
        %v5662 = vmul.f32 %v5639, %v819
        %v5663 = vmul.f32 %v5642, %v819
        %v5664 = vmul.f32 %v5645, %v819
        %v5665 = vmul.f32 %v5648, %v819
        %v5666 = vadd.f32 %v5649, 1e-05
        %v5667 = vadd.f32 %v5650, 1e-05
        %v5668 = vadd.f32 %v5651, 1e-05
        %v5669 = vadd.f32 %v5652, 1e-05
        %v5670 = vadd.f32 %v5653, 1e-05
        %v5671 = vadd.f32 %v5654, 1e-05
        %v5672 = vadd.f32 %v5655, 1e-05
        %v5673 = vadd.f32 %v5656, 1e-05
        %v5674 = vadd.f32 %v5657, 1e-05
        %v5675 = vadd.f32 %v5658, 1e-05
        %v5676 = vadd.f32 %v5659, 1e-05
        %v5677 = vadd.f32 %v5660, 1e-05
        %v5678 = vadd.f32 %v5661, 1e-05
        %v5679 = vadd.f32 %v5662, 1e-05
        %v5680 = vadd.f32 %v5663, 1e-05
        %v5681 = vadd.f32 %v5664, 1e-05
        %v5682 = vadd.f32 %v5665, 1e-05
        %v5683 = vrsqrt.pop %v5666
        %v5684 = vrsqrt.pop %v5667
        %v5685 = vrsqrt.pop %v5668
        %v5686 = vrsqrt.pop %v5669
        %v5687 = vrsqrt.pop %v5670
        %v5688 = vrsqrt.pop %v5671
        %v5689 = vrsqrt.pop %v5672
        %v5690 = vrsqrt.pop %v5673
        %v5691 = vrsqrt.pop %v5674
        %v5692 = vrsqrt.pop %v5675
        %v5693 = vrsqrt.pop %v5676
        %v5694 = vrsqrt.pop %v5677
        %v5695 = vrsqrt.pop %v5678
        %v5696 = vrsqrt.pop %v5679
        %v5697 = vrsqrt.pop %v5680
        %v5698 = vrsqrt.pop %v5681
        %v5699 = vrsqrt.pop %v5682
        %v5700 = vmul.f32 %v5564, %v5683
        %v5701 = vmul.f32 %v5565, %v5684
        %v5702 = vmul.f32 %v5566, %v5685
        %v5703 = vmul.f32 %v5567, %v5686
        %v5704 = vmul.f32 %v5568, %v5687
        %v5705 = vmul.f32 %v5569, %v5688
        %v5706 = vmul.f32 %v5570, %v5689
        %v5707 = vmul.f32 %v5571, %v5690
        %v5708 = vmul.f32 %v5572, %v5691
        %v5709 = vmul.f32 %v5573, %v5692
        %v5710 = vmul.f32 %v5574, %v5693
        %v5711 = vmul.f32 %v5575, %v5694
        %v5712 = vmul.f32 %v5576, %v5695
        %v5713 = vmul.f32 %v5577, %v5696
        %v5714 = vmul.f32 %v5578, %v5697
        %v5715 = vmul.f32 %v5579, %v5698
        %v5716 = vmul.f32 %v5580, %v5699
        %v5718 = vlaneseq
        %v5719 = vshrl.u32 %v5718, 7
        %v5720 = vsub.s32 0, %v5719
        %v5721 = vrot.slane %v5494, %v5720
        %v5723 = vmul.f32 %v5700, %v5721
        %v5724 = vmul.f32 %v5701, %v5721
        %v5725 = vmul.f32 %v5702, %v5721
        %v5726 = vmul.f32 %v5703, %v5721
        %v5727 = vmul.f32 %v5704, %v5721
        %v5728 = vmul.f32 %v5705, %v5721
        %v5729 = vmul.f32 %v5706, %v5721
        %v5730 = vmul.f32 %v5707, %v5721
        %v5731 = vmul.f32 %v5708, %v5721
        %v5732 = vmul.f32 %v5709, %v5721
        %v5733 = vmul.f32 %v5710, %v5721
        %v5734 = vmul.f32 %v5711, %v5721
        %v5735 = vmul.f32 %v5712, %v5721
        %v5736 = vmul.f32 %v5713, %v5721
        %v5737 = vmul.f32 %v5714, %v5721
        %v5738 = vmul.f32 %v5715, %v5721
        %v5739 = vmul.f32 %v5716, %v5721
        %v5741 = vlaneseq
        %v5742 = vshrl.u32 %v5741, 7
        %v5743 = vsub.s32 0, %v5742
        %v5744 = vrot.slane %v5495, %v5743
        %v5746 = vadd.f32 %v5723, %v5744
        %v5747 = vadd.f32 %v5724, %v5744
        %v5748 = vadd.f32 %v5725, %v5744
        %v5749 = vadd.f32 %v5726, %v5744
        %v5750 = vadd.f32 %v5727, %v5744
        %v5751 = vadd.f32 %v5728, %v5744
        %v5752 = vadd.f32 %v5729, %v5744
        %v5753 = vadd.f32 %v5730, %v5744
        %v5754 = vadd.f32 %v5731, %v5744
        %v5755 = vadd.f32 %v5732, %v5744
        %v5756 = vadd.f32 %v5733, %v5744
        %v5757 = vadd.f32 %v5734, %v5744
        %v5758 = vadd.f32 %v5735, %v5744
        %v5759 = vadd.f32 %v5736, %v5744
        %v5760 = vadd.f32 %v5737, %v5744
        %v5761 = vadd.f32 %v5738, %v5744
        %v5762 = vadd.f32 %v5739, %v5744
        %5763 = vst.msk [vmem:[%s704] sm:$0xff] %vm766, %v5746
        %5764 = vst.msk [vmem:[%s704 + $0x8] sm:$0xff] %vm766, %v5747
        %5765 = vst.msk [vmem:[%s704 + $0x10] sm:$0xff] %vm766, %v5748
        %5766 = vst.msk [vmem:[%s704 + $0x18] sm:$0xff] %vm766, %v5749
        %5767 = vst.msk [vmem:[%s704 + $0x20] sm:$0xff] %vm766, %v5750
        %5768 = vst.msk [vmem:[%s704 + $0x28] sm:$0xff] %vm766, %v5751
        %5769 = vst.msk [vmem:[%s704 + $0x30] sm:$0xff] %vm766, %v5752
        %5770 = vst.msk [vmem:[%s704 + $0x38] sm:$0xff] %vm766, %v5753
        %5771 = vst.msk [vmem:[%s704 + $0x40] sm:$0xff] %vm766, %v5754
        %5772 = vst.msk [vmem:[%s704 + $0x48] sm:$0xff] %vm766, %v5755
        %5773 = vst.msk [vmem:[%s704 + $0x50] sm:$0xff] %vm766, %v5756
        %5774 = vst.msk [vmem:[%s704 + $0x58] sm:$0xff] %vm766, %v5757
        %5775 = vst.msk [vmem:[%s704 + $0x60] sm:$0xff] %vm766, %v5758
        %5776 = vst.msk [vmem:[%s704 + $0x68] sm:$0xff] %vm766, %v5759
        %5777 = vst.msk [vmem:[%s704 + $0x70] sm:$0xff] %vm766, %v5760
        %5778 = vst.msk [vmem:[%s704 + $0x78] sm:$0xff] %vm766, %v5761
        %5779 = vst.msk [vmem:[%s704 + $0x80] sm:$0xf] %vm815, %v5762
      $region88: #{local_feature_forward.1} parent=79 // pred_fallthru
        _
      %p5780 = scmp.lt.s32.totalorder %s30, 1
      %s5781 = scalar_select %p5780, %s30, 1
      %s5782 = smul.addr %s5781, 17
      %s5783 = smul.addr %s5782, 8
      %s5784 = scalar_lea.vmem %s15, %s5783
      // Predicated region
      $region89: #{local_feature_forward.1} parent=79 // pred_check
        %p5785 = pneg %p436
      $region90: #{local_feature_forward.1} parent=79 // pred_check_branch
        %5787 = sbr.rel (%p5785) target = $region92
      $region91: #{local_feature_forward.1} parent=79 // pred_region
        _
      $region92: #{local_feature_forward.1} parent=79 // pred_fallthru
        _
    $region80: #{local_feature_forward.1} parent=5 // pred_fallthru
      _
    %p5788 = scmp.le.s32.totalorder 2, %s21
    // Predicated region
    $region93: #{local_feature_forward.1} parent=5 // pred_check
      %p5789 = pneg %p5788
    $region94: #{local_feature_forward.1} parent=5 // pred_check_branch
      %5791 = sbr.rel (%p5789) target = $region96
    $region95: #{local_feature_forward.1} parent=5 // pred_region
      %s5792 = ssub.s32 %s21, 2
      // Predicated region
      $region97: #{local_feature_forward.1} parent=95 // pred_check
        %p5793 = pneg %p442
      $region98: #{local_feature_forward.1} parent=95 // pred_check_branch
        %5795 = sbr.rel (%p5793) target = $region100
      $region99: #{local_feature_forward.1} parent=95 // pred_region
        %p5796 = scmp.lt.s32.totalorder %s32, 1
        %s5797 = scalar_select %p5796, %s32, 1
        %s5798 = smul.addr %s5797, 17
        %s5799 = smul.addr %s5798, 8
        %s5800 = scalar_lea.vmem %s15, %s5799
      $region100: #{local_feature_forward.1} parent=95 // pred_fallthru
        _
    $region96: #{local_feature_forward.1} parent=5 // pred_fallthru
      _
  $region6: #{local_feature_forward.1} parent=0 // loop_footer
    %s25 = sadd.s32 1, %s21
  $region7: #{local_feature_forward.1} parent=0 // loop_footer_branch
    %20 = sbr.rel target = $region3
  $region8: #{local_feature_forward.1} parent=0 // loop_exit
    _

</llo_original>
